<compile_context>
chip_gen: v6e
topology: v6e:2x2x1
jax: 0.10.0
libtpu: 0.0.40
codegen_flags: <defaults>
</compile_context>

<pallas_src>
import functools

import jax
import jax.numpy as jnp
import numpy as np
from jax.experimental import pallas as pl
from jax.experimental.pallas import tpu as pltpu


# ------------------------------ fused kernel ---------------------------------

def _block_kernel(x_ref, t_ref, sel_ref, w1_ref, w2_ref, wT_ref, wt_ref, vec_ref,
                  o_ref, p1_ref, pT_ref, hbuf_ref, *,
                  n_batch, cin, cout, hgt, wid, base):
    """Whole Block forward on the flattened padded grid (C, M) layout."""
    Wp = wid + 2
    S = (hgt + 2) * Wp                 # flat size of one padded image
    Mp = n_batch * S                   # flat size of the whole batch
    nhw = n_batch * hgt * wid
    inv_nhw = 1.0 / nhw
    eps = 1e-5
    mtot = hbuf_ref.shape[1]

    sel = sel_ref[...]                                   # (N, Mp) 0/1 interior selector
    mask = jnp.sum(sel, axis=0, keepdims=True)           # (1, Mp) interior indicator

    # packed per-channel vectors -> (Cout, 1) columns
    b1 = vec_ref[:, 0:1]
    bt = vec_ref[:, 1:2]
    b2 = vec_ref[:, 2:3]
    bT = vec_ref[:, 3:4]
    g1 = vec_ref[:, 4:5]
    be1 = vec_ref[:, 5:6]
    g2 = vec_ref[:, 6:7]
    be2 = vec_ref[:, 7:8]

    # 3x3 / 4x4 tap offsets on the flat padded grid (row-major (dy, dx) order)
    offs3 = [(dy - 1) * Wp + (dx - 1) for dy in range(3) for dx in range(3)]
    offs4 = [dy * Wp + dx for dy in range(4) for dx in range(4)]

    # ---- conv1 (3x3, pad=1): in-VMEM im2col + ONE (Cout, 9*Cin)@(9*Cin, M) ----
    for k, off in enumerate(offs3):
        p1_ref[k * cin:(k + 1) * cin, :] = x_ref[:, base + off: base + off + Mp]
    h1 = jnp.dot(w1_ref[...], p1_ref[...],
                 preferred_element_type=jnp.float32) + b1
    h1 = jnp.maximum(h1, 0.0)                     # (Cout, Mp); garbage off-interior

    # ---- bnorm1: single-pass interior statistics, folded scale/shift ---------
    h1m = h1 * mask
    m1 = jnp.sum(h1m, axis=1, keepdims=True) * inv_nhw
    q1 = jnp.sum(h1m * h1m, axis=1, keepdims=True) * inv_nhw
    sc1 = g1 * jax.lax.rsqrt(q1 - m1 * m1 + eps)
    sh1 = be1 - m1 * sc1

    # ---- time MLP (inlined) + broadcast to the interior via selector matmul --
    temb = jnp.maximum(
        jnp.dot(wt_ref[...], t_ref[...], preferred_element_type=jnp.float32) + bt,
        0.0)                                                       # (Cout, N)
    temb_full = jnp.dot(temb, sel, preferred_element_type=jnp.float32)  # (Cout, Mp)

    # conv2 input: bnorm1(h1) + temb on the interior, exact zeros elsewhere
    h2in = (h1 * sc1 + sh1 + temb_full) * mask

    # zero only the small left/right margins of the reusable flat buffer once
    hbuf_ref[:, 0:base] = jnp.zeros((cout, base), jnp.float32)
    if mtot > base + Mp:
        hbuf_ref[:, base + Mp:] = jnp.zeros((cout, mtot - base - Mp), jnp.float32)
    hbuf_ref[:, base:base + Mp] = h2in

    # ---- conv2 (3x3, pad=1): ONE (Cout, 9*Cout)@(9*Cout, M) matmul -----------
    for k, off in enumerate(offs3):
        pT_ref[k * cout:(k + 1) * cout, :] = hbuf_ref[:, base + off: base + off + Mp]
    h2 = jnp.dot(w2_ref[...], pT_ref[0:9 * cout, :],
                 preferred_element_type=jnp.float32) + b2
    h2 = jnp.maximum(h2, 0.0)

    # ---- bnorm2 ---------------------------------------------------------------
    h2m = h2 * mask
    m2 = jnp.sum(h2m, axis=1, keepdims=True) * inv_nhw
    q2 = jnp.sum(h2m * h2m, axis=1, keepdims=True) * inv_nhw
    sc2 = g2 * jax.lax.rsqrt(q2 - m2 * m2 + eps)
    sh2 = be2 - m2 * sc2
    h3 = (h2 * sc2 + sh2) * mask                  # zero border == conv padding

    # ---- transform: 4x4 conv, stride 2, pad 1 ---------------------------------
    # Computed at stride 1 on the flat padded grid with ONE K=16*Cout matmul;
    # the wrapper keeps only the (2u, 2v) positions (the rest is cheap MXU slack).
    hbuf_ref[:, base:base + Mp] = h3              # margins are still zero
    for k, off in enumerate(offs4):
        pT_ref[k * cout:(k + 1) * cout, :] = hbuf_ref[:, base + off: base + off + Mp]
    y = jnp.dot(wT_ref[...], pT_ref[...], preferred_element_type=jnp.float32) + bT
    o_ref[...] = y                                # lane-dense (Cout, Mp) slab


# ------------------------------ JAX wrapper ----------------------------------

@jax.jit
def block_forward(x_nchw, t, params):
    """Pallas implementation of Block.forward (up=False). Returns NCHW."""
    x = x_nchw.astype(jnp.float32)
    N, Cin, H, W = x.shape
    Cout = params["w1"].shape[-1]
    Hp, Wp = H + 2, W + 2
    S = Hp * Wp
    Mp = N * S
    base = 128                                     # left margin of flat buffers
    mtot = base + Mp + 3 * Wp + 3                  # + right margin for 4x4 taps
    mtot = ((mtot + 127) // 128) * 128

    # zero-padded input, channel-first, flattened over (n, row, col), + margins
    xp = jnp.zeros((N, Cin, Hp, Wp), jnp.float32).at[:, :, 1:H + 1, 1:W + 1].set(x)
    x_flat = jnp.transpose(xp, (1, 0, 2, 3)).reshape(Cin, Mp)
    x_in = jnp.zeros((Cin, mtot), jnp.float32).at[:, base:base + Mp].set(x_flat)

    # static interior selector: sel[n, n*S + r*Wp + s] = 1 iff (r, s) is interior
    interior = np.zeros((Hp, Wp), np.float32)
    interior[1:H + 1, 1:W + 1] = 1.0
    sel = jnp.asarray(np.kron(np.eye(N, dtype=np.float32), interior.reshape(1, S)))

    # weights in (Cout, K) form; taps ordered (dy, dx) row-major, channel innermost
    w1m = jnp.transpose(params["w1"], (3, 0, 1, 2)).reshape(Cout, 9 * Cin)
    w2m = jnp.transpose(params["w2"], (3, 0, 1, 2)).reshape(Cout, 9 * Cout)
    wTm = jnp.transpose(params["wT"], (3, 0, 1, 2)).reshape(Cout, 16 * Cout)
    wtm = jnp.transpose(params["wt"], (1, 0)).astype(jnp.float32)   # (Cout, Tdim)
    t_in = jnp.transpose(t.astype(jnp.float32), (1, 0))             # (Tdim, N)

    # all per-channel vectors packed into one (Cout, 8) operand
    vec = jnp.stack([params["b1"], params["bt"], params["b2"], params["bT"],
                     params["g1"], params["be1"], params["g2"], params["be2"]],
                    axis=1).astype(jnp.float32)

    kernel = functools.partial(_block_kernel, n_batch=N, cin=Cin, cout=Cout,
                               hgt=H, wid=W, base=base)

    slab = pl.pallas_call(
        kernel,
        out_shape=jax.ShapeDtypeStruct((Cout, Mp), jnp.float32),
        scratch_shapes=[
            pltpu.VMEM((9 * Cin, Mp), jnp.float32),    # conv1 im2col patches
            pltpu.VMEM((16 * Cout, Mp), jnp.float32),  # conv2 / transform patches
            pltpu.VMEM((Cout, mtot), jnp.float32),     # margin-padded flat acts
        ],
        compiler_params=pltpu.CompilerParams(vmem_limit_bytes=32 * 1024 * 1024),
    )(x_in, t_in, sel, w1m, w2m, wTm, wtm, vec)

    # stride-2 subsample of the stride-1 slab + layout fix (cheap XLA ops)
    y = slab.reshape(Cout, N, Hp, Wp)[:, :, 0:H - 1:2, 0:W - 1:2]
    return jnp.transpose(y, (1, 0, 2, 3))          # -> NCHW (N, Cout, H//2, W//2)


# ------------------------------ pure-JAX reference ---------------------------

def block_reference(x_nchw, t, p):
    x = jnp.transpose(x_nchw, (0, 2, 3, 1))

    def conv(x, w, b, stride, pad):
        y = jax.lax.conv_general_dilated(
            x, w, (stride, stride), ((pad, pad), (pad, pad)),
            dimension_numbers=("NHWC", "HWIO", "NHWC"),
            precision=jax.lax.Precision.HIGHEST)
        return y + b[None, None, None, :]

    def bn(h, g, be):
        m = jnp.mean(h, axis=(0, 1, 2), keepdims=True)
        v = jnp.mean((h - m) ** 2, axis=(0, 1, 2), keepdims=True)
        return (h - m) / jnp.sqrt(v + 1e-5) * g[None, None, None, :] \
            + be[None, None, None, :]

    h = bn(jax.nn.relu(conv(x, p["w1"], p["b1"], 1, 1)), p["g1"], p["be1"])
    te = jax.nn.relu(jnp.dot(t, p["wt"], precision=jax.lax.Precision.HIGHEST)
                     + p["bt"])
    h = h + te[:, None, None, :]
    h = bn(jax.nn.relu(conv(h, p["w2"], p["b2"], 1, 1)), p["g2"], p["be2"])
    y = conv(h, p["wT"], p["bT"], 2, 1)
    return jnp.transpose(y, (0, 3, 1, 2))


# ----------------------------------- main ------------------------------------

if __name__ == "__main__":
    N, in_ch, out_ch, H, W, t_dim = 2, 4, 8, 16, 16, 32
    key = jax.random.PRNGKey(0)
    ks = jax.random.split(key, 10)

    # Deterministic synthetic parameters (HWIO conv weights).
    p = {
        "w1": jax.random.normal(ks[0], (3, 3, in_ch, out_ch), jnp.float32) * 0.2,
        "b1": jax.random.normal(ks[1], (out_ch,), jnp.float32) * 0.1,
        "w2": jax.random.normal(ks[2], (3, 3, out_ch, out_ch), jnp.float32) * 0.2,
        "b2": jax.random.normal(ks[3], (out_ch,), jnp.float32) * 0.1,
        "wt": jax.random.normal(ks[4], (t_dim, out_ch), jnp.float32) * 0.2,
        "bt": jax.random.normal(ks[5], (out_ch,), jnp.float32) * 0.1,
        "wT": jax.random.normal(ks[6], (4, 4, out_ch, out_ch), jnp.float32) * 0.2,
        "bT": jax.random.normal(ks[7], (out_ch,), jnp.float32) * 0.1,
        "g1": jnp.ones((out_ch,), jnp.float32),   # BatchNorm defaults
        "be1": jnp.zeros((out_ch,), jnp.float32),
        "g2": jnp.ones((out_ch,), jnp.float32),
        "be2": jnp.zeros((out_ch,), jnp.float32),
    }

    x = jax.random.normal(ks[8], (N, in_ch, H, W), jnp.float32)   # NCHW like PyTorch
    t = jax.random.normal(ks[9], (N, t_dim), jnp.float32)

    out = jax.block_until_ready(block_forward(x, t, p))
    ref = jax.block_until_ready(block_reference(x, t, p))

    assert out.shape == (N, out_ch, H // 2, W // 2), out.shape
    np.testing.assert_allclose(np.asarray(out), np.asarray(ref),
                               rtol=1e-2, atol=1e-2)
    print("KERNEL_OK")
</pallas_src>

<mosaic_0001>
module attributes {stable_mosaic.version = 11 : i64} {
  func.func @_block_kernel(%arg0: memref<4x896xf32, #tpu.memory_space<vmem>>, %arg1: memref<32x2xf32, #tpu.memory_space<vmem>>, %arg2: memref<2x648xf32, #tpu.memory_space<vmem>>, %arg3: memref<8x36xf32, #tpu.memory_space<vmem>>, %arg4: memref<8x72xf32, #tpu.memory_space<vmem>>, %arg5: memref<8x128xf32, #tpu.memory_space<vmem>>, %arg6: memref<8x32xf32, #tpu.memory_space<vmem>>, %arg7: memref<8x8xf32, #tpu.memory_space<vmem>>, %arg8: memref<8x648xf32, #tpu.memory_space<vmem>>, %arg9: memref<36x648xf32, #tpu.memory_space<vmem>>, %arg10: memref<128x648xf32, #tpu.memory_space<vmem>>, %arg11: memref<8x896xf32, #tpu.memory_space<vmem>>) attributes {dimension_semantics = [], scalar_prefetch = 0 : i64, scratch_operands = 3 : i64, tpu.core_type = #tpu.core_type<tc>} {
    %c0 = arith.constant 0 : index
    %c0_0 = arith.constant 0 : index
    %0 = vector.load %arg2[%c0, %c0_0] : memref<2x648xf32, #tpu.memory_space<vmem>>, vector<2x648xf32>
    %cst = arith.constant dense<0.000000e+00> : vector<648xf32>
    %1 = vector.multi_reduction <add>, %0, %cst [0] : vector<2x648xf32> to vector<648xf32>
    %2 = vector.shape_cast %1 : vector<648xf32> to vector<1x648xf32>
    %c0_1 = arith.constant 0 : index
    %c0_2 = arith.constant 0 : index
    %3 = vector.load %arg7[%c0_1, %c0_2] : memref<8x8xf32, #tpu.memory_space<vmem>>, vector<8x1xf32>
    %c0_3 = arith.constant 0 : index
    %c1 = arith.constant 1 : index
    %4 = vector.load %arg7[%c0_3, %c1] : memref<8x8xf32, #tpu.memory_space<vmem>>, vector<8x1xf32>
    %c0_4 = arith.constant 0 : index
    %c2 = arith.constant 2 : index
    %5 = vector.load %arg7[%c0_4, %c2] : memref<8x8xf32, #tpu.memory_space<vmem>>, vector<8x1xf32>
    %c0_5 = arith.constant 0 : index
    %c3 = arith.constant 3 : index
    %6 = vector.load %arg7[%c0_5, %c3] : memref<8x8xf32, #tpu.memory_space<vmem>>, vector<8x1xf32>
    %c0_6 = arith.constant 0 : index
    %c4 = arith.constant 4 : index
    %7 = vector.load %arg7[%c0_6, %c4] : memref<8x8xf32, #tpu.memory_space<vmem>>, vector<8x1xf32>
    %c0_7 = arith.constant 0 : index
    %c5 = arith.constant 5 : index
    %8 = vector.load %arg7[%c0_7, %c5] : memref<8x8xf32, #tpu.memory_space<vmem>>, vector<8x1xf32>
    %c0_8 = arith.constant 0 : index
    %c6 = arith.constant 6 : index
    %9 = vector.load %arg7[%c0_8, %c6] : memref<8x8xf32, #tpu.memory_space<vmem>>, vector<8x1xf32>
    %c0_9 = arith.constant 0 : index
    %c7 = arith.constant 7 : index
    %10 = vector.load %arg7[%c0_9, %c7] : memref<8x8xf32, #tpu.memory_space<vmem>>, vector<8x1xf32>
    %c0_10 = arith.constant 0 : index
    %c109 = arith.constant 109 : index
    %11 = vector.load %arg0[%c0_10, %c109] : memref<4x896xf32, #tpu.memory_space<vmem>>, vector<4x648xf32>
    %c0_11 = arith.constant 0 : index
    %c0_12 = arith.constant 0 : index
    %12 = vector.load %arg9[%c0_11, %c0_12] : memref<36x648xf32, #tpu.memory_space<vmem>>, vector<4x648xf32>
    tpu.vector_store %arg9[%c0_11, %c0_12], %11 {strides = array<i32>} : memref<36x648xf32, #tpu.memory_space<vmem>>, vector<4x648xf32>,
    %c0_13 = arith.constant 0 : index
    %c110 = arith.constant 110 : index
    %13 = vector.load %arg0[%c0_13, %c110] : memref<4x896xf32, #tpu.memory_space<vmem>>, vector<4x648xf32>
    %c4_14 = arith.constant 4 : index
    %c0_15 = arith.constant 0 : index
    %14 = vector.load %arg9[%c4_14, %c0_15] : memref<36x648xf32, #tpu.memory_space<vmem>>, vector<4x648xf32>
    tpu.vector_store %arg9[%c4_14, %c0_15], %13 {strides = array<i32>} : memref<36x648xf32, #tpu.memory_space<vmem>>, vector<4x648xf32>,
    %c0_16 = arith.constant 0 : index
    %c111 = arith.constant 111 : index
    %15 = vector.load %arg0[%c0_16, %c111] : memref<4x896xf32, #tpu.memory_space<vmem>>, vector<4x648xf32>
    %c8 = arith.constant 8 : index
    %c0_17 = arith.constant 0 : index
    %16 = vector.load %arg9[%c8, %c0_17] : memref<36x648xf32, #tpu.memory_space<vmem>>, vector<4x648xf32>
    tpu.vector_store %arg9[%c8, %c0_17], %15 {strides = array<i32>} : memref<36x648xf32, #tpu.memory_space<vmem>>, vector<4x648xf32>,
    %c0_18 = arith.constant 0 : index
    %c127 = arith.constant 127 : index
    %17 = vector.load %arg0[%c0_18, %c127] : memref<4x896xf32, #tpu.memory_space<vmem>>, vector<4x648xf32>
    %c12 = arith.constant 12 : index
    %c0_19 = arith.constant 0 : index
    %18 = vector.load %arg9[%c12, %c0_19] : memref<36x648xf32, #tpu.memory_space<vmem>>, vector<4x648xf32>
    tpu.vector_store %arg9[%c12, %c0_19], %17 {strides = array<i32>} : memref<36x648xf32, #tpu.memory_space<vmem>>, vector<4x648xf32>,
    %c0_20 = arith.constant 0 : index
    %c128 = arith.constant 128 : index
    %19 = vector.load %arg0[%c0_20, %c128] : memref<4x896xf32, #tpu.memory_space<vmem>>, vector<4x648xf32>
    %c16 = arith.constant 16 : index
    %c0_21 = arith.constant 0 : index
    %20 = vector.load %arg9[%c16, %c0_21] : memref<36x648xf32, #tpu.memory_space<vmem>>, vector<4x648xf32>
    tpu.vector_store %arg9[%c16, %c0_21], %19 {strides = array<i32>} : memref<36x648xf32, #tpu.memory_space<vmem>>, vector<4x648xf32>,
    %c0_22 = arith.constant 0 : index
    %c129 = arith.constant 129 : index
    %21 = vector.load %arg0[%c0_22, %c129] : memref<4x896xf32, #tpu.memory_space<vmem>>, vector<4x648xf32>
    %c20 = arith.constant 20 : index
    %c0_23 = arith.constant 0 : index
    %22 = vector.load %arg9[%c20, %c0_23] : memref<36x648xf32, #tpu.memory_space<vmem>>, vector<4x648xf32>
    tpu.vector_store %arg9[%c20, %c0_23], %21 {strides = array<i32>} : memref<36x648xf32, #tpu.memory_space<vmem>>, vector<4x648xf32>,
    %c0_24 = arith.constant 0 : index
    %c145 = arith.constant 145 : index
    %23 = vector.load %arg0[%c0_24, %c145] : memref<4x896xf32, #tpu.memory_space<vmem>>, vector<4x648xf32>
    %c24 = arith.constant 24 : index
    %c0_25 = arith.constant 0 : index
    %24 = vector.load %arg9[%c24, %c0_25] : memref<36x648xf32, #tpu.memory_space<vmem>>, vector<4x648xf32>
    tpu.vector_store %arg9[%c24, %c0_25], %23 {strides = array<i32>} : memref<36x648xf32, #tpu.memory_space<vmem>>, vector<4x648xf32>,
    %c0_26 = arith.constant 0 : index
    %c146 = arith.constant 146 : index
    %25 = vector.load %arg0[%c0_26, %c146] : memref<4x896xf32, #tpu.memory_space<vmem>>, vector<4x648xf32>
    %c28 = arith.constant 28 : index
    %c0_27 = arith.constant 0 : index
    %26 = vector.load %arg9[%c28, %c0_27] : memref<36x648xf32, #tpu.memory_space<vmem>>, vector<4x648xf32>
    tpu.vector_store %arg9[%c28, %c0_27], %25 {strides = array<i32>} : memref<36x648xf32, #tpu.memory_space<vmem>>, vector<4x648xf32>,
    %c0_28 = arith.constant 0 : index
    %c147 = arith.constant 147 : index
    %27 = vector.load %arg0[%c0_28, %c147] : memref<4x896xf32, #tpu.memory_space<vmem>>, vector<4x648xf32>
    %c32 = arith.constant 32 : index
    %c0_29 = arith.constant 0 : index
    %28 = vector.load %arg9[%c32, %c0_29] : memref<36x648xf32, #tpu.memory_space<vmem>>, vector<4x648xf32>
    tpu.vector_store %arg9[%c32, %c0_29], %27 {strides = array<i32>} : memref<36x648xf32, #tpu.memory_space<vmem>>, vector<4x648xf32>,
    %c0_30 = arith.constant 0 : index
    %c0_31 = arith.constant 0 : index
    %29 = vector.load %arg3[%c0_30, %c0_31] : memref<8x36xf32, #tpu.memory_space<vmem>>, vector<8x36xf32>
    %c0_32 = arith.constant 0 : index
    %c0_33 = arith.constant 0 : index
    %30 = vector.load %arg9[%c0_32, %c0_33] : memref<36x648xf32, #tpu.memory_space<vmem>>, vector<36x648xf32>
    %cst_34 = arith.constant dense<0.000000e+00> : vector<8x648xf32>
    %31 = tpu.matmul %29, %30, %cst_34 {dimension_numbers = #tpu.dot_dimension_numbers<[1], [0], [0], [1], [0, 0, 1, 1], [], []>} : vector<8x36xf32>, vector<36x648xf32>, vector<8x648xf32> -> vector<8x648xf32>
    %32 = vector.broadcast %3 : vector<8x1xf32> to vector<8x648xf32>
    %33 = arith.addf %31, %32 : vector<8x648xf32>
    %cst_35 = arith.constant 0.000000e+00 : f32
    %34 = vector.broadcast %cst_35 : f32 to vector<8x648xf32>
    %35 = arith.maximumf %33, %34 : vector<8x648xf32>
    %36 = vector.broadcast %2 : vector<1x648xf32> to vector<8x648xf32>
    %37 = arith.mulf %35, %36 : vector<8x648xf32>
    %cst_36 = arith.constant dense<0.000000e+00> : vector<8xf32>
    %38 = vector.multi_reduction <add>, %37, %cst_36 [1] : vector<8x648xf32> to vector<8xf32>
    %39 = vector.shape_cast %38 : vector<8xf32> to vector<8x1xf32>
    %cst_37 = arith.constant 0.001953125 : f32
    %40 = vector.broadcast %cst_37 : f32 to vector<8x1xf32>
    %41 = arith.mulf %39, %40 : vector<8x1xf32>
    %42 = arith.mulf %37, %37 : vector<8x648xf32>
    %cst_38 = arith.constant dense<0.000000e+00> : vector<8xf32>
    %43 = vector.multi_reduction <add>, %42, %cst_38 [1] : vector<8x648xf32> to vector<8xf32>
    %44 = vector.shape_cast %43 : vector<8xf32> to vector<8x1xf32>
    %cst_39 = arith.constant 0.001953125 : f32
    %45 = vector.broadcast %cst_39 : f32 to vector<8x1xf32>
    %46 = arith.mulf %44, %45 : vector<8x1xf32>
    %47 = arith.mulf %41, %41 : vector<8x1xf32>
    %48 = arith.subf %46, %47 : vector<8x1xf32>
    %cst_40 = arith.constant 9.99999974E-6 : f32
    %49 = vector.broadcast %cst_40 : f32 to vector<8x1xf32>
    %50 = arith.addf %48, %49 : vector<8x1xf32>
    %51 = math.rsqrt %50 : vector<8x1xf32>
    %52 = arith.mulf %7, %51 : vector<8x1xf32>
    %53 = arith.mulf %41, %52 : vector<8x1xf32>
    %54 = arith.subf %8, %53 : vector<8x1xf32>
    %c0_41 = arith.constant 0 : index
    %c0_42 = arith.constant 0 : index
    %55 = vector.load %arg6[%c0_41, %c0_42] : memref<8x32xf32, #tpu.memory_space<vmem>>, vector<8x32xf32>
    %c0_43 = arith.constant 0 : index
    %c0_44 = arith.constant 0 : index
    %56 = vector.load %arg1[%c0_43, %c0_44] : memref<32x2xf32, #tpu.memory_space<vmem>>, vector<32x2xf32>
    %cst_45 = arith.constant dense<0.000000e+00> : vector<8x2xf32>
    %57 = tpu.matmul %55, %56, %cst_45 {dimension_numbers = #tpu.dot_dimension_numbers<[1], [0], [0], [1], [0, 0, 1, 1], [], []>} : vector<8x32xf32>, vector<32x2xf32>, vector<8x2xf32> -> vector<8x2xf32>
    %58 = vector.broadcast %4 : vector<8x1xf32> to vector<8x2xf32>
    %59 = arith.addf %57, %58 : vector<8x2xf32>
    %cst_46 = arith.constant 0.000000e+00 : f32
    %60 = vector.broadcast %cst_46 : f32 to vector<8x2xf32>
    %61 = arith.maximumf %59, %60 : vector<8x2xf32>
    %cst_47 = arith.constant dense<0.000000e+00> : vector<8x648xf32>
    %62 = tpu.matmul %61, %0, %cst_47 {dimension_numbers = #tpu.dot_dimension_numbers<[1], [0], [0], [1], [0, 0, 1, 1], [], []>} : vector<8x2xf32>, vector<2x648xf32>, vector<8x648xf32> -> vector<8x648xf32>
    %63 = vector.broadcast %52 : vector<8x1xf32> to vector<8x648xf32>
    %64 = arith.mulf %35, %63 : vector<8x648xf32>
    %65 = vector.broadcast %54 : vector<8x1xf32> to vector<8x648xf32>
    %66 = arith.addf %64, %65 : vector<8x648xf32>
    %67 = arith.addf %66, %62 : vector<8x648xf32>
    %68 = vector.broadcast %2 : vector<1x648xf32> to vector<8x648xf32>
    %69 = arith.mulf %67, %68 : vector<8x648xf32>
    %cst_48 = arith.constant 0.000000e+00 : f32
    %70 = vector.broadcast %cst_48 : f32 to vector<8x128xf32>
    %c0_49 = arith.constant 0 : index
    %c0_50 = arith.constant 0 : index
    %71 = vector.load %arg11[%c0_49, %c0_50] : memref<8x896xf32, #tpu.memory_space<vmem>>, vector<8x128xf32>
    tpu.vector_store %arg11[%c0_49, %c0_50], %70 {strides = array<i32>} : memref<8x896xf32, #tpu.memory_space<vmem>>, vector<8x128xf32>,
    %cst_51 = arith.constant 0.000000e+00 : f32
    %72 = vector.broadcast %cst_51 : f32 to vector<8x120xf32>
    %c0_52 = arith.constant 0 : index
    %c776 = arith.constant 776 : index
    %73 = vector.load %arg11[%c0_52, %c776] : memref<8x896xf32, #tpu.memory_space<vmem>>, vector<8x120xf32>
    tpu.vector_store %arg11[%c0_52, %c776], %72 {strides = array<i32>} : memref<8x896xf32, #tpu.memory_space<vmem>>, vector<8x120xf32>,
    %c0_53 = arith.constant 0 : index
    %c128_54 = arith.constant 128 : index
    %74 = vector.load %arg11[%c0_53, %c128_54] : memref<8x896xf32, #tpu.memory_space<vmem>>, vector<8x648xf32>
    tpu.vector_store %arg11[%c0_53, %c128_54], %69 {strides = array<i32>} : memref<8x896xf32, #tpu.memory_space<vmem>>, vector<8x648xf32>,
    %c0_55 = arith.constant 0 : index
    %c109_56 = arith.constant 109 : index
    %75 = vector.load %arg11[%c0_55, %c109_56] : memref<8x896xf32, #tpu.memory_space<vmem>>, vector<8x648xf32>
    %c0_57 = arith.constant 0 : index
    %c0_58 = arith.constant 0 : index
    %76 = vector.load %arg10[%c0_57, %c0_58] : memref<128x648xf32, #tpu.memory_space<vmem>>, vector<8x648xf32>
    tpu.vector_store %arg10[%c0_57, %c0_58], %75 {strides = array<i32>} : memref<128x648xf32, #tpu.memory_space<vmem>>, vector<8x648xf32>,
    %c0_59 = arith.constant 0 : index
    %c110_60 = arith.constant 110 : index
    %77 = vector.load %arg11[%c0_59, %c110_60] : memref<8x896xf32, #tpu.memory_space<vmem>>, vector<8x648xf32>
    %c8_61 = arith.constant 8 : index
    %c0_62 = arith.constant 0 : index
    %78 = vector.load %arg10[%c8_61, %c0_62] : memref<128x648xf32, #tpu.memory_space<vmem>>, vector<8x648xf32>
    tpu.vector_store %arg10[%c8_61, %c0_62], %77 {strides = array<i32>} : memref<128x648xf32, #tpu.memory_space<vmem>>, vector<8x648xf32>,
    %c0_63 = arith.constant 0 : index
    %c111_64 = arith.constant 111 : index
    %79 = vector.load %arg11[%c0_63, %c111_64] : memref<8x896xf32, #tpu.memory_space<vmem>>, vector<8x648xf32>
    %c16_65 = arith.constant 16 : index
    %c0_66 = arith.constant 0 : index
    %80 = vector.load %arg10[%c16_65, %c0_66] : memref<128x648xf32, #tpu.memory_space<vmem>>, vector<8x648xf32>
    tpu.vector_store %arg10[%c16_65, %c0_66], %79 {strides = array<i32>} : memref<128x648xf32, #tpu.memory_space<vmem>>, vector<8x648xf32>,
    %c0_67 = arith.constant 0 : index
    %c127_68 = arith.constant 127 : index
    %81 = vector.load %arg11[%c0_67, %c127_68] : memref<8x896xf32, #tpu.memory_space<vmem>>, vector<8x648xf32>
    %c24_69 = arith.constant 24 : index
    %c0_70 = arith.constant 0 : index
    %82 = vector.load %arg10[%c24_69, %c0_70] : memref<128x648xf32, #tpu.memory_space<vmem>>, vector<8x648xf32>
    tpu.vector_store %arg10[%c24_69, %c0_70], %81 {strides = array<i32>} : memref<128x648xf32, #tpu.memory_space<vmem>>, vector<8x648xf32>,
    %c0_71 = arith.constant 0 : index
    %c128_72 = arith.constant 128 : index
    %83 = vector.load %arg11[%c0_71, %c128_72] : memref<8x896xf32, #tpu.memory_space<vmem>>, vector<8x648xf32>
    %c32_73 = arith.constant 32 : index
    %c0_74 = arith.constant 0 : index
    %84 = vector.load %arg10[%c32_73, %c0_74] : memref<128x648xf32, #tpu.memory_space<vmem>>, vector<8x648xf32>
    tpu.vector_store %arg10[%c32_73, %c0_74], %83 {strides = array<i32>} : memref<128x648xf32, #tpu.memory_space<vmem>>, vector<8x648xf32>,
    %c0_75 = arith.constant 0 : index
    %c129_76 = arith.constant 129 : index
    %85 = vector.load %arg11[%c0_75, %c129_76] : memref<8x896xf32, #tpu.memory_space<vmem>>, vector<8x648xf32>
    %c40 = arith.constant 40 : index
    %c0_77 = arith.constant 0 : index
    %86 = vector.load %arg10[%c40, %c0_77] : memref<128x648xf32, #tpu.memory_space<vmem>>, vector<8x648xf32>
    tpu.vector_store %arg10[%c40, %c0_77], %85 {strides = array<i32>} : memref<128x648xf32, #tpu.memory_space<vmem>>, vector<8x648xf32>,
    %c0_78 = arith.constant 0 : index
    %c145_79 = arith.constant 145 : index
    %87 = vector.load %arg11[%c0_78, %c145_79] : memref<8x896xf32, #tpu.memory_space<vmem>>, vector<8x648xf32>
    %c48 = arith.constant 48 : index
    %c0_80 = arith.constant 0 : index
    %88 = vector.load %arg10[%c48, %c0_80] : memref<128x648xf32, #tpu.memory_space<vmem>>, vector<8x648xf32>
    tpu.vector_store %arg10[%c48, %c0_80], %87 {strides = array<i32>} : memref<128x648xf32, #tpu.memory_space<vmem>>, vector<8x648xf32>,
    %c0_81 = arith.constant 0 : index
    %c146_82 = arith.constant 146 : index
    %89 = vector.load %arg11[%c0_81, %c146_82] : memref<8x896xf32, #tpu.memory_space<vmem>>, vector<8x648xf32>
    %c56 = arith.constant 56 : index
    %c0_83 = arith.constant 0 : index
    %90 = vector.load %arg10[%c56, %c0_83] : memref<128x648xf32, #tpu.memory_space<vmem>>, vector<8x648xf32>
    tpu.vector_store %arg10[%c56, %c0_83], %89 {strides = array<i32>} : memref<128x648xf32, #tpu.memory_space<vmem>>, vector<8x648xf32>,
    %c0_84 = arith.constant 0 : index
    %c147_85 = arith.constant 147 : index
    %91 = vector.load %arg11[%c0_84, %c147_85] : memref<8x896xf32, #tpu.memory_space<vmem>>, vector<8x648xf32>
    %c64 = arith.constant 64 : index
    %c0_86 = arith.constant 0 : index
    %92 = vector.load %arg10[%c64, %c0_86] : memref<128x648xf32, #tpu.memory_space<vmem>>, vector<8x648xf32>
    tpu.vector_store %arg10[%c64, %c0_86], %91 {strides = array<i32>} : memref<128x648xf32, #tpu.memory_space<vmem>>, vector<8x648xf32>,
    %c0_87 = arith.constant 0 : index
    %c0_88 = arith.constant 0 : index
    %93 = vector.load %arg4[%c0_87, %c0_88] : memref<8x72xf32, #tpu.memory_space<vmem>>, vector<8x72xf32>
    %c0_89 = arith.constant 0 : index
    %c0_90 = arith.constant 0 : index
    %94 = vector.load %arg10[%c0_89, %c0_90] : memref<128x648xf32, #tpu.memory_space<vmem>>, vector<72x648xf32>
    %cst_91 = arith.constant dense<0.000000e+00> : vector<8x648xf32>
    %95 = tpu.matmul %93, %94, %cst_91 {dimension_numbers = #tpu.dot_dimension_numbers<[1], [0], [0], [1], [0, 0, 1, 1], [], []>} : vector<8x72xf32>, vector<72x648xf32>, vector<8x648xf32> -> vector<8x648xf32>
    %96 = vector.broadcast %5 : vector<8x1xf32> to vector<8x648xf32>
    %97 = arith.addf %95, %96 : vector<8x648xf32>
    %cst_92 = arith.constant 0.000000e+00 : f32
    %98 = vector.broadcast %cst_92 : f32 to vector<8x648xf32>
    %99 = arith.maximumf %97, %98 : vector<8x648xf32>
    %100 = vector.broadcast %2 : vector<1x648xf32> to vector<8x648xf32>
    %101 = arith.mulf %99, %100 : vector<8x648xf32>
    %cst_93 = arith.constant dense<0.000000e+00> : vector<8xf32>
    %102 = vector.multi_reduction <add>, %101, %cst_93 [1] : vector<8x648xf32> to vector<8xf32>
    %103 = vector.shape_cast %102 : vector<8xf32> to vector<8x1xf32>
    %cst_94 = arith.constant 0.001953125 : f32
    %104 = vector.broadcast %cst_94 : f32 to vector<8x1xf32>
    %105 = arith.mulf %103, %104 : vector<8x1xf32>
    %106 = arith.mulf %101, %101 : vector<8x648xf32>
    %cst_95 = arith.constant dense<0.000000e+00> : vector<8xf32>
    %107 = vector.multi_reduction <add>, %106, %cst_95 [1] : vector<8x648xf32> to vector<8xf32>
    %108 = vector.shape_cast %107 : vector<8xf32> to vector<8x1xf32>
    %cst_96 = arith.constant 0.001953125 : f32
    %109 = vector.broadcast %cst_96 : f32 to vector<8x1xf32>
    %110 = arith.mulf %108, %109 : vector<8x1xf32>
    %111 = arith.mulf %105, %105 : vector<8x1xf32>
    %112 = arith.subf %110, %111 : vector<8x1xf32>
    %cst_97 = arith.constant 9.99999974E-6 : f32
    %113 = vector.broadcast %cst_97 : f32 to vector<8x1xf32>
    %114 = arith.addf %112, %113 : vector<8x1xf32>
    %115 = math.rsqrt %114 : vector<8x1xf32>
    %116 = arith.mulf %9, %115 : vector<8x1xf32>
    %117 = arith.mulf %105, %116 : vector<8x1xf32>
    %118 = arith.subf %10, %117 : vector<8x1xf32>
    %119 = vector.broadcast %116 : vector<8x1xf32> to vector<8x648xf32>
    %120 = arith.mulf %99, %119 : vector<8x648xf32>
    %121 = vector.broadcast %118 : vector<8x1xf32> to vector<8x648xf32>
    %122 = arith.addf %120, %121 : vector<8x648xf32>
    %123 = vector.broadcast %2 : vector<1x648xf32> to vector<8x648xf32>
    %124 = arith.mulf %122, %123 : vector<8x648xf32>
    %c0_98 = arith.constant 0 : index
    %c128_99 = arith.constant 128 : index
    %125 = vector.load %arg11[%c0_98, %c128_99] : memref<8x896xf32, #tpu.memory_space<vmem>>, vector<8x648xf32>
    tpu.vector_store %arg11[%c0_98, %c128_99], %124 {strides = array<i32>} : memref<8x896xf32, #tpu.memory_space<vmem>>, vector<8x648xf32>,
    %c0_100 = arith.constant 0 : index
    %c128_101 = arith.constant 128 : index
    %126 = vector.load %arg11[%c0_100, %c128_101] : memref<8x896xf32, #tpu.memory_space<vmem>>, vector<8x648xf32>
    %c0_102 = arith.constant 0 : index
    %c0_103 = arith.constant 0 : index
    %127 = vector.load %arg10[%c0_102, %c0_103] : memref<128x648xf32, #tpu.memory_space<vmem>>, vector<8x648xf32>
    tpu.vector_store %arg10[%c0_102, %c0_103], %126 {strides = array<i32>} : memref<128x648xf32, #tpu.memory_space<vmem>>, vector<8x648xf32>,
    %c0_104 = arith.constant 0 : index
    %c129_105 = arith.constant 129 : index
    %128 = vector.load %arg11[%c0_104, %c129_105] : memref<8x896xf32, #tpu.memory_space<vmem>>, vector<8x648xf32>
    %c8_106 = arith.constant 8 : index
    %c0_107 = arith.constant 0 : index
    %129 = vector.load %arg10[%c8_106, %c0_107] : memref<128x648xf32, #tpu.memory_space<vmem>>, vector<8x648xf32>
    tpu.vector_store %arg10[%c8_106, %c0_107], %128 {strides = array<i32>} : memref<128x648xf32, #tpu.memory_space<vmem>>, vector<8x648xf32>,
    %c0_108 = arith.constant 0 : index
    %c130 = arith.constant 130 : index
    %130 = vector.load %arg11[%c0_108, %c130] : memref<8x896xf32, #tpu.memory_space<vmem>>, vector<8x648xf32>
    %c16_109 = arith.constant 16 : index
    %c0_110 = arith.constant 0 : index
    %131 = vector.load %arg10[%c16_109, %c0_110] : memref<128x648xf32, #tpu.memory_space<vmem>>, vector<8x648xf32>
    tpu.vector_store %arg10[%c16_109, %c0_110], %130 {strides = array<i32>} : memref<128x648xf32, #tpu.memory_space<vmem>>, vector<8x648xf32>,
    %c0_111 = arith.constant 0 : index
    %c131 = arith.constant 131 : index
    %132 = vector.load %arg11[%c0_111, %c131] : memref<8x896xf32, #tpu.memory_space<vmem>>, vector<8x648xf32>
    %c24_112 = arith.constant 24 : index
    %c0_113 = arith.constant 0 : index
    %133 = vector.load %arg10[%c24_112, %c0_113] : memref<128x648xf32, #tpu.memory_space<vmem>>, vector<8x648xf32>
    tpu.vector_store %arg10[%c24_112, %c0_113], %132 {strides = array<i32>} : memref<128x648xf32, #tpu.memory_space<vmem>>, vector<8x648xf32>,
    %c0_114 = arith.constant 0 : index
    %c146_115 = arith.constant 146 : index
    %134 = vector.load %arg11[%c0_114, %c146_115] : memref<8x896xf32, #tpu.memory_space<vmem>>, vector<8x648xf32>
    %c32_116 = arith.constant 32 : index
    %c0_117 = arith.constant 0 : index
    %135 = vector.load %arg10[%c32_116, %c0_117] : memref<128x648xf32, #tpu.memory_space<vmem>>, vector<8x648xf32>
    tpu.vector_store %arg10[%c32_116, %c0_117], %134 {strides = array<i32>} : memref<128x648xf32, #tpu.memory_space<vmem>>, vector<8x648xf32>,
    %c0_118 = arith.constant 0 : index
    %c147_119 = arith.constant 147 : index
    %136 = vector.load %arg11[%c0_118, %c147_119] : memref<8x896xf32, #tpu.memory_space<vmem>>, vector<8x648xf32>
    %c40_120 = arith.constant 40 : index
    %c0_121 = arith.constant 0 : index
    %137 = vector.load %arg10[%c40_120, %c0_121] : memref<128x648xf32, #tpu.memory_space<vmem>>, vector<8x648xf32>
    tpu.vector_store %arg10[%c40_120, %c0_121], %136 {strides = array<i32>} : memref<128x648xf32, #tpu.memory_space<vmem>>, vector<8x648xf32>,
    %c0_122 = arith.constant 0 : index
    %c148 = arith.constant 148 : index
    %138 = vector.load %arg11[%c0_122, %c148] : memref<8x896xf32, #tpu.memory_space<vmem>>, vector<8x648xf32>
    %c48_123 = arith.constant 48 : index
    %c0_124 = arith.constant 0 : index
    %139 = vector.load %arg10[%c48_123, %c0_124] : memref<128x648xf32, #tpu.memory_space<vmem>>, vector<8x648xf32>
    tpu.vector_store %arg10[%c48_123, %c0_124], %138 {strides = array<i32>} : memref<128x648xf32, #tpu.memory_space<vmem>>, vector<8x648xf32>,
    %c0_125 = arith.constant 0 : index
    %c149 = arith.constant 149 : index
    %140 = vector.load %arg11[%c0_125, %c149] : memref<8x896xf32, #tpu.memory_space<vmem>>, vector<8x648xf32>
    %c56_126 = arith.constant 56 : index
    %c0_127 = arith.constant 0 : index
    %141 = vector.load %arg10[%c56_126, %c0_127] : memref<128x648xf32, #tpu.memory_space<vmem>>, vector<8x648xf32>
    tpu.vector_store %arg10[%c56_126, %c0_127], %140 {strides = array<i32>} : memref<128x648xf32, #tpu.memory_space<vmem>>, vector<8x648xf32>,
    %c0_128 = arith.constant 0 : index
    %c164 = arith.constant 164 : index
    %142 = vector.load %arg11[%c0_128, %c164] : memref<8x896xf32, #tpu.memory_space<vmem>>, vector<8x648xf32>
    %c64_129 = arith.constant 64 : index
    %c0_130 = arith.constant 0 : index
    %143 = vector.load %arg10[%c64_129, %c0_130] : memref<128x648xf32, #tpu.memory_space<vmem>>, vector<8x648xf32>
    tpu.vector_store %arg10[%c64_129, %c0_130], %142 {strides = array<i32>} : memref<128x648xf32, #tpu.memory_space<vmem>>, vector<8x648xf32>,
    %c0_131 = arith.constant 0 : index
    %c165 = arith.constant 165 : index
    %144 = vector.load %arg11[%c0_131, %c165] : memref<8x896xf32, #tpu.memory_space<vmem>>, vector<8x648xf32>
    %c72 = arith.constant 72 : index
    %c0_132 = arith.constant 0 : index
    %145 = vector.load %arg10[%c72, %c0_132] : memref<128x648xf32, #tpu.memory_space<vmem>>, vector<8x648xf32>
    tpu.vector_store %arg10[%c72, %c0_132], %144 {strides = array<i32>} : memref<128x648xf32, #tpu.memory_space<vmem>>, vector<8x648xf32>,
    %c0_133 = arith.constant 0 : index
    %c166 = arith.constant 166 : index
    %146 = vector.load %arg11[%c0_133, %c166] : memref<8x896xf32, #tpu.memory_space<vmem>>, vector<8x648xf32>
    %c80 = arith.constant 80 : index
    %c0_134 = arith.constant 0 : index
    %147 = vector.load %arg10[%c80, %c0_134] : memref<128x648xf32, #tpu.memory_space<vmem>>, vector<8x648xf32>
    tpu.vector_store %arg10[%c80, %c0_134], %146 {strides = array<i32>} : memref<128x648xf32, #tpu.memory_space<vmem>>, vector<8x648xf32>,
    %c0_135 = arith.constant 0 : index
    %c167 = arith.constant 167 : index
    %148 = vector.load %arg11[%c0_135, %c167] : memref<8x896xf32, #tpu.memory_space<vmem>>, vector<8x648xf32>
    %c88 = arith.constant 88 : index
    %c0_136 = arith.constant 0 : index
    %149 = vector.load %arg10[%c88, %c0_136] : memref<128x648xf32, #tpu.memory_space<vmem>>, vector<8x648xf32>
    tpu.vector_store %arg10[%c88, %c0_136], %148 {strides = array<i32>} : memref<128x648xf32, #tpu.memory_space<vmem>>, vector<8x648xf32>,
    %c0_137 = arith.constant 0 : index
    %c182 = arith.constant 182 : index
    %150 = vector.load %arg11[%c0_137, %c182] : memref<8x896xf32, #tpu.memory_space<vmem>>, vector<8x648xf32>
    %c96 = arith.constant 96 : index
    %c0_138 = arith.constant 0 : index
    %151 = vector.load %arg10[%c96, %c0_138] : memref<128x648xf32, #tpu.memory_space<vmem>>, vector<8x648xf32>
    tpu.vector_store %arg10[%c96, %c0_138], %150 {strides = array<i32>} : memref<128x648xf32, #tpu.memory_space<vmem>>, vector<8x648xf32>,
    %c0_139 = arith.constant 0 : index
    %c183 = arith.constant 183 : index
    %152 = vector.load %arg11[%c0_139, %c183] : memref<8x896xf32, #tpu.memory_space<vmem>>, vector<8x648xf32>
    %c104 = arith.constant 104 : index
    %c0_140 = arith.constant 0 : index
    %153 = vector.load %arg10[%c104, %c0_140] : memref<128x648xf32, #tpu.memory_space<vmem>>, vector<8x648xf32>
    tpu.vector_store %arg10[%c104, %c0_140], %152 {strides = array<i32>} : memref<128x648xf32, #tpu.memory_space<vmem>>, vector<8x648xf32>,
    %c0_141 = arith.constant 0 : index
    %c184 = arith.constant 184 : index
    %154 = vector.load %arg11[%c0_141, %c184] : memref<8x896xf32, #tpu.memory_space<vmem>>, vector<8x648xf32>
    %c112 = arith.constant 112 : index
    %c0_142 = arith.constant 0 : index
    %155 = vector.load %arg10[%c112, %c0_142] : memref<128x648xf32, #tpu.memory_space<vmem>>, vector<8x648xf32>
    tpu.vector_store %arg10[%c112, %c0_142], %154 {strides = array<i32>} : memref<128x648xf32, #tpu.memory_space<vmem>>, vector<8x648xf32>,
    %c0_143 = arith.constant 0 : index
    %c185 = arith.constant 185 : index
    %156 = vector.load %arg11[%c0_143, %c185] : memref<8x896xf32, #tpu.memory_space<vmem>>, vector<8x648xf32>
    %c120 = arith.constant 120 : index
    %c0_144 = arith.constant 0 : index
    %157 = vector.load %arg10[%c120, %c0_144] : memref<128x648xf32, #tpu.memory_space<vmem>>, vector<8x648xf32>
    tpu.vector_store %arg10[%c120, %c0_144], %156 {strides = array<i32>} : memref<128x648xf32, #tpu.memory_space<vmem>>, vector<8x648xf32>,
    %c0_145 = arith.constant 0 : index
    %c0_146 = arith.constant 0 : index
    %158 = vector.load %arg5[%c0_145, %c0_146] : memref<8x128xf32, #tpu.memory_space<vmem>>, vector<8x128xf32>
    %c0_147 = arith.constant 0 : index
    %c0_148 = arith.constant 0 : index
    %159 = vector.load %arg10[%c0_147, %c0_148] : memref<128x648xf32, #tpu.memory_space<vmem>>, vector<128x648xf32>
    %cst_149 = arith.constant dense<0.000000e+00> : vector<8x648xf32>
    %160 = tpu.matmul %158, %159, %cst_149 {dimension_numbers = #tpu.dot_dimension_numbers<[1], [0], [0], [1], [0, 0, 1, 1], [], []>} : vector<8x128xf32>, vector<128x648xf32>, vector<8x648xf32> -> vector<8x648xf32>
    %161 = vector.broadcast %6 : vector<8x1xf32> to vector<8x648xf32>
    %162 = arith.addf %160, %161 : vector<8x648xf32>
    %c0_150 = arith.constant 0 : index
    %c0_151 = arith.constant 0 : index
    %163 = vector.load %arg8[%c0_150, %c0_151] : memref<8x648xf32, #tpu.memory_space<vmem>>, vector<8x648xf32>
    tpu.vector_store %arg8[%c0_150, %c0_151], %162 {strides = array<i32>} : memref<8x648xf32, #tpu.memory_space<vmem>>, vector<8x648xf32>,
    return
  }
}

</mosaic_0001>

<llo_original>
// kernel: block_forward.1
$region0: #{block_forward.1}
  #allocation0 [shape = 'u32[]', space=smem, size = 0x4, offset = 0x4, fixed_abs, tag = 'smem constant byte address 0x4 - core index']
  #allocation1 [shape = 'u32[144,128]{1,0:T(1,128)}', space=vmem, size = 0x12000, scoped, tag = 'internal scratch']
  #allocation2 [shape = 'f32[36,648]{1,0:T(8,128)}', space=vmem, size = 0x1e000, scoped, tag = 'scratch operand']
  #allocation3 [shape = 'f32[128,648]{1,0:T(8,128)}', space=vmem, size = 0x60000, scoped, tag = 'scratch operand']
  #allocation4 [shape = 'f32[8,896]{1,0:T(8,128)}', space=vmem, size = 0x7000, scoped, tag = 'scratch operand']
  %s0 = inlined_call_operand.vmem [shape: f32[4,896], index: 0, kind: input, shape index: {}]
  %s1 = inlined_call_operand.vmem [shape: f32[32,2], index: 1, kind: input, shape index: {}]
  %s2 = inlined_call_operand.vmem [shape: f32[2,648], index: 2, kind: input, shape index: {}]
  %s3 = inlined_call_operand.vmem [shape: f32[8,36], index: 3, kind: input, shape index: {}]
  %s4 = inlined_call_operand.vmem [shape: f32[8,72], index: 4, kind: input, shape index: {}]
  %s5 = inlined_call_operand.vmem [shape: f32[8,128], index: 5, kind: input, shape index: {}]
  %s6 = inlined_call_operand.vmem [shape: f32[8,32], index: 6, kind: input, shape index: {}]
  %s7 = inlined_call_operand.vmem [shape: f32[8,8], index: 7, kind: input, shape index: {}]
  %s8 = inlined_call_operand.vmem [shape: f32[8,648], index: 8, kind: output, shape index: {}]
  %s9 = sld [smem:[#allocation0]]
  $region42: #{block_forward.1} parent=0
    _
  %s11 = ssub.s32 1, %s9
  %s12 = scalar_select 0, %s11, %s9
  // Predicated region
  $region2: #{block_forward.1} parent=0 // pred_check
    _
  $region3: #{block_forward.1} parent=0 // pred_check_branch
    %14 = sbr.rel (0) target = $region5
  $region4: #{block_forward.1} parent=0 // pred_region
    _
  $region5: #{block_forward.1} parent=0 // pred_fallthru
    _
  // Predicated region
  $region6: #{block_forward.1} parent=0 // pred_check
    _
  $region7: #{block_forward.1} parent=0 // pred_check_branch
    %16 = sbr.rel (0) target = $region9
  $region8: #{block_forward.1} parent=0 // pred_region
    _
  $region9: #{block_forward.1} parent=0 // pred_fallthru
    _
  // Predicated region
  $region10: #{block_forward.1} parent=0 // pred_check
    _
  $region11: #{block_forward.1} parent=0 // pred_check_branch
    %18 = sbr.rel (0) target = $region13
  $region12: #{block_forward.1} parent=0 // pred_region
    _
  $region13: #{block_forward.1} parent=0 // pred_fallthru
    _
  // Predicated region
  $region14: #{block_forward.1} parent=0 // pred_check
    _
  $region15: #{block_forward.1} parent=0 // pred_check_branch
    %20 = sbr.rel (0) target = $region17
  $region16: #{block_forward.1} parent=0 // pred_region
    _
  $region17: #{block_forward.1} parent=0 // pred_fallthru
    _
  // Predicated region
  $region18: #{block_forward.1} parent=0 // pred_check
    _
  $region19: #{block_forward.1} parent=0 // pred_check_branch
    %22 = sbr.rel (0) target = $region21
  $region20: #{block_forward.1} parent=0 // pred_region
    _
  $region21: #{block_forward.1} parent=0 // pred_fallthru
    _
  // Predicated region
  $region22: #{block_forward.1} parent=0 // pred_check
    _
  $region23: #{block_forward.1} parent=0 // pred_check_branch
    %24 = sbr.rel (0) target = $region25
  $region24: #{block_forward.1} parent=0 // pred_region
    _
  $region25: #{block_forward.1} parent=0 // pred_fallthru
    _
  // Predicated region
  $region26: #{block_forward.1} parent=0 // pred_check
    _
  $region27: #{block_forward.1} parent=0 // pred_check_branch
    %26 = sbr.rel (0) target = $region29
  $region28: #{block_forward.1} parent=0 // pred_region
    _
  $region29: #{block_forward.1} parent=0 // pred_fallthru
    _
  // Predicated region
  $region30: #{block_forward.1} parent=0 // pred_check
    _
  $region31: #{block_forward.1} parent=0 // pred_check_branch
    %28 = sbr.rel (0) target = $region33
  $region32: #{block_forward.1} parent=0 // pred_region
    _
  $region33: #{block_forward.1} parent=0 // pred_fallthru
    _
  %v29 = vld [vmem:[%s2] sm:$0xff]
  %v30 = vld [vmem:[%s2 + $0x8] sm:$0xf]
  %v33 = vcombine.high %v29, %v29
  %v35 = vunpack.c.l.s4 1983009808
  %v36 = vunpack.c.0.s8 %v35
  %v37 = vlaneseq
  %v38 = vshrl.u32 %v37, 7
  %v39 = vsub.s32 %v36, %v38
  %v40 = vrot.slane %v29, %v39
  %v42 = vunpack.c.l.s4 1983009808
  %v43 = vunpack.c.0.s8 %v42
  %v44 = vlaneseq
  %v45 = vshrl.u32 %v44, 7
  %v46 = vsub.s32 %v43, %v45
  %v47 = vrot.slane %v33, %v46
  %v48 = vcombine.high %v40, %v40
  %v49 = vcombine.high %v47, %v47
  %v51 = vunpack.c.l.s4 1983009808
  %v52 = vunpack.c.0.s8 %v51
  %v53 = vlaneseq
  %v54 = vshrl.u32 %v53, 7
  %v55 = vsub.s32 %v52, %v54
  %v56 = vrot.slane %v30, %v55
  %v57 = vcombine.high %v56, %v56
  %vm64 = vcmask 1041408
  %v65 = vsel %vm64, %v40, 0.0
  %v66 = vrot.slane %v65, 4
  %v67 = vadd.f32 %v65, %v66
  %v68 = vrot.slane %v67, 2
  %v69 = vadd.f32 %v67, %v68
  %v70 = vrot.slane %v69, 1
  %v71 = vadd.f32 %v69, %v70
  %v72 = vsel %vm64, %v48, 0.0
  %v73 = vrot.slane %v72, 4
  %v74 = vadd.f32 %v72, %v73
  %v75 = vrot.slane %v74, 2
  %v76 = vadd.f32 %v74, %v75
  %v77 = vrot.slane %v76, 1
  %v78 = vadd.f32 %v76, %v77
  %v79 = vsel %vm64, %v47, 0.0
  %v80 = vrot.slane %v79, 4
  %v81 = vadd.f32 %v79, %v80
  %v82 = vrot.slane %v81, 2
  %v83 = vadd.f32 %v81, %v82
  %v84 = vrot.slane %v83, 1
  %v85 = vadd.f32 %v83, %v84
  %v86 = vsel %vm64, %v49, 0.0
  %v87 = vrot.slane %v86, 4
  %v88 = vadd.f32 %v86, %v87
  %v89 = vrot.slane %v88, 2
  %v90 = vadd.f32 %v88, %v89
  %v91 = vrot.slane %v90, 1
  %v92 = vadd.f32 %v90, %v91
  %v93 = vsel %vm64, %v56, 0.0
  %v94 = vrot.slane %v93, 4
  %v95 = vadd.f32 %v93, %v94
  %v96 = vrot.slane %v95, 2
  %v97 = vadd.f32 %v95, %v96
  %v98 = vrot.slane %v97, 1
  %v99 = vadd.f32 %v97, %v98
  %vm100 = vcmask 58368
  %v101 = vsel %vm100, %v57, 0.0
  %v102 = vrot.slane %v101, 4
  %v103 = vadd.f32 %v101, %v102
  %v104 = vrot.slane %v103, 2
  %v105 = vadd.f32 %v103, %v104
  %v106 = vrot.slane %v105, 1
  %v107 = vadd.f32 %v105, %v106
  %v108 = vld [vmem:[%s7] sm:$0xff]
  %v109 = vld [vmem:[%s0] sm:$0xff]
  %v110 = vld [vmem:[%s0 + $0x8] sm:$0xff]
  %v111 = vld [vmem:[%s0 + $0x10] sm:$0xff]
  %v115 = vcombine.high %v109, %v109
  %v116 = vcombine.high %v110, %v110
  %v117 = vcombine.high %v111, %v111
  %118 = vrot.lane.b32.xlu0 %v109, 19
  %v119 = vpop.permute.xlu0 %118
  %120 = vrot.lane.b32.xlu0 %v115, 19
  %v121 = vpop.permute.xlu0 %120
  %122 = vrot.lane.b32.xlu0 %v110, 19
  %v123 = vpop.permute.xlu0 %122
  %124 = vrot.lane.b32.xlu0 %v116, 19
  %v125 = vpop.permute.xlu0 %124
  %126 = vrot.lane.b32.xlu0 %v111, 19
  %v127 = vpop.permute.xlu0 %126
  %128 = vrot.lane.b32.xlu0 %v117, 19
  %v129 = vpop.permute.xlu0 %128
  %vm130 = vcmask 154624
  %v131 = vsel %vm130, %v119, %v121
  %v132 = vsel %vm130, %v121, %v123
  %v133 = vsel %vm130, %v123, %v125
  %v134 = vsel %vm130, %v125, %v127
  %v135 = vsel %vm130, %v127, %v129
  %142 = vst [vmem:[#allocation2] sm:$0xf] %v131
  %143 = vst [vmem:[#allocation2 + $0x8] sm:$0xf] %v132
  %144 = vst [vmem:[#allocation2 + $0x10] sm:$0xf] %v133
  %145 = vst [vmem:[#allocation2 + $0x18] sm:$0xf] %v134
  %146 = vst [vmem:[#allocation2 + $0x20] sm:$0xf] %v135
  %vm147 = vcmask 60416
  %148 = vst.msk [vmem:[#allocation2 + $0x28] sm:$0xf] %vm147, %v129
  %v149 = vld [vmem:[%s0] sm:$0xff]
  %v150 = vld [vmem:[%s0 + $0x8] sm:$0xff]
  %v151 = vld [vmem:[%s0 + $0x10] sm:$0xff]
  %v155 = vcombine.low %v149, %v149
  %v156 = vcombine.low %v150, %v150
  %v157 = vcombine.low %v151, %v151
  %158 = vrot.lane.b32.xlu0 %v155, 18
  %v159 = vpop.permute.xlu0 %158
  %160 = vrot.lane.b32.xlu0 %v149, 18
  %v161 = vpop.permute.xlu0 %160
  %162 = vrot.lane.b32.xlu0 %v156, 18
  %v163 = vpop.permute.xlu0 %162
  %164 = vrot.lane.b32.xlu0 %v150, 18
  %v165 = vpop.permute.xlu0 %164
  %166 = vrot.lane.b32.xlu0 %v157, 18
  %v167 = vpop.permute.xlu0 %166
  %168 = vrot.lane.b32.xlu0 %v151, 18
  %v169 = vpop.permute.xlu0 %168
  %vm170 = vcmask 146432
  %v171 = vsel %vm170, %v159, %v161
  %v172 = vsel %vm170, %v161, %v163
  %v173 = vsel %vm170, %v163, %v165
  %v174 = vsel %vm170, %v165, %v167
  %v175 = vsel %vm170, %v167, %v169
  %182 = vst [vmem:[#allocation2] sm:$0xf0] %v171
  %183 = vst [vmem:[#allocation2 + $0x8] sm:$0xf0] %v172
  %184 = vst [vmem:[#allocation2 + $0x10] sm:$0xf0] %v173
  %185 = vst [vmem:[#allocation2 + $0x18] sm:$0xf0] %v174
  %186 = vst [vmem:[#allocation2 + $0x20] sm:$0xf0] %v175
  %vm187 = vcmask 64516
  %188 = vst.msk [vmem:[#allocation2 + $0x28] sm:$0xf0] %vm187, %v169
  %v189 = vld [vmem:[%s0] sm:$0xff]
  %v190 = vld [vmem:[%s0 + $0x8] sm:$0xff]
  %v191 = vld [vmem:[%s0 + $0x10] sm:$0xff]
  %v195 = vcombine.high %v189, %v189
  %v196 = vcombine.high %v190, %v190
  %v197 = vcombine.high %v191, %v191
  %198 = vrot.lane.b32.xlu0 %v189, 17
  %v199 = vpop.permute.xlu0 %198
  %200 = vrot.lane.b32.xlu0 %v195, 17
  %v201 = vpop.permute.xlu0 %200
  %202 = vrot.lane.b32.xlu0 %v190, 17
  %v203 = vpop.permute.xlu0 %202
  %204 = vrot.lane.b32.xlu0 %v196, 17
  %v205 = vpop.permute.xlu0 %204
  %206 = vrot.lane.b32.xlu0 %v191, 17
  %v207 = vpop.permute.xlu0 %206
  %208 = vrot.lane.b32.xlu0 %v197, 17
  %v209 = vpop.permute.xlu0 %208
  %vm210 = vcmask 138240
  %v211 = vsel %vm210, %v199, %v201
  %v212 = vsel %vm210, %v201, %v203
  %v213 = vsel %vm210, %v203, %v205
  %v214 = vsel %vm210, %v205, %v207
  %v215 = vsel %vm210, %v207, %v209
  %222 = vst [vmem:[#allocation2 + $0x30] sm:$0xf] %v211
  %223 = vst [vmem:[#allocation2 + $0x38] sm:$0xf] %v212
  %224 = vst [vmem:[#allocation2 + $0x40] sm:$0xf] %v213
  %225 = vst [vmem:[#allocation2 + $0x48] sm:$0xf] %v214
  %226 = vst [vmem:[#allocation2 + $0x50] sm:$0xf] %v215
  %227 = vst.msk [vmem:[#allocation2 + $0x58] sm:$0xf] %vm147, %v209
  %v228 = vld [vmem:[%s0] sm:$0xff]
  %v229 = vld [vmem:[%s0 + $0x8] sm:$0xff]
  %v230 = vld [vmem:[%s0 + $0x10] sm:$0xff]
  %v231 = vld [vmem:[%s0 + $0x18] sm:$0xf]
  %v236 = vcombine.low %v228, %v228
  %v237 = vcombine.low %v229, %v229
  %v238 = vcombine.low %v230, %v230
  %v239 = vcombine.low %v231, %v231
  %240 = vrot.lane.b32.xlu0 %v236, 1
  %v241 = vpop.permute.xlu0 %240
  %242 = vrot.lane.b32.xlu0 %v228, 1
  %v243 = vpop.permute.xlu0 %242
  %244 = vrot.lane.b32.xlu0 %v237, 1
  %v245 = vpop.permute.xlu0 %244
  %246 = vrot.lane.b32.xlu0 %v229, 1
  %v247 = vpop.permute.xlu0 %246
  %248 = vrot.lane.b32.xlu0 %v238, 1
  %v249 = vpop.permute.xlu0 %248
  %250 = vrot.lane.b32.xlu0 %v230, 1
  %v251 = vpop.permute.xlu0 %250
  %252 = vrot.lane.b32.xlu0 %v239, 1
  %v253 = vpop.permute.xlu0 %252
  %vm254 = vcmask 7168
  %v255 = vsel %vm254, %v241, %v243
  %v256 = vsel %vm254, %v243, %v245
  %v257 = vsel %vm254, %v245, %v247
  %v258 = vsel %vm254, %v247, %v249
  %v259 = vsel %vm254, %v249, %v251
  %v260 = vsel %vm254, %v251, %v253
  %267 = vst [vmem:[#allocation2 + $0x30] sm:$0xf0] %v255
  %268 = vst [vmem:[#allocation2 + $0x38] sm:$0xf0] %v256
  %269 = vst [vmem:[#allocation2 + $0x40] sm:$0xf0] %v257
  %270 = vst [vmem:[#allocation2 + $0x48] sm:$0xf0] %v258
  %271 = vst [vmem:[#allocation2 + $0x50] sm:$0xf0] %v259
  %272 = vst.msk [vmem:[#allocation2 + $0x58] sm:$0xf0] %vm187, %v260
  %v273 = vld [vmem:[%s0 + $0x4] sm:$0xff]
  %v274 = vld [vmem:[%s0 + $0xc] sm:$0xff]
  %v275 = vld [vmem:[%s0 + $0x14] sm:$0xff]
  %v279 = vcombine.high %v273, %v273
  %v280 = vcombine.high %v274, %v274
  %v281 = vcombine.high %v275, %v275
  %285 = vst [vmem:[#allocation2 + $0x60] sm:$0xf] %v273
  %286 = vst [vmem:[#allocation2 + $0x68] sm:$0xf] %v279
  %287 = vst [vmem:[#allocation2 + $0x70] sm:$0xf] %v274
  %288 = vst [vmem:[#allocation2 + $0x78] sm:$0xf] %v280
  %289 = vst [vmem:[#allocation2 + $0x80] sm:$0xf] %v275
  %290 = vst.msk [vmem:[#allocation2 + $0x88] sm:$0xf] %vm147, %v281
  %v291 = vld [vmem:[%s0 + $0x4] sm:$0xff]
  %v292 = vld [vmem:[%s0 + $0xc] sm:$0xff]
  %v293 = vld [vmem:[%s0 + $0x14] sm:$0xff]
  %v297 = vcombine.low %v291, %v291
  %v298 = vcombine.low %v292, %v292
  %v299 = vcombine.low %v293, %v293
  %300 = vrot.lane.b32.xlu0 %v297, 127
  %v301 = vpop.permute.xlu0 %300
  %302 = vrot.lane.b32.xlu0 %v291, 127
  %v303 = vpop.permute.xlu0 %302
  %304 = vrot.lane.b32.xlu0 %v298, 127
  %v305 = vpop.permute.xlu0 %304
  %306 = vrot.lane.b32.xlu0 %v292, 127
  %v307 = vpop.permute.xlu0 %306
  %308 = vrot.lane.b32.xlu0 %v299, 127
  %v309 = vpop.permute.xlu0 %308
  %310 = vrot.lane.b32.xlu0 %v293, 127
  %v311 = vpop.permute.xlu0 %310
  %vm312 = vcmask 1039360
  %v313 = vsel %vm312, %v301, %v303
  %v314 = vsel %vm312, %v303, %v305
  %v315 = vsel %vm312, %v305, %v307
  %v316 = vsel %vm312, %v307, %v309
  %v317 = vsel %vm312, %v309, %v311
  %324 = vst [vmem:[#allocation2 + $0x60] sm:$0xf0] %v313
  %325 = vst [vmem:[#allocation2 + $0x68] sm:$0xf0] %v314
  %326 = vst [vmem:[#allocation2 + $0x70] sm:$0xf0] %v315
  %327 = vst [vmem:[#allocation2 + $0x78] sm:$0xf0] %v316
  %328 = vst [vmem:[#allocation2 + $0x80] sm:$0xf0] %v317
  %329 = vst.msk [vmem:[#allocation2 + $0x88] sm:$0xf0] %vm187, %v311
  %v330 = vld [vmem:[%s0 + $0x4] sm:$0xff]
  %v331 = vld [vmem:[%s0 + $0xc] sm:$0xff]
  %v332 = vld [vmem:[%s0 + $0x14] sm:$0xff]
  %v336 = vcombine.high %v330, %v330
  %v337 = vcombine.high %v331, %v331
  %v338 = vcombine.high %v332, %v332
  %339 = vrot.lane.b32.xlu0 %v330, 111
  %v340 = vpop.permute.xlu0 %339
  %341 = vrot.lane.b32.xlu0 %v336, 111
  %v342 = vpop.permute.xlu0 %341
  %343 = vrot.lane.b32.xlu0 %v331, 111
  %v344 = vpop.permute.xlu0 %343
  %345 = vrot.lane.b32.xlu0 %v337, 111
  %v346 = vpop.permute.xlu0 %345
  %347 = vrot.lane.b32.xlu0 %v332, 111
  %v348 = vpop.permute.xlu0 %347
  %349 = vrot.lane.b32.xlu0 %v338, 111
  %v350 = vpop.permute.xlu0 %349
  %vm351 = vcmask 908288
  %v352 = vsel %vm351, %v340, %v342
  %v353 = vsel %vm351, %v342, %v344
  %v354 = vsel %vm351, %v344, %v346
  %v355 = vsel %vm351, %v346, %v348
  %v356 = vsel %vm351, %v348, %v350
  %363 = vst [vmem:[#allocation2 + $0x90] sm:$0xf] %v352
  %364 = vst [vmem:[#allocation2 + $0x98] sm:$0xf] %v353
  %365 = vst [vmem:[#allocation2 + $0xa0] sm:$0xf] %v354
  %366 = vst [vmem:[#allocation2 + $0xa8] sm:$0xf] %v355
  %367 = vst [vmem:[#allocation2 + $0xb0] sm:$0xf] %v356
  %368 = vst.msk [vmem:[#allocation2 + $0xb8] sm:$0xf] %vm147, %v350
  %v369 = vld [vmem:[%s0 + $0x4] sm:$0xff]
  %v370 = vld [vmem:[%s0 + $0xc] sm:$0xff]
  %v371 = vld [vmem:[%s0 + $0x14] sm:$0xff]
  %v375 = vcombine.low %v369, %v369
  %v376 = vcombine.low %v370, %v370
  %v377 = vcombine.low %v371, %v371
  %378 = vrot.lane.b32.xlu0 %v375, 110
  %v379 = vpop.permute.xlu0 %378
  %380 = vrot.lane.b32.xlu0 %v369, 110
  %v381 = vpop.permute.xlu0 %380
  %382 = vrot.lane.b32.xlu0 %v376, 110
  %v383 = vpop.permute.xlu0 %382
  %384 = vrot.lane.b32.xlu0 %v370, 110
  %v385 = vpop.permute.xlu0 %384
  %386 = vrot.lane.b32.xlu0 %v377, 110
  %v387 = vpop.permute.xlu0 %386
  %388 = vrot.lane.b32.xlu0 %v371, 110
  %v389 = vpop.permute.xlu0 %388
  %vm390 = vcmask 900096
  %v391 = vsel %vm390, %v379, %v381
  %v392 = vsel %vm390, %v381, %v383
  %v393 = vsel %vm390, %v383, %v385
  %v394 = vsel %vm390, %v385, %v387
  %v395 = vsel %vm390, %v387, %v389
  %402 = vst [vmem:[#allocation2 + $0x90] sm:$0xf0] %v391
  %403 = vst [vmem:[#allocation2 + $0x98] sm:$0xf0] %v392
  %404 = vst [vmem:[#allocation2 + $0xa0] sm:$0xf0] %v393
  %405 = vst [vmem:[#allocation2 + $0xa8] sm:$0xf0] %v394
  %406 = vst [vmem:[#allocation2 + $0xb0] sm:$0xf0] %v395
  %407 = vst.msk [vmem:[#allocation2 + $0xb8] sm:$0xf0] %vm187, %v389
  %v408 = vld [vmem:[%s0 + $0x4] sm:$0xff]
  %v409 = vld [vmem:[%s0 + $0xc] sm:$0xff]
  %v410 = vld [vmem:[%s0 + $0x14] sm:$0xff]
  %v414 = vcombine.high %v408, %v408
  %v415 = vcombine.high %v409, %v409
  %v416 = vcombine.high %v410, %v410
  %417 = vrot.lane.b32.xlu0 %v408, 109
  %v418 = vpop.permute.xlu0 %417
  %419 = vrot.lane.b32.xlu0 %v414, 109
  %v420 = vpop.permute.xlu0 %419
  %421 = vrot.lane.b32.xlu0 %v409, 109
  %v422 = vpop.permute.xlu0 %421
  %423 = vrot.lane.b32.xlu0 %v415, 109
  %v424 = vpop.permute.xlu0 %423
  %425 = vrot.lane.b32.xlu0 %v410, 109
  %v426 = vpop.permute.xlu0 %425
  %427 = vrot.lane.b32.xlu0 %v416, 109
  %v428 = vpop.permute.xlu0 %427
  %vm429 = vcmask 891904
  %v430 = vsel %vm429, %v418, %v420
  %v431 = vsel %vm429, %v420, %v422
  %v432 = vsel %vm429, %v422, %v424
  %v433 = vsel %vm429, %v424, %v426
  %v434 = vsel %vm429, %v426, %v428
  %441 = vst [vmem:[#allocation2 + $0xc0] sm:$0xf] %v430
  %442 = vst [vmem:[#allocation2 + $0xc8] sm:$0xf] %v431
  %443 = vst [vmem:[#allocation2 + $0xd0] sm:$0xf] %v432
  %444 = vst [vmem:[#allocation2 + $0xd8] sm:$0xf] %v433
  %445 = vst [vmem:[#allocation2 + $0xe0] sm:$0xf] %v434
  %446 = vst.msk [vmem:[#allocation2 + $0xe8] sm:$0xf] %vm147, %v428
  %v447 = vld [vmem:[%s3] sm:$0xff]
  %v448 = vld [vmem:[#allocation2] sm:$0xff]
  %v449 = vld [vmem:[#allocation2 + $0x8] sm:$0xff]
  %v450 = vld [vmem:[#allocation2 + $0x10] sm:$0xff]
  %v451 = vld [vmem:[#allocation2 + $0x18] sm:$0xff]
  %v452 = vld [vmem:[#allocation2 + $0x20] sm:$0xff]
  %v453 = vld [vmem:[#allocation2 + $0x28] sm:$0xff]
  %v454 = vld [vmem:[#allocation2 + $0x30] sm:$0xff]
  %v455 = vld [vmem:[#allocation2 + $0x38] sm:$0xff]
  %v456 = vld [vmem:[#allocation2 + $0x40] sm:$0xff]
  %v457 = vld [vmem:[#allocation2 + $0x48] sm:$0xff]
  %v458 = vld [vmem:[#allocation2 + $0x50] sm:$0xff]
  %v459 = vld [vmem:[#allocation2 + $0x58] sm:$0xff]
  %v460 = vld [vmem:[#allocation2 + $0x60] sm:$0xff]
  %v461 = vld [vmem:[#allocation2 + $0x68] sm:$0xff]
  %v462 = vld [vmem:[#allocation2 + $0x70] sm:$0xff]
  %v463 = vld [vmem:[#allocation2 + $0x78] sm:$0xff]
  %v464 = vld [vmem:[#allocation2 + $0x80] sm:$0xff]
  %v465 = vld [vmem:[#allocation2 + $0x88] sm:$0xff]
  %v466 = vld [vmem:[#allocation2 + $0x90] sm:$0xff]
  %v467 = vld [vmem:[#allocation2 + $0x98] sm:$0xff]
  %v468 = vld [vmem:[#allocation2 + $0xa0] sm:$0xff]
  %v469 = vld [vmem:[#allocation2 + $0xa8] sm:$0xff]
  %v470 = vld [vmem:[#allocation2 + $0xb0] sm:$0xff]
  %v471 = vld [vmem:[#allocation2 + $0xb8] sm:$0xff]
  %v472 = vld [vmem:[#allocation2 + $0xc0] sm:$0xf]
  %v473 = vld [vmem:[#allocation2 + $0xc8] sm:$0xf]
  %v474 = vld [vmem:[#allocation2 + $0xd0] sm:$0xf]
  %v475 = vld [vmem:[#allocation2 + $0xd8] sm:$0xf]
  %v476 = vld [vmem:[#allocation2 + $0xe0] sm:$0xf]
  %v477 = vld [vmem:[#allocation2 + $0xe8] sm:$0xf]
  %479 = vset.pattern.permute.xlu0 0
  %480 = vperm.xlu0 %479, %v108
  %v481 = vpop.permute.xlu0 %480
  %vm483 = vcmask 293888
  %v485 = vsel %vm483, %v447, 0
  %vm487 = vcmask 1043456
  %v489 = vsel %vm487, %v472, 0
  %v492 = vsel %vm487, %v473, 0
  %v495 = vsel %vm487, %v474, 0
  %v498 = vsel %vm487, %v475, 0
  %v501 = vsel %vm487, %v476, 0
  %v504 = vsel %vm487, %v477, 0
  %506 = vmatprep.subr.mxu0 0.0
  %507 = vmatpush1.msra.mxu0 0.0
  %508 = vmatprep.subr.mxu0 0.0
  %509 = vmatpush1.msra.mxu0 0.0
  %510 = vmatprep.subr.mxu0 0.0
  %511 = vmatpush1.msra.mxu0 0.0
  %512 = vmatprep.subr.mxu0 0.0
  %513 = vmatpush1.msra.mxu0 0.0
  %514 = vmatprep.subr.mxu0 0.0
  %515 = vmatpush1.msra.mxu0 0.0
  %516 = vmatprep.subr.mxu0 0.0
  %517 = vmatpush1.msra.mxu0 0.0
  %518 = vmatprep.subr.mxu0 0.0
  %519 = vmatpush1.msra.mxu0 0.0
  %520 = vmatprep.subr.mxu0 0.0
  %521 = vmatpush1.msra.mxu0 0.0
  %522 = vmatprep.subr.mxu0 0.0
  %523 = vmatpush1.msra.mxu0 0.0
  %524 = vmatprep.subr.mxu0 0.0
  %525 = vmatpush1.msra.mxu0 0.0
  %526 = vmatprep.subr.mxu0 0.0
  %527 = vmatpush1.msra.mxu0 0.0
  %528 = vmatprep.subr.mxu0 %v492
  %529 = vmatpush1.msra.mxu0 %v489
  %530 = vmatprep.subr.mxu0 %v467
  %531 = vmatpush1.msra.mxu0 %v466
  %532 = vmatprep.subr.mxu0 %v461
  %533 = vmatpush1.msra.mxu0 %v460
  %534 = vmatprep.subr.mxu0 %v455
  %535 = vmatpush1.msra.mxu0 %v454
  %536 = vmatprep.subr.mxu0 %v449
  %537 = vmatpush1.msra.mxu0 %v448
  %538 = vmatprep.subr.mxu0 0.0
  %539 = vmatpush2.msra.mxu0 0.0
  %540 = vmatprep.subr.mxu0 0.0
  %541 = vmatpush2.msra.mxu0 0.0
  %542 = vmatprep.subr.mxu0 0.0
  %543 = vmatpush2.msra.mxu0 0.0
  %544 = vmatprep.subr.mxu0 0.0
  %545 = vmatpush2.msra.mxu0 0.0
  %546 = vmatprep.subr.mxu0 0.0
  %547 = vmatpush2.msra.mxu0 0.0
  %548 = vmatprep.subr.mxu0 0.0
  %549 = vmatpush2.msra.mxu0 0.0
  %550 = vmatprep.subr.mxu0 0.0
  %551 = vmatpush2.msra.mxu0 0.0
  %552 = vmatprep.subr.mxu0 0.0
  %553 = vmatpush2.msra.mxu0 0.0
  %554 = vmatprep.subr.mxu0 0.0
  %555 = vmatpush2.msra.mxu0 0.0
  %556 = vmatprep.subr.mxu0 0.0
  %557 = vmatpush2.msra.mxu0 0.0
  %558 = vmatprep.subr.mxu0 0.0
  %559 = vmatpush2.msra.mxu0 0.0
  %560 = vmatprep.subr.mxu0 0.0
  %561 = vmatpush2.msra.mxu0 0.0
  %562 = vmatprep.subr.mxu0 0.0
  %563 = vmatpush2.msra.mxu0 0.0
  %564 = vmatprep.subr.mxu0 0.0
  %565 = vmatpush2.msra.mxu0 0.0
  %566 = vmatprep.subr.mxu0 0.0
  %567 = vmatpush2.msra.mxu0 0.0
  %568 = vmatprep.subr.mxu0 0.0
  %569 = vmatpush2.msra.mxu0 0.0
  %570 = vmatprep.mubr.f32.mxu0 0.0
  %571 = vmatmul.mubr.f32.gmra.mxu0 %v485
  %v572 = vpop.f32.mrf.mxu0
  %v573 = vadd.f32 %v481, %v572
  %v574 = vpop.f32.mrf.mxu0
  %v575 = vadd.f32 %v481, %v574
  %576 = vdwg.mxu0
  %577 = vmatprep.subr.mxu0 0.0
  %578 = vmatpush1.msra.mxu0 0.0
  %579 = vmatprep.subr.mxu0 0.0
  %580 = vmatpush1.msra.mxu0 0.0
  %581 = vmatprep.subr.mxu0 0.0
  %582 = vmatpush1.msra.mxu0 0.0
  %583 = vmatprep.subr.mxu0 0.0
  %584 = vmatpush1.msra.mxu0 0.0
  %585 = vmatprep.subr.mxu0 0.0
  %586 = vmatpush1.msra.mxu0 0.0
  %587 = vmatprep.subr.mxu0 0.0
  %588 = vmatpush1.msra.mxu0 0.0
  %589 = vmatprep.subr.mxu0 0.0
  %590 = vmatpush1.msra.mxu0 0.0
  %591 = vmatprep.subr.mxu0 0.0
  %592 = vmatpush1.msra.mxu0 0.0
  %593 = vmatprep.subr.mxu0 0.0
  %594 = vmatpush1.msra.mxu0 0.0
  %595 = vmatprep.subr.mxu0 0.0
  %596 = vmatpush1.msra.mxu0 0.0
  %597 = vmatprep.subr.mxu0 0.0
  %598 = vmatpush1.msra.mxu0 0.0
  %599 = vmatprep.subr.mxu0 %v498
  %600 = vmatpush1.msra.mxu0 %v495
  %601 = vmatprep.subr.mxu0 %v469
  %602 = vmatpush1.msra.mxu0 %v468
  %603 = vmatprep.subr.mxu0 %v463
  %604 = vmatpush1.msra.mxu0 %v462
  %605 = vmatprep.subr.mxu0 %v457
  %606 = vmatpush1.msra.mxu0 %v456
  %607 = vmatprep.subr.mxu0 %v451
  %608 = vmatpush1.msra.mxu0 %v450
  %609 = vmatprep.subr.mxu0 0.0
  %610 = vmatpush2.msra.mxu0 0.0
  %611 = vmatprep.subr.mxu0 0.0
  %612 = vmatpush2.msra.mxu0 0.0
  %613 = vmatprep.subr.mxu0 0.0
  %614 = vmatpush2.msra.mxu0 0.0
  %615 = vmatprep.subr.mxu0 0.0
  %616 = vmatpush2.msra.mxu0 0.0
  %617 = vmatprep.subr.mxu0 0.0
  %618 = vmatpush2.msra.mxu0 0.0
  %619 = vmatprep.subr.mxu0 0.0
  %620 = vmatpush2.msra.mxu0 0.0
  %621 = vmatprep.subr.mxu0 0.0
  %622 = vmatpush2.msra.mxu0 0.0
  %623 = vmatprep.subr.mxu0 0.0
  %624 = vmatpush2.msra.mxu0 0.0
  %625 = vmatprep.subr.mxu0 0.0
  %626 = vmatpush2.msra.mxu0 0.0
  %627 = vmatprep.subr.mxu0 0.0
  %628 = vmatpush2.msra.mxu0 0.0
  %629 = vmatprep.subr.mxu0 0.0
  %630 = vmatpush2.msra.mxu0 0.0
  %631 = vmatprep.subr.mxu0 0.0
  %632 = vmatpush2.msra.mxu0 0.0
  %633 = vmatprep.subr.mxu0 0.0
  %634 = vmatpush2.msra.mxu0 0.0
  %635 = vmatprep.subr.mxu0 0.0
  %636 = vmatpush2.msra.mxu0 0.0
  %637 = vmatprep.subr.mxu0 0.0
  %638 = vmatpush2.msra.mxu0 0.0
  %639 = vmatprep.subr.mxu0 0.0
  %640 = vmatpush2.msra.mxu0 0.0
  %641 = vmatprep.mubr.f32.mxu0 0.0
  %642 = vmatmul.mubr.f32.gmra.mxu0 %v485
  %v643 = vpop.f32.mrf.mxu0
  %v644 = vadd.f32 %v481, %v643
  %v645 = vpop.f32.mrf.mxu0
  %v646 = vadd.f32 %v481, %v645
  %647 = vdwg.mxu0
  %648 = vmatprep.subr.mxu0 0.0
  %649 = vmatpush1.msra.mxu0 0.0
  %650 = vmatprep.subr.mxu0 0.0
  %651 = vmatpush1.msra.mxu0 0.0
  %652 = vmatprep.subr.mxu0 0.0
  %653 = vmatpush1.msra.mxu0 0.0
  %654 = vmatprep.subr.mxu0 0.0
  %655 = vmatpush1.msra.mxu0 0.0
  %656 = vmatprep.subr.mxu0 0.0
  %657 = vmatpush1.msra.mxu0 0.0
  %658 = vmatprep.subr.mxu0 0.0
  %659 = vmatpush1.msra.mxu0 0.0
  %660 = vmatprep.subr.mxu0 0.0
  %661 = vmatpush1.msra.mxu0 0.0
  %662 = vmatprep.subr.mxu0 0.0
  %663 = vmatpush1.msra.mxu0 0.0
  %664 = vmatprep.subr.mxu0 0.0
  %665 = vmatpush1.msra.mxu0 0.0
  %666 = vmatprep.subr.mxu0 0.0
  %667 = vmatpush1.msra.mxu0 0.0
  %668 = vmatprep.subr.mxu0 0.0
  %669 = vmatpush1.msra.mxu0 0.0
  %670 = vmatprep.subr.mxu0 %v504
  %671 = vmatpush1.msra.mxu0 %v501
  %672 = vmatprep.subr.mxu0 %v471
  %673 = vmatpush1.msra.mxu0 %v470
  %674 = vmatprep.subr.mxu0 %v465
  %675 = vmatpush1.msra.mxu0 %v464
  %676 = vmatprep.subr.mxu0 %v459
  %677 = vmatpush1.msra.mxu0 %v458
  %678 = vmatprep.subr.mxu0 %v453
  %679 = vmatpush1.msra.mxu0 %v452
  %680 = vmatprep.subr.mxu0 0.0
  %681 = vmatpush2.msra.mxu0 0.0
  %682 = vmatprep.subr.mxu0 0.0
  %683 = vmatpush2.msra.mxu0 0.0
  %684 = vmatprep.subr.mxu0 0.0
  %685 = vmatpush2.msra.mxu0 0.0
  %686 = vmatprep.subr.mxu0 0.0
  %687 = vmatpush2.msra.mxu0 0.0
  %688 = vmatprep.subr.mxu0 0.0
  %689 = vmatpush2.msra.mxu0 0.0
  %690 = vmatprep.subr.mxu0 0.0
  %691 = vmatpush2.msra.mxu0 0.0
  %692 = vmatprep.subr.mxu0 0.0
  %693 = vmatpush2.msra.mxu0 0.0
  %694 = vmatprep.subr.mxu0 0.0
  %695 = vmatpush2.msra.mxu0 0.0
  %696 = vmatprep.subr.mxu0 0.0
  %697 = vmatpush2.msra.mxu0 0.0
  %698 = vmatprep.subr.mxu0 0.0
  %699 = vmatpush2.msra.mxu0 0.0
  %700 = vmatprep.subr.mxu0 0.0
  %701 = vmatpush2.msra.mxu0 0.0
  %702 = vmatprep.subr.mxu0 0.0
  %703 = vmatpush2.msra.mxu0 0.0
  %704 = vmatprep.subr.mxu0 0.0
  %705 = vmatpush2.msra.mxu0 0.0
  %706 = vmatprep.subr.mxu0 0.0
  %707 = vmatpush2.msra.mxu0 0.0
  %708 = vmatprep.subr.mxu0 0.0
  %709 = vmatpush2.msra.mxu0 0.0
  %710 = vmatprep.subr.mxu0 0.0
  %711 = vmatpush2.msra.mxu0 0.0
  %712 = vmatprep.mubr.f32.mxu0 0.0
  %713 = vmatmul.mubr.f32.gmra.mxu0 %v485
  %v714 = vpop.f32.mrf.mxu0
  %v715 = vadd.f32 %v481, %v714
  %v716 = vpop.f32.mrf.mxu0
  %v717 = vadd.f32 %v481, %v716
  %718 = vdwg.mxu0
  %v719 = vmax.f32 %v573, 0.0
  %v720 = vmax.f32 %v575, 0.0
  %v721 = vmax.f32 %v644, 0.0
  %v722 = vmax.f32 %v646, 0.0
  %v723 = vmax.f32 %v715, 0.0
  %v724 = vmax.f32 %v717, 0.0
  %v725 = vmul.f32 %v719, %v71
  %v726 = vmul.f32 %v720, %v78
  %v727 = vmul.f32 %v721, %v85
  %v728 = vmul.f32 %v722, %v92
  %v729 = vmul.f32 %v723, %v99
  %v730 = vmul.f32 %v724, %v107
  %v731 = vadd.f32 %v725, %v726
  %v732 = vadd.f32 %v731, %v727
  %v733 = vadd.f32 %v732, %v728
  %v734 = vadd.f32 %v733, %v729
  %vm735 = vcmask 64512
  %v736 = vsel %vm735, %v730, 0.0
  %v737 = vadd.f32 %v734, %v736
  %738 = vadd.xlane.f32.xlu0 %v737
  %v739 = vpop.xlane.xlu0 %738
  %v740 = vmul.f32 %v739, 0.001953125
  %v741 = vmul.f32 %v725, %v725
  %v742 = vmul.f32 %v726, %v726
  %v743 = vmul.f32 %v727, %v727
  %v744 = vmul.f32 %v728, %v728
  %v745 = vmul.f32 %v729, %v729
  %v746 = vmul.f32 %v730, %v730
  %v747 = vadd.f32 %v741, %v742
  %v748 = vadd.f32 %v747, %v743
  %v749 = vadd.f32 %v748, %v744
  %v750 = vadd.f32 %v749, %v745
  %v751 = vsel %vm735, %v746, 0.0
  %v752 = vadd.f32 %v750, %v751
  %753 = vadd.xlane.f32.xlu0 %v752
  %v754 = vpop.xlane.xlu0 %753
  %v755 = vmul.f32 %v754, 0.001953125
  %v756 = vmul.f32 %v740, %v740
  %v757 = vsub.f32 %v755, %v756
  %v758 = vadd.f32 %v757, 1e-05
  %v759 = vrsqrt.pop %v758
  %v760 = vmul.f32 %v108, %v759
  %v761 = vmul.f32 %v740, %v760
  %763 = vrot.lane.b32.xlu0 %v761, 1
  %v764 = vpop.permute.xlu0 %763
  %v766 = vsub.f32 %v108, %v764
  %v767 = vld [vmem:[%s6] sm:$0xff]
  %v768 = vld [vmem:[%s1] sm:$0xff]
  %v769 = vld [vmem:[%s1 + $0x8] sm:$0xff]
  %v770 = vld [vmem:[%s1 + $0x10] sm:$0xff]
  %v771 = vld [vmem:[%s1 + $0x18] sm:$0xff]
  %772 = vset.pattern.permute.xlu0 1
  %773 = vperm.xlu0 %772, %v108
  %v774 = vpop.permute.xlu0 %773
  %vm776 = vcmask 261120
  %v778 = vsel %vm776, %v767, 0
  %780 = vmatprep.subr.mxu0 0.0
  %781 = vmatpush1.msra.mxu0 0.0
  %782 = vmatprep.subr.mxu0 0.0
  %783 = vmatpush1.msra.mxu0 0.0
  %784 = vmatprep.subr.mxu0 0.0
  %785 = vmatpush1.msra.mxu0 0.0
  %786 = vmatprep.subr.mxu0 0.0
  %787 = vmatpush1.msra.mxu0 0.0
  %788 = vmatprep.subr.mxu0 0.0
  %789 = vmatpush1.msra.mxu0 0.0
  %790 = vmatprep.subr.mxu0 0.0
  %791 = vmatpush1.msra.mxu0 0.0
  %792 = vmatprep.subr.mxu0 0.0
  %793 = vmatpush1.msra.mxu0 0.0
  %794 = vmatprep.subr.mxu0 0.0
  %795 = vmatpush1.msra.mxu0 0.0
  %796 = vmatprep.subr.mxu0 0.0
  %797 = vmatpush1.msra.mxu0 0.0
  %798 = vmatprep.subr.mxu0 0.0
  %799 = vmatpush1.msra.mxu0 0.0
  %800 = vmatprep.subr.mxu0 0.0
  %801 = vmatpush1.msra.mxu0 0.0
  %802 = vmatprep.subr.mxu0 0.0
  %803 = vmatpush1.msra.mxu0 0.0
  %804 = vmatprep.subr.mxu0 0.0
  %805 = vmatpush1.msra.mxu0 %v771
  %806 = vmatprep.subr.mxu0 0.0
  %807 = vmatpush1.msra.mxu0 %v770
  %808 = vmatprep.subr.mxu0 0.0
  %809 = vmatpush1.msra.mxu0 %v769
  %810 = vmatprep.subr.mxu0 0.0
  %811 = vmatpush1.msra.mxu0 %v768
  %812 = vmatprep.subr.mxu0 0.0
  %813 = vmatpush2.msra.mxu0 0.0
  %814 = vmatprep.subr.mxu0 0.0
  %815 = vmatpush2.msra.mxu0 0.0
  %816 = vmatprep.subr.mxu0 0.0
  %817 = vmatpush2.msra.mxu0 0.0
  %818 = vmatprep.subr.mxu0 0.0
  %819 = vmatpush2.msra.mxu0 0.0
  %820 = vmatprep.subr.mxu0 0.0
  %821 = vmatpush2.msra.mxu0 0.0
  %822 = vmatprep.subr.mxu0 0.0
  %823 = vmatpush2.msra.mxu0 0.0
  %824 = vmatprep.subr.mxu0 0.0
  %825 = vmatpush2.msra.mxu0 0.0
  %826 = vmatprep.subr.mxu0 0.0
  %827 = vmatpush2.msra.mxu0 0.0
  %828 = vmatprep.subr.mxu0 0.0
  %829 = vmatpush2.msra.mxu0 0.0
  %830 = vmatprep.subr.mxu0 0.0
  %831 = vmatpush2.msra.mxu0 0.0
  %832 = vmatprep.subr.mxu0 0.0
  %833 = vmatpush2.msra.mxu0 0.0
  %834 = vmatprep.subr.mxu0 0.0
  %835 = vmatpush2.msra.mxu0 0.0
  %836 = vmatprep.subr.mxu0 0.0
  %837 = vmatpush2.msra.mxu0 0.0
  %838 = vmatprep.subr.mxu0 0.0
  %839 = vmatpush2.msra.mxu0 0.0
  %840 = vmatprep.subr.mxu0 0.0
  %841 = vmatpush2.msra.mxu0 0.0
  %842 = vmatprep.subr.mxu0 0.0
  %843 = vmatpush2.msra.mxu0 0.0
  %844 = vmatprep.mubr.f32.mxu0 0.0
  %845 = vmatmul.mubr.f32.gmra.mxu0 %v778
  %v846 = vpop.f32.mrf.mxu0
  %v847 = vadd.f32 %v774, %v846
  %v848 = vpop.f32.mrf.mxu0
  %849 = vdwg.mxu0
  %v850 = vmax.f32 %v847, 0.0
  %vm851 = vcmask 15360
  %v853 = vsel %vm851, %v850, 0
  %v855 = vsel %vm64, %v40, 0
  %v857 = vsel %vm64, %v48, 0
  %v859 = vsel %vm64, %v47, 0
  %v861 = vsel %vm64, %v49, 0
  %v863 = vsel %vm64, %v56, 0
  %v865 = vsel %vm64, %v57, 0
  %867 = vmatprep.subr.mxu0 0.0
  %868 = vmatpush1.msra.mxu0 0.0
  %869 = vmatprep.subr.mxu0 0.0
  %870 = vmatpush1.msra.mxu0 0.0
  %871 = vmatprep.subr.mxu0 0.0
  %872 = vmatpush1.msra.mxu0 0.0
  %873 = vmatprep.subr.mxu0 0.0
  %874 = vmatpush1.msra.mxu0 0.0
  %875 = vmatprep.subr.mxu0 0.0
  %876 = vmatpush1.msra.mxu0 0.0
  %877 = vmatprep.subr.mxu0 0.0
  %878 = vmatpush1.msra.mxu0 0.0
  %879 = vmatprep.subr.mxu0 0.0
  %880 = vmatpush1.msra.mxu0 0.0
  %881 = vmatprep.subr.mxu0 0.0
  %882 = vmatpush1.msra.mxu0 0.0
  %883 = vmatprep.subr.mxu0 0.0
  %884 = vmatpush1.msra.mxu0 0.0
  %885 = vmatprep.subr.mxu0 0.0
  %886 = vmatpush1.msra.mxu0 0.0
  %887 = vmatprep.subr.mxu0 0.0
  %888 = vmatpush1.msra.mxu0 0.0
  %889 = vmatprep.subr.mxu0 0.0
  %890 = vmatpush1.msra.mxu0 0.0
  %891 = vmatprep.subr.mxu0 0.0
  %892 = vmatpush1.msra.mxu0 0.0
  %893 = vmatprep.subr.mxu0 0.0
  %894 = vmatpush1.msra.mxu0 0.0
  %895 = vmatprep.subr.mxu0 0.0
  %896 = vmatpush1.msra.mxu0 0.0
  %897 = vmatprep.subr.mxu0 %v857
  %898 = vmatpush1.msra.mxu0 %v855
  %899 = vmatprep.subr.mxu0 0.0
  %900 = vmatpush2.msra.mxu0 0.0
  %901 = vmatprep.subr.mxu0 0.0
  %902 = vmatpush2.msra.mxu0 0.0
  %903 = vmatprep.subr.mxu0 0.0
  %904 = vmatpush2.msra.mxu0 0.0
  %905 = vmatprep.subr.mxu0 0.0
  %906 = vmatpush2.msra.mxu0 0.0
  %907 = vmatprep.subr.mxu0 0.0
  %908 = vmatpush2.msra.mxu0 0.0
  %909 = vmatprep.subr.mxu0 0.0
  %910 = vmatpush2.msra.mxu0 0.0
  %911 = vmatprep.subr.mxu0 0.0
  %912 = vmatpush2.msra.mxu0 0.0
  %913 = vmatprep.subr.mxu0 0.0
  %914 = vmatpush2.msra.mxu0 0.0
  %915 = vmatprep.subr.mxu0 0.0
  %916 = vmatpush2.msra.mxu0 0.0
  %917 = vmatprep.subr.mxu0 0.0
  %918 = vmatpush2.msra.mxu0 0.0
  %919 = vmatprep.subr.mxu0 0.0
  %920 = vmatpush2.msra.mxu0 0.0
  %921 = vmatprep.subr.mxu0 0.0
  %922 = vmatpush2.msra.mxu0 0.0
  %923 = vmatprep.subr.mxu0 0.0
  %924 = vmatpush2.msra.mxu0 0.0
  %925 = vmatprep.subr.mxu0 0.0
  %926 = vmatpush2.msra.mxu0 0.0
  %927 = vmatprep.subr.mxu0 0.0
  %928 = vmatpush2.msra.mxu0 0.0
  %929 = vmatprep.subr.mxu0 0.0
  %930 = vmatpush2.msra.mxu0 0.0
  %931 = vmatprep.mubr.f32.mxu0 0.0
  %932 = vmatmul.mubr.f32.gmra.mxu0 %v853
  %v933 = vpop.f32.mrf.mxu0
  %v934 = vadd.f32 0.0, %v933
  %v935 = vpop.f32.mrf.mxu0
  %v936 = vadd.f32 0.0, %v935
  %937 = vdwg.mxu0
  %938 = vmatprep.subr.mxu0 0.0
  %939 = vmatpush1.msra.mxu0 0.0
  %940 = vmatprep.subr.mxu0 0.0
  %941 = vmatpush1.msra.mxu0 0.0
  %942 = vmatprep.subr.mxu0 0.0
  %943 = vmatpush1.msra.mxu0 0.0
  %944 = vmatprep.subr.mxu0 0.0
  %945 = vmatpush1.msra.mxu0 0.0
  %946 = vmatprep.subr.mxu0 0.0
  %947 = vmatpush1.msra.mxu0 0.0
  %948 = vmatprep.subr.mxu0 0.0
  %949 = vmatpush1.msra.mxu0 0.0
  %950 = vmatprep.subr.mxu0 0.0
  %951 = vmatpush1.msra.mxu0 0.0
  %952 = vmatprep.subr.mxu0 0.0
  %953 = vmatpush1.msra.mxu0 0.0
  %954 = vmatprep.subr.mxu0 0.0
  %955 = vmatpush1.msra.mxu0 0.0
  %956 = vmatprep.subr.mxu0 0.0
  %957 = vmatpush1.msra.mxu0 0.0
  %958 = vmatprep.subr.mxu0 0.0
  %959 = vmatpush1.msra.mxu0 0.0
  %960 = vmatprep.subr.mxu0 0.0
  %961 = vmatpush1.msra.mxu0 0.0
  %962 = vmatprep.subr.mxu0 0.0
  %963 = vmatpush1.msra.mxu0 0.0
  %964 = vmatprep.subr.mxu0 0.0
  %965 = vmatpush1.msra.mxu0 0.0
  %966 = vmatprep.subr.mxu0 0.0
  %967 = vmatpush1.msra.mxu0 0.0
  %968 = vmatprep.subr.mxu0 %v861
  %969 = vmatpush1.msra.mxu0 %v859
  %970 = vmatprep.subr.mxu0 0.0
  %971 = vmatpush2.msra.mxu0 0.0
  %972 = vmatprep.subr.mxu0 0.0
  %973 = vmatpush2.msra.mxu0 0.0
  %974 = vmatprep.subr.mxu0 0.0
  %975 = vmatpush2.msra.mxu0 0.0
  %976 = vmatprep.subr.mxu0 0.0
  %977 = vmatpush2.msra.mxu0 0.0
  %978 = vmatprep.subr.mxu0 0.0
  %979 = vmatpush2.msra.mxu0 0.0
  %980 = vmatprep.subr.mxu0 0.0
  %981 = vmatpush2.msra.mxu0 0.0
  %982 = vmatprep.subr.mxu0 0.0
  %983 = vmatpush2.msra.mxu0 0.0
  %984 = vmatprep.subr.mxu0 0.0
  %985 = vmatpush2.msra.mxu0 0.0
  %986 = vmatprep.subr.mxu0 0.0
  %987 = vmatpush2.msra.mxu0 0.0
  %988 = vmatprep.subr.mxu0 0.0
  %989 = vmatpush2.msra.mxu0 0.0
  %990 = vmatprep.subr.mxu0 0.0
  %991 = vmatpush2.msra.mxu0 0.0
  %992 = vmatprep.subr.mxu0 0.0
  %993 = vmatpush2.msra.mxu0 0.0
  %994 = vmatprep.subr.mxu0 0.0
  %995 = vmatpush2.msra.mxu0 0.0
  %996 = vmatprep.subr.mxu0 0.0
  %997 = vmatpush2.msra.mxu0 0.0
  %998 = vmatprep.subr.mxu0 0.0
  %999 = vmatpush2.msra.mxu0 0.0
  %1000 = vmatprep.subr.mxu0 0.0
  %1001 = vmatpush2.msra.mxu0 0.0
  %1002 = vmatprep.mubr.f32.mxu0 0.0
  %1003 = vmatmul.mubr.f32.gmra.mxu0 %v853
  %v1004 = vpop.f32.mrf.mxu0
  %v1005 = vadd.f32 0.0, %v1004
  %v1006 = vpop.f32.mrf.mxu0
  %v1007 = vadd.f32 0.0, %v1006
  %1008 = vdwg.mxu0
  %1009 = vmatprep.subr.mxu0 0.0
  %1010 = vmatpush1.msra.mxu0 0.0
  %1011 = vmatprep.subr.mxu0 0.0
  %1012 = vmatpush1.msra.mxu0 0.0
  %1013 = vmatprep.subr.mxu0 0.0
  %1014 = vmatpush1.msra.mxu0 0.0
  %1015 = vmatprep.subr.mxu0 0.0
  %1016 = vmatpush1.msra.mxu0 0.0
  %1017 = vmatprep.subr.mxu0 0.0
  %1018 = vmatpush1.msra.mxu0 0.0
  %1019 = vmatprep.subr.mxu0 0.0
  %1020 = vmatpush1.msra.mxu0 0.0
  %1021 = vmatprep.subr.mxu0 0.0
  %1022 = vmatpush1.msra.mxu0 0.0
  %1023 = vmatprep.subr.mxu0 0.0
  %1024 = vmatpush1.msra.mxu0 0.0
  %1025 = vmatprep.subr.mxu0 0.0
  %1026 = vmatpush1.msra.mxu0 0.0
  %1027 = vmatprep.subr.mxu0 0.0
  %1028 = vmatpush1.msra.mxu0 0.0
  %1029 = vmatprep.subr.mxu0 0.0
  %1030 = vmatpush1.msra.mxu0 0.0
  %1031 = vmatprep.subr.mxu0 0.0
  %1032 = vmatpush1.msra.mxu0 0.0
  %1033 = vmatprep.subr.mxu0 0.0
  %1034 = vmatpush1.msra.mxu0 0.0
  %1035 = vmatprep.subr.mxu0 0.0
  %1036 = vmatpush1.msra.mxu0 0.0
  %1037 = vmatprep.subr.mxu0 0.0
  %1038 = vmatpush1.msra.mxu0 0.0
  %1039 = vmatprep.subr.mxu0 %v865
  %1040 = vmatpush1.msra.mxu0 %v863
  %1041 = vmatprep.subr.mxu0 0.0
  %1042 = vmatpush2.msra.mxu0 0.0
  %1043 = vmatprep.subr.mxu0 0.0
  %1044 = vmatpush2.msra.mxu0 0.0
  %1045 = vmatprep.subr.mxu0 0.0
  %1046 = vmatpush2.msra.mxu0 0.0
  %1047 = vmatprep.subr.mxu0 0.0
  %1048 = vmatpush2.msra.mxu0 0.0
  %1049 = vmatprep.subr.mxu0 0.0
  %1050 = vmatpush2.msra.mxu0 0.0
  %1051 = vmatprep.subr.mxu0 0.0
  %1052 = vmatpush2.msra.mxu0 0.0
  %1053 = vmatprep.subr.mxu0 0.0
  %1054 = vmatpush2.msra.mxu0 0.0
  %1055 = vmatprep.subr.mxu0 0.0
  %1056 = vmatpush2.msra.mxu0 0.0
  %1057 = vmatprep.subr.mxu0 0.0
  %1058 = vmatpush2.msra.mxu0 0.0
  %1059 = vmatprep.subr.mxu0 0.0
  %1060 = vmatpush2.msra.mxu0 0.0
  %1061 = vmatprep.subr.mxu0 0.0
  %1062 = vmatpush2.msra.mxu0 0.0
  %1063 = vmatprep.subr.mxu0 0.0
  %1064 = vmatpush2.msra.mxu0 0.0
  %1065 = vmatprep.subr.mxu0 0.0
  %1066 = vmatpush2.msra.mxu0 0.0
  %1067 = vmatprep.subr.mxu0 0.0
  %1068 = vmatpush2.msra.mxu0 0.0
  %1069 = vmatprep.subr.mxu0 0.0
  %1070 = vmatpush2.msra.mxu0 0.0
  %1071 = vmatprep.subr.mxu0 0.0
  %1072 = vmatpush2.msra.mxu0 0.0
  %1073 = vmatprep.mubr.f32.mxu0 0.0
  %1074 = vmatmul.mubr.f32.gmra.mxu0 %v853
  %v1075 = vpop.f32.mrf.mxu0
  %v1076 = vadd.f32 0.0, %v1075
  %v1077 = vpop.f32.mrf.mxu0
  %v1078 = vadd.f32 0.0, %v1077
  %1079 = vdwg.mxu0
  %1081 = vset.pattern.permute.xlu0 4
  %1082 = vperm.xlu0 %1081, %v760
  %v1083 = vpop.permute.xlu0 %1082
  %v1085 = vmul.f32 %v719, %v1083
  %v1086 = vmul.f32 %v720, %v1083
  %v1087 = vmul.f32 %v721, %v1083
  %v1088 = vmul.f32 %v722, %v1083
  %v1089 = vmul.f32 %v723, %v1083
  %v1090 = vmul.f32 %v724, %v1083
  %1092 = vset.pattern.permute.xlu0 5
  %1093 = vperm.xlu0 %1092, %v766
  %v1094 = vpop.permute.xlu0 %1093
  %v1096 = vadd.f32 %v1085, %v1094
  %v1097 = vadd.f32 %v1086, %v1094
  %v1098 = vadd.f32 %v1087, %v1094
  %v1099 = vadd.f32 %v1088, %v1094
  %v1100 = vadd.f32 %v1089, %v1094
  %v1101 = vadd.f32 %v1090, %v1094
  %v1102 = vadd.f32 %v1096, %v934
  %v1103 = vadd.f32 %v1097, %v936
  %v1104 = vadd.f32 %v1098, %v1005
  %v1105 = vadd.f32 %v1099, %v1007
  %v1106 = vadd.f32 %v1100, %v1076
  %v1107 = vadd.f32 %v1101, %v1078
  %v1108 = vmul.f32 %v1102, %v71
  %v1109 = vmul.f32 %v1103, %v78
  %v1110 = vmul.f32 %v1104, %v85
  %v1111 = vmul.f32 %v1105, %v92
  %v1112 = vmul.f32 %v1106, %v99
  %v1113 = vmul.f32 %v1107, %v107
  %1114 = vst [vmem:[#allocation4] sm:$0xff] 0.0
  %vm1115 = vcmask 1047616
  %1116 = vst.msk [vmem:[#allocation4 + $0x30] sm:$0xff] %vm1115, 0.0
  %1117 = vst [vmem:[#allocation4 + $0x8] sm:$0xff] %v1108
  %1118 = vst [vmem:[#allocation4 + $0x10] sm:$0xff] %v1109
  %1119 = vst [vmem:[#allocation4 + $0x18] sm:$0xff] %v1110
  %1120 = vst [vmem:[#allocation4 + $0x20] sm:$0xff] %v1111
  %1121 = vst [vmem:[#allocation4 + $0x28] sm:$0xff] %v1112
  %1122 = vst.msk [vmem:[#allocation4 + $0x30] sm:$0xff] %vm735, %v1113
  %v1123 = vld [vmem:[#allocation4] sm:$0xff]
  %v1124 = vld [vmem:[#allocation4 + $0x8] sm:$0xff]
  %v1125 = vld [vmem:[#allocation4 + $0x10] sm:$0xff]
  %v1126 = vld [vmem:[#allocation4 + $0x18] sm:$0xff]
  %v1127 = vld [vmem:[#allocation4 + $0x20] sm:$0xff]
  %v1128 = vld [vmem:[#allocation4 + $0x28] sm:$0xff]
  %1135 = vrot.lane.b32.xlu0 %v1123, 19
  %v1136 = vpop.permute.xlu0 %1135
  %1137 = vrot.lane.b32.xlu0 %v1124, 19
  %v1138 = vpop.permute.xlu0 %1137
  %1139 = vrot.lane.b32.xlu0 %v1125, 19
  %v1140 = vpop.permute.xlu0 %1139
  %1141 = vrot.lane.b32.xlu0 %v1126, 19
  %v1142 = vpop.permute.xlu0 %1141
  %1143 = vrot.lane.b32.xlu0 %v1127, 19
  %v1144 = vpop.permute.xlu0 %1143
  %1145 = vrot.lane.b32.xlu0 %v1128, 19
  %v1146 = vpop.permute.xlu0 %1145
  %v1147 = vsel %vm130, %v1136, %v1138
  %v1148 = vsel %vm130, %v1138, %v1140
  %v1149 = vsel %vm130, %v1140, %v1142
  %v1150 = vsel %vm130, %v1142, %v1144
  %v1151 = vsel %vm130, %v1144, %v1146
  %1158 = vst [vmem:[#allocation3] sm:$0xff] %v1147
  %1159 = vst [vmem:[#allocation3 + $0x8] sm:$0xff] %v1148
  %1160 = vst [vmem:[#allocation3 + $0x10] sm:$0xff] %v1149
  %1161 = vst [vmem:[#allocation3 + $0x18] sm:$0xff] %v1150
  %1162 = vst [vmem:[#allocation3 + $0x20] sm:$0xff] %v1151
  %1163 = vst.msk [vmem:[#allocation3 + $0x28] sm:$0xff] %vm735, %v1146
  %v1164 = vld [vmem:[#allocation4] sm:$0xff]
  %v1165 = vld [vmem:[#allocation4 + $0x8] sm:$0xff]
  %v1166 = vld [vmem:[#allocation4 + $0x10] sm:$0xff]
  %v1167 = vld [vmem:[#allocation4 + $0x18] sm:$0xff]
  %v1168 = vld [vmem:[#allocation4 + $0x20] sm:$0xff]
  %v1169 = vld [vmem:[#allocation4 + $0x28] sm:$0xff]
  %1176 = vrot.lane.b32.xlu0 %v1164, 18
  %v1177 = vpop.permute.xlu0 %1176
  %1178 = vrot.lane.b32.xlu0 %v1165, 18
  %v1179 = vpop.permute.xlu0 %1178
  %1180 = vrot.lane.b32.xlu0 %v1166, 18
  %v1181 = vpop.permute.xlu0 %1180
  %1182 = vrot.lane.b32.xlu0 %v1167, 18
  %v1183 = vpop.permute.xlu0 %1182
  %1184 = vrot.lane.b32.xlu0 %v1168, 18
  %v1185 = vpop.permute.xlu0 %1184
  %1186 = vrot.lane.b32.xlu0 %v1169, 18
  %v1187 = vpop.permute.xlu0 %1186
  %v1188 = vsel %vm170, %v1177, %v1179
  %v1189 = vsel %vm170, %v1179, %v1181
  %v1190 = vsel %vm170, %v1181, %v1183
  %v1191 = vsel %vm170, %v1183, %v1185
  %v1192 = vsel %vm170, %v1185, %v1187
  %1199 = vst [vmem:[#allocation3 + $0x30] sm:$0xff] %v1188
  %1200 = vst [vmem:[#allocation3 + $0x38] sm:$0xff] %v1189
  %1201 = vst [vmem:[#allocation3 + $0x40] sm:$0xff] %v1190
  %1202 = vst [vmem:[#allocation3 + $0x48] sm:$0xff] %v1191
  %1203 = vst [vmem:[#allocation3 + $0x50] sm:$0xff] %v1192
  %1204 = vst.msk [vmem:[#allocation3 + $0x58] sm:$0xff] %vm735, %v1187
  %v1205 = vld [vmem:[#allocation4] sm:$0xff]
  %v1206 = vld [vmem:[#allocation4 + $0x8] sm:$0xff]
  %v1207 = vld [vmem:[#allocation4 + $0x10] sm:$0xff]
  %v1208 = vld [vmem:[#allocation4 + $0x18] sm:$0xff]
  %v1209 = vld [vmem:[#allocation4 + $0x20] sm:$0xff]
  %v1210 = vld [vmem:[#allocation4 + $0x28] sm:$0xff]
  %1217 = vrot.lane.b32.xlu0 %v1205, 17
  %v1218 = vpop.permute.xlu0 %1217
  %1219 = vrot.lane.b32.xlu0 %v1206, 17
  %v1220 = vpop.permute.xlu0 %1219
  %1221 = vrot.lane.b32.xlu0 %v1207, 17
  %v1222 = vpop.permute.xlu0 %1221
  %1223 = vrot.lane.b32.xlu0 %v1208, 17
  %v1224 = vpop.permute.xlu0 %1223
  %1225 = vrot.lane.b32.xlu0 %v1209, 17
  %v1226 = vpop.permute.xlu0 %1225
  %1227 = vrot.lane.b32.xlu0 %v1210, 17
  %v1228 = vpop.permute.xlu0 %1227
  %v1229 = vsel %vm210, %v1218, %v1220
  %v1230 = vsel %vm210, %v1220, %v1222
  %v1231 = vsel %vm210, %v1222, %v1224
  %v1232 = vsel %vm210, %v1224, %v1226
  %v1233 = vsel %vm210, %v1226, %v1228
  %1240 = vst [vmem:[#allocation3 + $0x60] sm:$0xff] %v1229
  %1241 = vst [vmem:[#allocation3 + $0x68] sm:$0xff] %v1230
  %1242 = vst [vmem:[#allocation3 + $0x70] sm:$0xff] %v1231
  %1243 = vst [vmem:[#allocation3 + $0x78] sm:$0xff] %v1232
  %1244 = vst [vmem:[#allocation3 + $0x80] sm:$0xff] %v1233
  %1245 = vst.msk [vmem:[#allocation3 + $0x88] sm:$0xff] %vm735, %v1228
  %v1246 = vld [vmem:[#allocation4] sm:$0xff]
  %v1247 = vld [vmem:[#allocation4 + $0x8] sm:$0xff]
  %v1248 = vld [vmem:[#allocation4 + $0x10] sm:$0xff]
  %v1249 = vld [vmem:[#allocation4 + $0x18] sm:$0xff]
  %v1250 = vld [vmem:[#allocation4 + $0x20] sm:$0xff]
  %v1251 = vld [vmem:[#allocation4 + $0x28] sm:$0xff]
  %v1252 = vld [vmem:[#allocation4 + $0x30] sm:$0xff]
  %1260 = vrot.lane.b32.xlu0 %v1246, 1
  %v1261 = vpop.permute.xlu0 %1260
  %1262 = vrot.lane.b32.xlu0 %v1247, 1
  %v1263 = vpop.permute.xlu0 %1262
  %1264 = vrot.lane.b32.xlu0 %v1248, 1
  %v1265 = vpop.permute.xlu0 %1264
  %1266 = vrot.lane.b32.xlu0 %v1249, 1
  %v1267 = vpop.permute.xlu0 %1266
  %1268 = vrot.lane.b32.xlu0 %v1250, 1
  %v1269 = vpop.permute.xlu0 %1268
  %1270 = vrot.lane.b32.xlu0 %v1251, 1
  %v1271 = vpop.permute.xlu0 %1270
  %1272 = vrot.lane.b32.xlu0 %v1252, 1
  %v1273 = vpop.permute.xlu0 %1272
  %v1274 = vsel %vm254, %v1261, %v1263
  %v1275 = vsel %vm254, %v1263, %v1265
  %v1276 = vsel %vm254, %v1265, %v1267
  %v1277 = vsel %vm254, %v1267, %v1269
  %v1278 = vsel %vm254, %v1269, %v1271
  %v1279 = vsel %vm254, %v1271, %v1273
  %1286 = vst [vmem:[#allocation3 + $0x90] sm:$0xff] %v1274
  %1287 = vst [vmem:[#allocation3 + $0x98] sm:$0xff] %v1275
  %1288 = vst [vmem:[#allocation3 + $0xa0] sm:$0xff] %v1276
  %1289 = vst [vmem:[#allocation3 + $0xa8] sm:$0xff] %v1277
  %1290 = vst [vmem:[#allocation3 + $0xb0] sm:$0xff] %v1278
  %1291 = vst.msk [vmem:[#allocation3 + $0xb8] sm:$0xff] %vm735, %v1279
  %v1292 = vld [vmem:[#allocation4 + $0x8] sm:$0xff]
  %v1293 = vld [vmem:[#allocation4 + $0x10] sm:$0xff]
  %v1294 = vld [vmem:[#allocation4 + $0x18] sm:$0xff]
  %v1295 = vld [vmem:[#allocation4 + $0x20] sm:$0xff]
  %v1296 = vld [vmem:[#allocation4 + $0x28] sm:$0xff]
  %v1297 = vld [vmem:[#allocation4 + $0x30] sm:$0xff]
  %1298 = vst [vmem:[#allocation3 + $0xc0] sm:$0xff] %v1292
  %1299 = vst [vmem:[#allocation3 + $0xc8] sm:$0xff] %v1293
  %1300 = vst [vmem:[#allocation3 + $0xd0] sm:$0xff] %v1294
  %1301 = vst [vmem:[#allocation3 + $0xd8] sm:$0xff] %v1295
  %1302 = vst [vmem:[#allocation3 + $0xe0] sm:$0xff] %v1296
  %1303 = vst.msk [vmem:[#allocation3 + $0xe8] sm:$0xff] %vm735, %v1297
  %v1304 = vld [vmem:[#allocation4 + $0x8] sm:$0xff]
  %v1305 = vld [vmem:[#allocation4 + $0x10] sm:$0xff]
  %v1306 = vld [vmem:[#allocation4 + $0x18] sm:$0xff]
  %v1307 = vld [vmem:[#allocation4 + $0x20] sm:$0xff]
  %v1308 = vld [vmem:[#allocation4 + $0x28] sm:$0xff]
  %v1309 = vld [vmem:[#allocation4 + $0x30] sm:$0xff]
  %1316 = vrot.lane.b32.xlu0 %v1304, 127
  %v1317 = vpop.permute.xlu0 %1316
  %1318 = vrot.lane.b32.xlu0 %v1305, 127
  %v1319 = vpop.permute.xlu0 %1318
  %1320 = vrot.lane.b32.xlu0 %v1306, 127
  %v1321 = vpop.permute.xlu0 %1320
  %1322 = vrot.lane.b32.xlu0 %v1307, 127
  %v1323 = vpop.permute.xlu0 %1322
  %1324 = vrot.lane.b32.xlu0 %v1308, 127
  %v1325 = vpop.permute.xlu0 %1324
  %1326 = vrot.lane.b32.xlu0 %v1309, 127
  %v1327 = vpop.permute.xlu0 %1326
  %v1328 = vsel %vm312, %v1317, %v1319
  %v1329 = vsel %vm312, %v1319, %v1321
  %v1330 = vsel %vm312, %v1321, %v1323
  %v1331 = vsel %vm312, %v1323, %v1325
  %v1332 = vsel %vm312, %v1325, %v1327
  %1339 = vst [vmem:[#allocation3 + $0xf0] sm:$0xff] %v1328
  %1340 = vst [vmem:[#allocation3 + $0xf8] sm:$0xff] %v1329
  %1341 = vst [vmem:[#allocation3 + $0x100] sm:$0xff] %v1330
  %1342 = vst [vmem:[#allocation3 + $0x108] sm:$0xff] %v1331
  %1343 = vst [vmem:[#allocation3 + $0x110] sm:$0xff] %v1332
  %1344 = vst.msk [vmem:[#allocation3 + $0x118] sm:$0xff] %vm735, %v1327
  %v1345 = vld [vmem:[#allocation4 + $0x8] sm:$0xff]
  %v1346 = vld [vmem:[#allocation4 + $0x10] sm:$0xff]
  %v1347 = vld [vmem:[#allocation4 + $0x18] sm:$0xff]
  %v1348 = vld [vmem:[#allocation4 + $0x20] sm:$0xff]
  %v1349 = vld [vmem:[#allocation4 + $0x28] sm:$0xff]
  %v1350 = vld [vmem:[#allocation4 + $0x30] sm:$0xff]
  %1357 = vrot.lane.b32.xlu0 %v1345, 111
  %v1358 = vpop.permute.xlu0 %1357
  %1359 = vrot.lane.b32.xlu0 %v1346, 111
  %v1360 = vpop.permute.xlu0 %1359
  %1361 = vrot.lane.b32.xlu0 %v1347, 111
  %v1362 = vpop.permute.xlu0 %1361
  %1363 = vrot.lane.b32.xlu0 %v1348, 111
  %v1364 = vpop.permute.xlu0 %1363
  %1365 = vrot.lane.b32.xlu0 %v1349, 111
  %v1366 = vpop.permute.xlu0 %1365
  %1367 = vrot.lane.b32.xlu0 %v1350, 111
  %v1368 = vpop.permute.xlu0 %1367
  %v1369 = vsel %vm351, %v1358, %v1360
  %v1370 = vsel %vm351, %v1360, %v1362
  %v1371 = vsel %vm351, %v1362, %v1364
  %v1372 = vsel %vm351, %v1364, %v1366
  %v1373 = vsel %vm351, %v1366, %v1368
  %1380 = vst [vmem:[#allocation3 + $0x120] sm:$0xff] %v1369
  %1381 = vst [vmem:[#allocation3 + $0x128] sm:$0xff] %v1370
  %1382 = vst [vmem:[#allocation3 + $0x130] sm:$0xff] %v1371
  %1383 = vst [vmem:[#allocation3 + $0x138] sm:$0xff] %v1372
  %1384 = vst [vmem:[#allocation3 + $0x140] sm:$0xff] %v1373
  %1385 = vst.msk [vmem:[#allocation3 + $0x148] sm:$0xff] %vm735, %v1368
  %v1386 = vld [vmem:[#allocation4 + $0x8] sm:$0xff]
  %v1387 = vld [vmem:[#allocation4 + $0x10] sm:$0xff]
  %v1388 = vld [vmem:[#allocation4 + $0x18] sm:$0xff]
  %v1389 = vld [vmem:[#allocation4 + $0x20] sm:$0xff]
  %v1390 = vld [vmem:[#allocation4 + $0x28] sm:$0xff]
  %v1391 = vld [vmem:[#allocation4 + $0x30] sm:$0xff]
  %1398 = vrot.lane.b32.xlu0 %v1386, 110
  %v1399 = vpop.permute.xlu0 %1398
  %1400 = vrot.lane.b32.xlu0 %v1387, 110
  %v1401 = vpop.permute.xlu0 %1400
  %1402 = vrot.lane.b32.xlu0 %v1388, 110
  %v1403 = vpop.permute.xlu0 %1402
  %1404 = vrot.lane.b32.xlu0 %v1389, 110
  %v1405 = vpop.permute.xlu0 %1404
  %1406 = vrot.lane.b32.xlu0 %v1390, 110
  %v1407 = vpop.permute.xlu0 %1406
  %1408 = vrot.lane.b32.xlu0 %v1391, 110
  %v1409 = vpop.permute.xlu0 %1408
  %v1410 = vsel %vm390, %v1399, %v1401
  %v1411 = vsel %vm390, %v1401, %v1403
  %v1412 = vsel %vm390, %v1403, %v1405
  %v1413 = vsel %vm390, %v1405, %v1407
  %v1414 = vsel %vm390, %v1407, %v1409
  %1421 = vst [vmem:[#allocation3 + $0x150] sm:$0xff] %v1410
  %1422 = vst [vmem:[#allocation3 + $0x158] sm:$0xff] %v1411
  %1423 = vst [vmem:[#allocation3 + $0x160] sm:$0xff] %v1412
  %1424 = vst [vmem:[#allocation3 + $0x168] sm:$0xff] %v1413
  %1425 = vst [vmem:[#allocation3 + $0x170] sm:$0xff] %v1414
  %1426 = vst.msk [vmem:[#allocation3 + $0x178] sm:$0xff] %vm735, %v1409
  %v1427 = vld [vmem:[#allocation4 + $0x8] sm:$0xff]
  %v1428 = vld [vmem:[#allocation4 + $0x10] sm:$0xff]
  %v1429 = vld [vmem:[#allocation4 + $0x18] sm:$0xff]
  %v1430 = vld [vmem:[#allocation4 + $0x20] sm:$0xff]
  %v1431 = vld [vmem:[#allocation4 + $0x28] sm:$0xff]
  %v1432 = vld [vmem:[#allocation4 + $0x30] sm:$0xff]
  %1439 = vrot.lane.b32.xlu0 %v1427, 109
  %v1440 = vpop.permute.xlu0 %1439
  %1441 = vrot.lane.b32.xlu0 %v1428, 109
  %v1442 = vpop.permute.xlu0 %1441
  %1443 = vrot.lane.b32.xlu0 %v1429, 109
  %v1444 = vpop.permute.xlu0 %1443
  %1445 = vrot.lane.b32.xlu0 %v1430, 109
  %v1446 = vpop.permute.xlu0 %1445
  %1447 = vrot.lane.b32.xlu0 %v1431, 109
  %v1448 = vpop.permute.xlu0 %1447
  %1449 = vrot.lane.b32.xlu0 %v1432, 109
  %v1450 = vpop.permute.xlu0 %1449
  %v1451 = vsel %vm429, %v1440, %v1442
  %v1452 = vsel %vm429, %v1442, %v1444
  %v1453 = vsel %vm429, %v1444, %v1446
  %v1454 = vsel %vm429, %v1446, %v1448
  %v1455 = vsel %vm429, %v1448, %v1450
  %1462 = vst [vmem:[#allocation3 + $0x180] sm:$0xff] %v1451
  %1463 = vst [vmem:[#allocation3 + $0x188] sm:$0xff] %v1452
  %1464 = vst [vmem:[#allocation3 + $0x190] sm:$0xff] %v1453
  %1465 = vst [vmem:[#allocation3 + $0x198] sm:$0xff] %v1454
  %1466 = vst [vmem:[#allocation3 + $0x1a0] sm:$0xff] %v1455
  %1467 = vst.msk [vmem:[#allocation3 + $0x1a8] sm:$0xff] %vm735, %v1450
  %v1468 = vld [vmem:[%s4] sm:$0xff]
  %v1469 = vld [vmem:[#allocation3] sm:$0xff]
  %v1470 = vld [vmem:[#allocation3 + $0x8] sm:$0xff]
  %v1471 = vld [vmem:[#allocation3 + $0x10] sm:$0xff]
  %v1472 = vld [vmem:[#allocation3 + $0x18] sm:$0xff]
  %v1473 = vld [vmem:[#allocation3 + $0x20] sm:$0xff]
  %v1474 = vld [vmem:[#allocation3 + $0x28] sm:$0xff]
  %v1475 = vld [vmem:[#allocation3 + $0x30] sm:$0xff]
  %v1476 = vld [vmem:[#allocation3 + $0x38] sm:$0xff]
  %v1477 = vld [vmem:[#allocation3 + $0x40] sm:$0xff]
  %v1478 = vld [vmem:[#allocation3 + $0x48] sm:$0xff]
  %v1479 = vld [vmem:[#allocation3 + $0x50] sm:$0xff]
  %v1480 = vld [vmem:[#allocation3 + $0x58] sm:$0xff]
  %v1481 = vld [vmem:[#allocation3 + $0x60] sm:$0xff]
  %v1482 = vld [vmem:[#allocation3 + $0x68] sm:$0xff]
  %v1483 = vld [vmem:[#allocation3 + $0x70] sm:$0xff]
  %v1484 = vld [vmem:[#allocation3 + $0x78] sm:$0xff]
  %v1485 = vld [vmem:[#allocation3 + $0x80] sm:$0xff]
  %v1486 = vld [vmem:[#allocation3 + $0x88] sm:$0xff]
  %v1487 = vld [vmem:[#allocation3 + $0x90] sm:$0xff]
  %v1488 = vld [vmem:[#allocation3 + $0x98] sm:$0xff]
  %v1489 = vld [vmem:[#allocation3 + $0xa0] sm:$0xff]
  %v1490 = vld [vmem:[#allocation3 + $0xa8] sm:$0xff]
  %v1491 = vld [vmem:[#allocation3 + $0xb0] sm:$0xff]
  %v1492 = vld [vmem:[#allocation3 + $0xb8] sm:$0xff]
  %v1493 = vld [vmem:[#allocation3 + $0xc0] sm:$0xff]
  %v1494 = vld [vmem:[#allocation3 + $0xc8] sm:$0xff]
  %v1495 = vld [vmem:[#allocation3 + $0xd0] sm:$0xff]
  %v1496 = vld [vmem:[#allocation3 + $0xd8] sm:$0xff]
  %v1497 = vld [vmem:[#allocation3 + $0xe0] sm:$0xff]
  %v1498 = vld [vmem:[#allocation3 + $0xe8] sm:$0xff]
  %v1499 = vld [vmem:[#allocation3 + $0xf0] sm:$0xff]
  %v1500 = vld [vmem:[#allocation3 + $0xf8] sm:$0xff]
  %v1501 = vld [vmem:[#allocation3 + $0x100] sm:$0xff]
  %v1502 = vld [vmem:[#allocation3 + $0x108] sm:$0xff]
  %v1503 = vld [vmem:[#allocation3 + $0x110] sm:$0xff]
  %v1504 = vld [vmem:[#allocation3 + $0x118] sm:$0xff]
  %v1505 = vld [vmem:[#allocation3 + $0x120] sm:$0xff]
  %v1506 = vld [vmem:[#allocation3 + $0x128] sm:$0xff]
  %v1507 = vld [vmem:[#allocation3 + $0x130] sm:$0xff]
  %v1508 = vld [vmem:[#allocation3 + $0x138] sm:$0xff]
  %v1509 = vld [vmem:[#allocation3 + $0x140] sm:$0xff]
  %v1510 = vld [vmem:[#allocation3 + $0x148] sm:$0xff]
  %v1511 = vld [vmem:[#allocation3 + $0x150] sm:$0xff]
  %v1512 = vld [vmem:[#allocation3 + $0x158] sm:$0xff]
  %v1513 = vld [vmem:[#allocation3 + $0x160] sm:$0xff]
  %v1514 = vld [vmem:[#allocation3 + $0x168] sm:$0xff]
  %v1515 = vld [vmem:[#allocation3 + $0x170] sm:$0xff]
  %v1516 = vld [vmem:[#allocation3 + $0x178] sm:$0xff]
  %v1517 = vld [vmem:[#allocation3 + $0x180] sm:$0xff]
  %v1518 = vld [vmem:[#allocation3 + $0x188] sm:$0xff]
  %v1519 = vld [vmem:[#allocation3 + $0x190] sm:$0xff]
  %v1520 = vld [vmem:[#allocation3 + $0x198] sm:$0xff]
  %v1521 = vld [vmem:[#allocation3 + $0x1a0] sm:$0xff]
  %v1522 = vld [vmem:[#allocation3 + $0x1a8] sm:$0xff]
  %1523 = vset.pattern.permute.xlu0 2
  %1524 = vperm.xlu0 %1523, %v108
  %v1525 = vpop.permute.xlu0 %1524
  %vm1527 = vcmask 588800
  %v1529 = vsel %vm1527, %v1468, 0
  %1531 = vmatprep.subr.mxu0 0.0
  %1532 = vmatpush1.msra.mxu0 0.0
  %1533 = vmatprep.subr.mxu0 0.0
  %1534 = vmatpush1.msra.mxu0 0.0
  %1535 = vmatprep.subr.mxu0 0.0
  %1536 = vmatpush1.msra.mxu0 0.0
  %1537 = vmatprep.subr.mxu0 0.0
  %1538 = vmatpush1.msra.mxu0 0.0
  %1539 = vmatprep.subr.mxu0 0.0
  %1540 = vmatpush1.msra.mxu0 0.0
  %1541 = vmatprep.subr.mxu0 0.0
  %1542 = vmatpush1.msra.mxu0 0.0
  %1543 = vmatprep.subr.mxu0 0.0
  %1544 = vmatpush1.msra.mxu0 0.0
  %1545 = vmatprep.subr.mxu0 %v1518
  %1546 = vmatpush1.msra.mxu0 %v1517
  %1547 = vmatprep.subr.mxu0 %v1512
  %1548 = vmatpush1.msra.mxu0 %v1511
  %1549 = vmatprep.subr.mxu0 %v1506
  %1550 = vmatpush1.msra.mxu0 %v1505
  %1551 = vmatprep.subr.mxu0 %v1500
  %1552 = vmatpush1.msra.mxu0 %v1499
  %1553 = vmatprep.subr.mxu0 %v1494
  %1554 = vmatpush1.msra.mxu0 %v1493
  %1555 = vmatprep.subr.mxu0 %v1488
  %1556 = vmatpush1.msra.mxu0 %v1487
  %1557 = vmatprep.subr.mxu0 %v1482
  %1558 = vmatpush1.msra.mxu0 %v1481
  %1559 = vmatprep.subr.mxu0 %v1476
  %1560 = vmatpush1.msra.mxu0 %v1475
  %1561 = vmatprep.subr.mxu0 %v1470
  %1562 = vmatpush1.msra.mxu0 %v1469
  %1563 = vmatprep.subr.mxu0 0.0
  %1564 = vmatpush2.msra.mxu0 0.0
  %1565 = vmatprep.subr.mxu0 0.0
  %1566 = vmatpush2.msra.mxu0 0.0
  %1567 = vmatprep.subr.mxu0 0.0
  %1568 = vmatpush2.msra.mxu0 0.0
  %1569 = vmatprep.subr.mxu0 0.0
  %1570 = vmatpush2.msra.mxu0 0.0
  %1571 = vmatprep.subr.mxu0 0.0
  %1572 = vmatpush2.msra.mxu0 0.0
  %1573 = vmatprep.subr.mxu0 0.0
  %1574 = vmatpush2.msra.mxu0 0.0
  %1575 = vmatprep.subr.mxu0 0.0
  %1576 = vmatpush2.msra.mxu0 0.0
  %1577 = vmatprep.subr.mxu0 0.0
  %1578 = vmatpush2.msra.mxu0 0.0
  %1579 = vmatprep.subr.mxu0 0.0
  %1580 = vmatpush2.msra.mxu0 0.0
  %1581 = vmatprep.subr.mxu0 0.0
  %1582 = vmatpush2.msra.mxu0 0.0
  %1583 = vmatprep.subr.mxu0 0.0
  %1584 = vmatpush2.msra.mxu0 0.0
  %1585 = vmatprep.subr.mxu0 0.0
  %1586 = vmatpush2.msra.mxu0 0.0
  %1587 = vmatprep.subr.mxu0 0.0
  %1588 = vmatpush2.msra.mxu0 0.0
  %1589 = vmatprep.subr.mxu0 0.0
  %1590 = vmatpush2.msra.mxu0 0.0
  %1591 = vmatprep.subr.mxu0 0.0
  %1592 = vmatpush2.msra.mxu0 0.0
  %1593 = vmatprep.subr.mxu0 0.0
  %1594 = vmatpush2.msra.mxu0 0.0
  %1595 = vmatprep.mubr.f32.mxu0 0.0
  %1596 = vmatmul.mubr.f32.gmra.mxu0 %v1529
  %v1597 = vpop.f32.mrf.mxu0
  %v1598 = vadd.f32 %v1525, %v1597
  %v1599 = vpop.f32.mrf.mxu0
  %v1600 = vadd.f32 %v1525, %v1599
  %1601 = vdwg.mxu0
  %1602 = vmatprep.subr.mxu0 0.0
  %1603 = vmatpush1.msra.mxu0 0.0
  %1604 = vmatprep.subr.mxu0 0.0
  %1605 = vmatpush1.msra.mxu0 0.0
  %1606 = vmatprep.subr.mxu0 0.0
  %1607 = vmatpush1.msra.mxu0 0.0
  %1608 = vmatprep.subr.mxu0 0.0
  %1609 = vmatpush1.msra.mxu0 0.0
  %1610 = vmatprep.subr.mxu0 0.0
  %1611 = vmatpush1.msra.mxu0 0.0
  %1612 = vmatprep.subr.mxu0 0.0
  %1613 = vmatpush1.msra.mxu0 0.0
  %1614 = vmatprep.subr.mxu0 0.0
  %1615 = vmatpush1.msra.mxu0 0.0
  %1616 = vmatprep.subr.mxu0 %v1520
  %1617 = vmatpush1.msra.mxu0 %v1519
  %1618 = vmatprep.subr.mxu0 %v1514
  %1619 = vmatpush1.msra.mxu0 %v1513
  %1620 = vmatprep.subr.mxu0 %v1508
  %1621 = vmatpush1.msra.mxu0 %v1507
  %1622 = vmatprep.subr.mxu0 %v1502
  %1623 = vmatpush1.msra.mxu0 %v1501
  %1624 = vmatprep.subr.mxu0 %v1496
  %1625 = vmatpush1.msra.mxu0 %v1495
  %1626 = vmatprep.subr.mxu0 %v1490
  %1627 = vmatpush1.msra.mxu0 %v1489
  %1628 = vmatprep.subr.mxu0 %v1484
  %1629 = vmatpush1.msra.mxu0 %v1483
  %1630 = vmatprep.subr.mxu0 %v1478
  %1631 = vmatpush1.msra.mxu0 %v1477
  %1632 = vmatprep.subr.mxu0 %v1472
  %1633 = vmatpush1.msra.mxu0 %v1471
  %1634 = vmatprep.subr.mxu0 0.0
  %1635 = vmatpush2.msra.mxu0 0.0
  %1636 = vmatprep.subr.mxu0 0.0
  %1637 = vmatpush2.msra.mxu0 0.0
  %1638 = vmatprep.subr.mxu0 0.0
  %1639 = vmatpush2.msra.mxu0 0.0
  %1640 = vmatprep.subr.mxu0 0.0
  %1641 = vmatpush2.msra.mxu0 0.0
  %1642 = vmatprep.subr.mxu0 0.0
  %1643 = vmatpush2.msra.mxu0 0.0
  %1644 = vmatprep.subr.mxu0 0.0
  %1645 = vmatpush2.msra.mxu0 0.0
  %1646 = vmatprep.subr.mxu0 0.0
  %1647 = vmatpush2.msra.mxu0 0.0
  %1648 = vmatprep.subr.mxu0 0.0
  %1649 = vmatpush2.msra.mxu0 0.0
  %1650 = vmatprep.subr.mxu0 0.0
  %1651 = vmatpush2.msra.mxu0 0.0
  %1652 = vmatprep.subr.mxu0 0.0
  %1653 = vmatpush2.msra.mxu0 0.0
  %1654 = vmatprep.subr.mxu0 0.0
  %1655 = vmatpush2.msra.mxu0 0.0
  %1656 = vmatprep.subr.mxu0 0.0
  %1657 = vmatpush2.msra.mxu0 0.0
  %1658 = vmatprep.subr.mxu0 0.0
  %1659 = vmatpush2.msra.mxu0 0.0
  %1660 = vmatprep.subr.mxu0 0.0
  %1661 = vmatpush2.msra.mxu0 0.0
  %1662 = vmatprep.subr.mxu0 0.0
  %1663 = vmatpush2.msra.mxu0 0.0
  %1664 = vmatprep.subr.mxu0 0.0
  %1665 = vmatpush2.msra.mxu0 0.0
  %1666 = vmatprep.mubr.f32.mxu0 0.0
  %1667 = vmatmul.mubr.f32.gmra.mxu0 %v1529
  %v1668 = vpop.f32.mrf.mxu0
  %v1669 = vadd.f32 %v1525, %v1668
  %v1670 = vpop.f32.mrf.mxu0
  %v1671 = vadd.f32 %v1525, %v1670
  %1672 = vdwg.mxu0
  %1673 = vmatprep.subr.mxu0 0.0
  %1674 = vmatpush1.msra.mxu0 0.0
  %1675 = vmatprep.subr.mxu0 0.0
  %1676 = vmatpush1.msra.mxu0 0.0
  %1677 = vmatprep.subr.mxu0 0.0
  %1678 = vmatpush1.msra.mxu0 0.0
  %1679 = vmatprep.subr.mxu0 0.0
  %1680 = vmatpush1.msra.mxu0 0.0
  %1681 = vmatprep.subr.mxu0 0.0
  %1682 = vmatpush1.msra.mxu0 0.0
  %1683 = vmatprep.subr.mxu0 0.0
  %1684 = vmatpush1.msra.mxu0 0.0
  %1685 = vmatprep.subr.mxu0 0.0
  %1686 = vmatpush1.msra.mxu0 0.0
  %1687 = vmatprep.subr.mxu0 %v1522
  %1688 = vmatpush1.msra.mxu0 %v1521
  %1689 = vmatprep.subr.mxu0 %v1516
  %1690 = vmatpush1.msra.mxu0 %v1515
  %1691 = vmatprep.subr.mxu0 %v1510
  %1692 = vmatpush1.msra.mxu0 %v1509
  %1693 = vmatprep.subr.mxu0 %v1504
  %1694 = vmatpush1.msra.mxu0 %v1503
  %1695 = vmatprep.subr.mxu0 %v1498
  %1696 = vmatpush1.msra.mxu0 %v1497
  %1697 = vmatprep.subr.mxu0 %v1492
  %1698 = vmatpush1.msra.mxu0 %v1491
  %1699 = vmatprep.subr.mxu0 %v1486
  %1700 = vmatpush1.msra.mxu0 %v1485
  %1701 = vmatprep.subr.mxu0 %v1480
  %1702 = vmatpush1.msra.mxu0 %v1479
  %1703 = vmatprep.subr.mxu0 %v1474
  %1704 = vmatpush1.msra.mxu0 %v1473
  %1705 = vmatprep.subr.mxu0 0.0
  %1706 = vmatpush2.msra.mxu0 0.0
  %1707 = vmatprep.subr.mxu0 0.0
  %1708 = vmatpush2.msra.mxu0 0.0
  %1709 = vmatprep.subr.mxu0 0.0
  %1710 = vmatpush2.msra.mxu0 0.0
  %1711 = vmatprep.subr.mxu0 0.0
  %1712 = vmatpush2.msra.mxu0 0.0
  %1713 = vmatprep.subr.mxu0 0.0
  %1714 = vmatpush2.msra.mxu0 0.0
  %1715 = vmatprep.subr.mxu0 0.0
  %1716 = vmatpush2.msra.mxu0 0.0
  %1717 = vmatprep.subr.mxu0 0.0
  %1718 = vmatpush2.msra.mxu0 0.0
  %1719 = vmatprep.subr.mxu0 0.0
  %1720 = vmatpush2.msra.mxu0 0.0
  %1721 = vmatprep.subr.mxu0 0.0
  %1722 = vmatpush2.msra.mxu0 0.0
  %1723 = vmatprep.subr.mxu0 0.0
  %1724 = vmatpush2.msra.mxu0 0.0
  %1725 = vmatprep.subr.mxu0 0.0
  %1726 = vmatpush2.msra.mxu0 0.0
  %1727 = vmatprep.subr.mxu0 0.0
  %1728 = vmatpush2.msra.mxu0 0.0
  %1729 = vmatprep.subr.mxu0 0.0
  %1730 = vmatpush2.msra.mxu0 0.0
  %1731 = vmatprep.subr.mxu0 0.0
  %1732 = vmatpush2.msra.mxu0 0.0
  %1733 = vmatprep.subr.mxu0 0.0
  %1734 = vmatpush2.msra.mxu0 0.0
  %1735 = vmatprep.subr.mxu0 0.0
  %1736 = vmatpush2.msra.mxu0 0.0
  %1737 = vmatprep.mubr.f32.mxu0 0.0
  %1738 = vmatmul.mubr.f32.gmra.mxu0 %v1529
  %v1739 = vpop.f32.mrf.mxu0
  %v1740 = vadd.f32 %v1525, %v1739
  %v1741 = vpop.f32.mrf.mxu0
  %v1742 = vadd.f32 %v1525, %v1741
  %1743 = vdwg.mxu0
  %v1744 = vmax.f32 %v1598, 0.0
  %v1745 = vmax.f32 %v1600, 0.0
  %v1746 = vmax.f32 %v1669, 0.0
  %v1747 = vmax.f32 %v1671, 0.0
  %v1748 = vmax.f32 %v1740, 0.0
  %v1749 = vmax.f32 %v1742, 0.0
  %v1750 = vmul.f32 %v1744, %v71
  %v1751 = vmul.f32 %v1745, %v78
  %v1752 = vmul.f32 %v1746, %v85
  %v1753 = vmul.f32 %v1747, %v92
  %v1754 = vmul.f32 %v1748, %v99
  %v1755 = vmul.f32 %v1749, %v107
  %v1756 = vadd.f32 %v1750, %v1751
  %v1757 = vadd.f32 %v1756, %v1752
  %v1758 = vadd.f32 %v1757, %v1753
  %v1759 = vadd.f32 %v1758, %v1754
  %v1760 = vsel %vm735, %v1755, 0.0
  %v1761 = vadd.f32 %v1759, %v1760
  %1762 = vadd.xlane.f32.xlu0 %v1761
  %v1763 = vpop.xlane.xlu0 %1762
  %v1764 = vmul.f32 %v1763, 0.001953125
  %v1765 = vmul.f32 %v1750, %v1750
  %v1766 = vmul.f32 %v1751, %v1751
  %v1767 = vmul.f32 %v1752, %v1752
  %v1768 = vmul.f32 %v1753, %v1753
  %v1769 = vmul.f32 %v1754, %v1754
  %v1770 = vmul.f32 %v1755, %v1755
  %v1771 = vadd.f32 %v1765, %v1766
  %v1772 = vadd.f32 %v1771, %v1767
  %v1773 = vadd.f32 %v1772, %v1768
  %v1774 = vadd.f32 %v1773, %v1769
  %v1775 = vsel %vm735, %v1770, 0.0
  %v1776 = vadd.f32 %v1774, %v1775
  %1777 = vadd.xlane.f32.xlu0 %v1776
  %v1778 = vpop.xlane.xlu0 %1777
  %v1779 = vmul.f32 %v1778, 0.001953125
  %v1780 = vmul.f32 %v1764, %v1764
  %v1781 = vsub.f32 %v1779, %v1780
  %v1782 = vadd.f32 %v1781, 1e-05
  %v1783 = vrsqrt.pop %v1782
  %v1784 = vmul.f32 %v108, %v1783
  %v1785 = vmul.f32 %v1764, %v1784
  %1787 = vrot.lane.b32.xlu0 %v1785, 1
  %v1788 = vpop.permute.xlu0 %1787
  %v1790 = vsub.f32 %v108, %v1788
  %1792 = vset.pattern.permute.xlu0 6
  %1793 = vperm.xlu0 %1792, %v1784
  %v1794 = vpop.permute.xlu0 %1793
  %v1796 = vmul.f32 %v1744, %v1794
  %v1797 = vmul.f32 %v1745, %v1794
  %v1798 = vmul.f32 %v1746, %v1794
  %v1799 = vmul.f32 %v1747, %v1794
  %v1800 = vmul.f32 %v1748, %v1794
  %v1801 = vmul.f32 %v1749, %v1794
  %1803 = vset.pattern.permute.xlu0 7
  %1804 = vperm.xlu0 %1803, %v1790
  %v1805 = vpop.permute.xlu0 %1804
  %v1807 = vadd.f32 %v1796, %v1805
  %v1808 = vadd.f32 %v1797, %v1805
  %v1809 = vadd.f32 %v1798, %v1805
  %v1810 = vadd.f32 %v1799, %v1805
  %v1811 = vadd.f32 %v1800, %v1805
  %v1812 = vadd.f32 %v1801, %v1805
  %v1813 = vmul.f32 %v1807, %v71
  %v1814 = vmul.f32 %v1808, %v78
  %v1815 = vmul.f32 %v1809, %v85
  %v1816 = vmul.f32 %v1810, %v92
  %v1817 = vmul.f32 %v1811, %v99
  %v1818 = vmul.f32 %v1812, %v107
  %1819 = vst [vmem:[#allocation4 + $0x8] sm:$0xff] %v1813
  %1820 = vst [vmem:[#allocation4 + $0x10] sm:$0xff] %v1814
  %1821 = vst [vmem:[#allocation4 + $0x18] sm:$0xff] %v1815
  %1822 = vst [vmem:[#allocation4 + $0x20] sm:$0xff] %v1816
  %1823 = vst [vmem:[#allocation4 + $0x28] sm:$0xff] %v1817
  %1824 = vst.msk [vmem:[#allocation4 + $0x30] sm:$0xff] %vm735, %v1818
  %v1825 = vld [vmem:[#allocation4 + $0x8] sm:$0xff]
  %v1826 = vld [vmem:[#allocation4 + $0x10] sm:$0xff]
  %v1827 = vld [vmem:[#allocation4 + $0x18] sm:$0xff]
  %v1828 = vld [vmem:[#allocation4 + $0x20] sm:$0xff]
  %v1829 = vld [vmem:[#allocation4 + $0x28] sm:$0xff]
  %v1830 = vld [vmem:[#allocation4 + $0x30] sm:$0xff]
  %1831 = vst [vmem:[#allocation3] sm:$0xff] %v1825
  %1832 = vst [vmem:[#allocation3 + $0x8] sm:$0xff] %v1826
  %1833 = vst [vmem:[#allocation3 + $0x10] sm:$0xff] %v1827
  %1834 = vst [vmem:[#allocation3 + $0x18] sm:$0xff] %v1828
  %1835 = vst [vmem:[#allocation3 + $0x20] sm:$0xff] %v1829
  %1836 = vst.msk [vmem:[#allocation3 + $0x28] sm:$0xff] %vm735, %v1830
  %v1837 = vld [vmem:[#allocation4 + $0x8] sm:$0xff]
  %v1838 = vld [vmem:[#allocation4 + $0x10] sm:$0xff]
  %v1839 = vld [vmem:[#allocation4 + $0x18] sm:$0xff]
  %v1840 = vld [vmem:[#allocation4 + $0x20] sm:$0xff]
  %v1841 = vld [vmem:[#allocation4 + $0x28] sm:$0xff]
  %v1842 = vld [vmem:[#allocation4 + $0x30] sm:$0xff]
  %1849 = vrot.lane.b32.xlu0 %v1837, 127
  %v1850 = vpop.permute.xlu0 %1849
  %1851 = vrot.lane.b32.xlu0 %v1838, 127
  %v1852 = vpop.permute.xlu0 %1851
  %1853 = vrot.lane.b32.xlu0 %v1839, 127
  %v1854 = vpop.permute.xlu0 %1853
  %1855 = vrot.lane.b32.xlu0 %v1840, 127
  %v1856 = vpop.permute.xlu0 %1855
  %1857 = vrot.lane.b32.xlu0 %v1841, 127
  %v1858 = vpop.permute.xlu0 %1857
  %1859 = vrot.lane.b32.xlu0 %v1842, 127
  %v1860 = vpop.permute.xlu0 %1859
  %v1861 = vsel %vm312, %v1850, %v1852
  %v1862 = vsel %vm312, %v1852, %v1854
  %v1863 = vsel %vm312, %v1854, %v1856
  %v1864 = vsel %vm312, %v1856, %v1858
  %v1865 = vsel %vm312, %v1858, %v1860
  %1872 = vst [vmem:[#allocation3 + $0x30] sm:$0xff] %v1861
  %1873 = vst [vmem:[#allocation3 + $0x38] sm:$0xff] %v1862
  %1874 = vst [vmem:[#allocation3 + $0x40] sm:$0xff] %v1863
  %1875 = vst [vmem:[#allocation3 + $0x48] sm:$0xff] %v1864
  %1876 = vst [vmem:[#allocation3 + $0x50] sm:$0xff] %v1865
  %1877 = vst.msk [vmem:[#allocation3 + $0x58] sm:$0xff] %vm735, %v1860
  %v1878 = vld [vmem:[#allocation4 + $0x8] sm:$0xff]
  %v1879 = vld [vmem:[#allocation4 + $0x10] sm:$0xff]
  %v1880 = vld [vmem:[#allocation4 + $0x18] sm:$0xff]
  %v1881 = vld [vmem:[#allocation4 + $0x20] sm:$0xff]
  %v1882 = vld [vmem:[#allocation4 + $0x28] sm:$0xff]
  %v1883 = vld [vmem:[#allocation4 + $0x30] sm:$0xff]
  %1890 = vrot.lane.b32.xlu0 %v1878, 126
  %v1891 = vpop.permute.xlu0 %1890
  %1892 = vrot.lane.b32.xlu0 %v1879, 126
  %v1893 = vpop.permute.xlu0 %1892
  %1894 = vrot.lane.b32.xlu0 %v1880, 126
  %v1895 = vpop.permute.xlu0 %1894
  %1896 = vrot.lane.b32.xlu0 %v1881, 126
  %v1897 = vpop.permute.xlu0 %1896
  %1898 = vrot.lane.b32.xlu0 %v1882, 126
  %v1899 = vpop.permute.xlu0 %1898
  %1900 = vrot.lane.b32.xlu0 %v1883, 126
  %v1901 = vpop.permute.xlu0 %1900
  %vm1902 = vcmask 1031168
  %v1903 = vsel %vm1902, %v1891, %v1893
  %v1904 = vsel %vm1902, %v1893, %v1895
  %v1905 = vsel %vm1902, %v1895, %v1897
  %v1906 = vsel %vm1902, %v1897, %v1899
  %v1907 = vsel %vm1902, %v1899, %v1901
  %1914 = vst [vmem:[#allocation3 + $0x60] sm:$0xff] %v1903
  %1915 = vst [vmem:[#allocation3 + $0x68] sm:$0xff] %v1904
  %1916 = vst [vmem:[#allocation3 + $0x70] sm:$0xff] %v1905
  %1917 = vst [vmem:[#allocation3 + $0x78] sm:$0xff] %v1906
  %1918 = vst [vmem:[#allocation3 + $0x80] sm:$0xff] %v1907
  %1919 = vst.msk [vmem:[#allocation3 + $0x88] sm:$0xff] %vm735, %v1901
  %v1920 = vld [vmem:[#allocation4 + $0x8] sm:$0xff]
  %v1921 = vld [vmem:[#allocation4 + $0x10] sm:$0xff]
  %v1922 = vld [vmem:[#allocation4 + $0x18] sm:$0xff]
  %v1923 = vld [vmem:[#allocation4 + $0x20] sm:$0xff]
  %v1924 = vld [vmem:[#allocation4 + $0x28] sm:$0xff]
  %v1925 = vld [vmem:[#allocation4 + $0x30] sm:$0xff]
  %1932 = vrot.lane.b32.xlu0 %v1920, 125
  %v1933 = vpop.permute.xlu0 %1932
  %1934 = vrot.lane.b32.xlu0 %v1921, 125
  %v1935 = vpop.permute.xlu0 %1934
  %1936 = vrot.lane.b32.xlu0 %v1922, 125
  %v1937 = vpop.permute.xlu0 %1936
  %1938 = vrot.lane.b32.xlu0 %v1923, 125
  %v1939 = vpop.permute.xlu0 %1938
  %1940 = vrot.lane.b32.xlu0 %v1924, 125
  %v1941 = vpop.permute.xlu0 %1940
  %1942 = vrot.lane.b32.xlu0 %v1925, 125
  %v1943 = vpop.permute.xlu0 %1942
  %vm1944 = vcmask 1022976
  %v1945 = vsel %vm1944, %v1933, %v1935
  %v1946 = vsel %vm1944, %v1935, %v1937
  %v1947 = vsel %vm1944, %v1937, %v1939
  %v1948 = vsel %vm1944, %v1939, %v1941
  %v1949 = vsel %vm1944, %v1941, %v1943
  %1956 = vst [vmem:[#allocation3 + $0x90] sm:$0xff] %v1945
  %1957 = vst [vmem:[#allocation3 + $0x98] sm:$0xff] %v1946
  %1958 = vst [vmem:[#allocation3 + $0xa0] sm:$0xff] %v1947
  %1959 = vst [vmem:[#allocation3 + $0xa8] sm:$0xff] %v1948
  %1960 = vst [vmem:[#allocation3 + $0xb0] sm:$0xff] %v1949
  %1961 = vst.msk [vmem:[#allocation3 + $0xb8] sm:$0xff] %vm735, %v1943
  %v1962 = vld [vmem:[#allocation4 + $0x8] sm:$0xff]
  %v1963 = vld [vmem:[#allocation4 + $0x10] sm:$0xff]
  %v1964 = vld [vmem:[#allocation4 + $0x18] sm:$0xff]
  %v1965 = vld [vmem:[#allocation4 + $0x20] sm:$0xff]
  %v1966 = vld [vmem:[#allocation4 + $0x28] sm:$0xff]
  %v1967 = vld [vmem:[#allocation4 + $0x30] sm:$0xff]
  %1974 = vrot.lane.b32.xlu0 %v1962, 110
  %v1975 = vpop.permute.xlu0 %1974
  %1976 = vrot.lane.b32.xlu0 %v1963, 110
  %v1977 = vpop.permute.xlu0 %1976
  %1978 = vrot.lane.b32.xlu0 %v1964, 110
  %v1979 = vpop.permute.xlu0 %1978
  %1980 = vrot.lane.b32.xlu0 %v1965, 110
  %v1981 = vpop.permute.xlu0 %1980
  %1982 = vrot.lane.b32.xlu0 %v1966, 110
  %v1983 = vpop.permute.xlu0 %1982
  %1984 = vrot.lane.b32.xlu0 %v1967, 110
  %v1985 = vpop.permute.xlu0 %1984
  %v1986 = vsel %vm390, %v1975, %v1977
  %v1987 = vsel %vm390, %v1977, %v1979
  %v1988 = vsel %vm390, %v1979, %v1981
  %v1989 = vsel %vm390, %v1981, %v1983
  %v1990 = vsel %vm390, %v1983, %v1985
  %1997 = vst [vmem:[#allocation3 + $0xc0] sm:$0xff] %v1986
  %1998 = vst [vmem:[#allocation3 + $0xc8] sm:$0xff] %v1987
  %1999 = vst [vmem:[#allocation3 + $0xd0] sm:$0xff] %v1988
  %2000 = vst [vmem:[#allocation3 + $0xd8] sm:$0xff] %v1989
  %2001 = vst [vmem:[#allocation3 + $0xe0] sm:$0xff] %v1990
  %2002 = vst.msk [vmem:[#allocation3 + $0xe8] sm:$0xff] %vm735, %v1985
  %v2003 = vld [vmem:[#allocation4 + $0x8] sm:$0xff]
  %v2004 = vld [vmem:[#allocation4 + $0x10] sm:$0xff]
  %v2005 = vld [vmem:[#allocation4 + $0x18] sm:$0xff]
  %v2006 = vld [vmem:[#allocation4 + $0x20] sm:$0xff]
  %v2007 = vld [vmem:[#allocation4 + $0x28] sm:$0xff]
  %v2008 = vld [vmem:[#allocation4 + $0x30] sm:$0xff]
  %2015 = vrot.lane.b32.xlu0 %v2003, 109
  %v2016 = vpop.permute.xlu0 %2015
  %2017 = vrot.lane.b32.xlu0 %v2004, 109
  %v2018 = vpop.permute.xlu0 %2017
  %2019 = vrot.lane.b32.xlu0 %v2005, 109
  %v2020 = vpop.permute.xlu0 %2019
  %2021 = vrot.lane.b32.xlu0 %v2006, 109
  %v2022 = vpop.permute.xlu0 %2021
  %2023 = vrot.lane.b32.xlu0 %v2007, 109
  %v2024 = vpop.permute.xlu0 %2023
  %2025 = vrot.lane.b32.xlu0 %v2008, 109
  %v2026 = vpop.permute.xlu0 %2025
  %v2027 = vsel %vm429, %v2016, %v2018
  %v2028 = vsel %vm429, %v2018, %v2020
  %v2029 = vsel %vm429, %v2020, %v2022
  %v2030 = vsel %vm429, %v2022, %v2024
  %v2031 = vsel %vm429, %v2024, %v2026
  %2038 = vst [vmem:[#allocation3 + $0xf0] sm:$0xff] %v2027
  %2039 = vst [vmem:[#allocation3 + $0xf8] sm:$0xff] %v2028
  %2040 = vst [vmem:[#allocation3 + $0x100] sm:$0xff] %v2029
  %2041 = vst [vmem:[#allocation3 + $0x108] sm:$0xff] %v2030
  %2042 = vst [vmem:[#allocation3 + $0x110] sm:$0xff] %v2031
  %2043 = vst.msk [vmem:[#allocation3 + $0x118] sm:$0xff] %vm735, %v2026
  %v2044 = vld [vmem:[#allocation4 + $0x8] sm:$0xff]
  %v2045 = vld [vmem:[#allocation4 + $0x10] sm:$0xff]
  %v2046 = vld [vmem:[#allocation4 + $0x18] sm:$0xff]
  %v2047 = vld [vmem:[#allocation4 + $0x20] sm:$0xff]
  %v2048 = vld [vmem:[#allocation4 + $0x28] sm:$0xff]
  %v2049 = vld [vmem:[#allocation4 + $0x30] sm:$0xff]
  %2056 = vrot.lane.b32.xlu0 %v2044, 108
  %v2057 = vpop.permute.xlu0 %2056
  %2058 = vrot.lane.b32.xlu0 %v2045, 108
  %v2059 = vpop.permute.xlu0 %2058
  %2060 = vrot.lane.b32.xlu0 %v2046, 108
  %v2061 = vpop.permute.xlu0 %2060
  %2062 = vrot.lane.b32.xlu0 %v2047, 108
  %v2063 = vpop.permute.xlu0 %2062
  %2064 = vrot.lane.b32.xlu0 %v2048, 108
  %v2065 = vpop.permute.xlu0 %2064
  %2066 = vrot.lane.b32.xlu0 %v2049, 108
  %v2067 = vpop.permute.xlu0 %2066
  %vm2068 = vcmask 883712
  %v2069 = vsel %vm2068, %v2057, %v2059
  %v2070 = vsel %vm2068, %v2059, %v2061
  %v2071 = vsel %vm2068, %v2061, %v2063
  %v2072 = vsel %vm2068, %v2063, %v2065
  %v2073 = vsel %vm2068, %v2065, %v2067
  %2080 = vst [vmem:[#allocation3 + $0x120] sm:$0xff] %v2069
  %2081 = vst [vmem:[#allocation3 + $0x128] sm:$0xff] %v2070
  %2082 = vst [vmem:[#allocation3 + $0x130] sm:$0xff] %v2071
  %2083 = vst [vmem:[#allocation3 + $0x138] sm:$0xff] %v2072
  %2084 = vst [vmem:[#allocation3 + $0x140] sm:$0xff] %v2073
  %2085 = vst.msk [vmem:[#allocation3 + $0x148] sm:$0xff] %vm735, %v2067
  %v2086 = vld [vmem:[#allocation4 + $0x8] sm:$0xff]
  %v2087 = vld [vmem:[#allocation4 + $0x10] sm:$0xff]
  %v2088 = vld [vmem:[#allocation4 + $0x18] sm:$0xff]
  %v2089 = vld [vmem:[#allocation4 + $0x20] sm:$0xff]
  %v2090 = vld [vmem:[#allocation4 + $0x28] sm:$0xff]
  %v2091 = vld [vmem:[#allocation4 + $0x30] sm:$0xff]
  %2098 = vrot.lane.b32.xlu0 %v2086, 107
  %v2099 = vpop.permute.xlu0 %2098
  %2100 = vrot.lane.b32.xlu0 %v2087, 107
  %v2101 = vpop.permute.xlu0 %2100
  %2102 = vrot.lane.b32.xlu0 %v2088, 107
  %v2103 = vpop.permute.xlu0 %2102
  %2104 = vrot.lane.b32.xlu0 %v2089, 107
  %v2105 = vpop.permute.xlu0 %2104
  %2106 = vrot.lane.b32.xlu0 %v2090, 107
  %v2107 = vpop.permute.xlu0 %2106
  %2108 = vrot.lane.b32.xlu0 %v2091, 107
  %v2109 = vpop.permute.xlu0 %2108
  %vm2110 = vcmask 875520
  %v2111 = vsel %vm2110, %v2099, %v2101
  %v2112 = vsel %vm2110, %v2101, %v2103
  %v2113 = vsel %vm2110, %v2103, %v2105
  %v2114 = vsel %vm2110, %v2105, %v2107
  %v2115 = vsel %vm2110, %v2107, %v2109
  %2122 = vst [vmem:[#allocation3 + $0x150] sm:$0xff] %v2111
  %2123 = vst [vmem:[#allocation3 + $0x158] sm:$0xff] %v2112
  %2124 = vst [vmem:[#allocation3 + $0x160] sm:$0xff] %v2113
  %2125 = vst [vmem:[#allocation3 + $0x168] sm:$0xff] %v2114
  %2126 = vst [vmem:[#allocation3 + $0x170] sm:$0xff] %v2115
  %2127 = vst.msk [vmem:[#allocation3 + $0x178] sm:$0xff] %vm735, %v2109
  %v2128 = vld [vmem:[#allocation4 + $0x8] sm:$0xff]
  %v2129 = vld [vmem:[#allocation4 + $0x10] sm:$0xff]
  %v2130 = vld [vmem:[#allocation4 + $0x18] sm:$0xff]
  %v2131 = vld [vmem:[#allocation4 + $0x20] sm:$0xff]
  %v2132 = vld [vmem:[#allocation4 + $0x28] sm:$0xff]
  %v2133 = vld [vmem:[#allocation4 + $0x30] sm:$0xff]
  %2140 = vrot.lane.b32.xlu0 %v2128, 92
  %v2141 = vpop.permute.xlu0 %2140
  %2142 = vrot.lane.b32.xlu0 %v2129, 92
  %v2143 = vpop.permute.xlu0 %2142
  %2144 = vrot.lane.b32.xlu0 %v2130, 92
  %v2145 = vpop.permute.xlu0 %2144
  %2146 = vrot.lane.b32.xlu0 %v2131, 92
  %v2147 = vpop.permute.xlu0 %2146
  %2148 = vrot.lane.b32.xlu0 %v2132, 92
  %v2149 = vpop.permute.xlu0 %2148
  %2150 = vrot.lane.b32.xlu0 %v2133, 92
  %v2151 = vpop.permute.xlu0 %2150
  %vm2152 = vcmask 752640
  %v2153 = vsel %vm2152, %v2141, %v2143
  %v2154 = vsel %vm2152, %v2143, %v2145
  %v2155 = vsel %vm2152, %v2145, %v2147
  %v2156 = vsel %vm2152, %v2147, %v2149
  %v2157 = vsel %vm2152, %v2149, %v2151
  %2164 = vst [vmem:[#allocation3 + $0x180] sm:$0xff] %v2153
  %2165 = vst [vmem:[#allocation3 + $0x188] sm:$0xff] %v2154
  %2166 = vst [vmem:[#allocation3 + $0x190] sm:$0xff] %v2155
  %2167 = vst [vmem:[#allocation3 + $0x198] sm:$0xff] %v2156
  %2168 = vst [vmem:[#allocation3 + $0x1a0] sm:$0xff] %v2157
  %2169 = vst.msk [vmem:[#allocation3 + $0x1a8] sm:$0xff] %vm735, %v2151
  %v2170 = vld [vmem:[#allocation4 + $0x8] sm:$0xff]
  %v2171 = vld [vmem:[#allocation4 + $0x10] sm:$0xff]
  %v2172 = vld [vmem:[#allocation4 + $0x18] sm:$0xff]
  %v2173 = vld [vmem:[#allocation4 + $0x20] sm:$0xff]
  %v2174 = vld [vmem:[#allocation4 + $0x28] sm:$0xff]
  %v2175 = vld [vmem:[#allocation4 + $0x30] sm:$0xff]
  %2182 = vrot.lane.b32.xlu0 %v2170, 91
  %v2183 = vpop.permute.xlu0 %2182
  %2184 = vrot.lane.b32.xlu0 %v2171, 91
  %v2185 = vpop.permute.xlu0 %2184
  %2186 = vrot.lane.b32.xlu0 %v2172, 91
  %v2187 = vpop.permute.xlu0 %2186
  %2188 = vrot.lane.b32.xlu0 %v2173, 91
  %v2189 = vpop.permute.xlu0 %2188
  %2190 = vrot.lane.b32.xlu0 %v2174, 91
  %v2191 = vpop.permute.xlu0 %2190
  %2192 = vrot.lane.b32.xlu0 %v2175, 91
  %v2193 = vpop.permute.xlu0 %2192
  %vm2194 = vcmask 744448
  %v2195 = vsel %vm2194, %v2183, %v2185
  %v2196 = vsel %vm2194, %v2185, %v2187
  %v2197 = vsel %vm2194, %v2187, %v2189
  %v2198 = vsel %vm2194, %v2189, %v2191
  %v2199 = vsel %vm2194, %v2191, %v2193
  %2206 = vst [vmem:[#allocation3 + $0x1b0] sm:$0xff] %v2195
  %2207 = vst [vmem:[#allocation3 + $0x1b8] sm:$0xff] %v2196
  %2208 = vst [vmem:[#allocation3 + $0x1c0] sm:$0xff] %v2197
  %2209 = vst [vmem:[#allocation3 + $0x1c8] sm:$0xff] %v2198
  %2210 = vst [vmem:[#allocation3 + $0x1d0] sm:$0xff] %v2199
  %2211 = vst.msk [vmem:[#allocation3 + $0x1d8] sm:$0xff] %vm735, %v2193
  %v2212 = vld [vmem:[#allocation4 + $0x8] sm:$0xff]
  %v2213 = vld [vmem:[#allocation4 + $0x10] sm:$0xff]
  %v2214 = vld [vmem:[#allocation4 + $0x18] sm:$0xff]
  %v2215 = vld [vmem:[#allocation4 + $0x20] sm:$0xff]
  %v2216 = vld [vmem:[#allocation4 + $0x28] sm:$0xff]
  %v2217 = vld [vmem:[#allocation4 + $0x30] sm:$0xff]
  %2224 = vrot.lane.b32.xlu0 %v2212, 90
  %v2225 = vpop.permute.xlu0 %2224
  %2226 = vrot.lane.b32.xlu0 %v2213, 90
  %v2227 = vpop.permute.xlu0 %2226
  %2228 = vrot.lane.b32.xlu0 %v2214, 90
  %v2229 = vpop.permute.xlu0 %2228
  %2230 = vrot.lane.b32.xlu0 %v2215, 90
  %v2231 = vpop.permute.xlu0 %2230
  %2232 = vrot.lane.b32.xlu0 %v2216, 90
  %v2233 = vpop.permute.xlu0 %2232
  %2234 = vrot.lane.b32.xlu0 %v2217, 90
  %v2235 = vpop.permute.xlu0 %2234
  %vm2236 = vcmask 736256
  %v2237 = vsel %vm2236, %v2225, %v2227
  %v2238 = vsel %vm2236, %v2227, %v2229
  %v2239 = vsel %vm2236, %v2229, %v2231
  %v2240 = vsel %vm2236, %v2231, %v2233
  %v2241 = vsel %vm2236, %v2233, %v2235
  %2248 = vst [vmem:[#allocation3 + $0x1e0] sm:$0xff] %v2237
  %2249 = vst [vmem:[#allocation3 + $0x1e8] sm:$0xff] %v2238
  %2250 = vst [vmem:[#allocation3 + $0x1f0] sm:$0xff] %v2239
  %2251 = vst [vmem:[#allocation3 + $0x1f8] sm:$0xff] %v2240
  %2252 = vst [vmem:[#allocation3 + $0x200] sm:$0xff] %v2241
  %2253 = vst.msk [vmem:[#allocation3 + $0x208] sm:$0xff] %vm735, %v2235
  %v2254 = vld [vmem:[#allocation4 + $0x8] sm:$0xff]
  %v2255 = vld [vmem:[#allocation4 + $0x10] sm:$0xff]
  %v2256 = vld [vmem:[#allocation4 + $0x18] sm:$0xff]
  %v2257 = vld [vmem:[#allocation4 + $0x20] sm:$0xff]
  %v2258 = vld [vmem:[#allocation4 + $0x28] sm:$0xff]
  %v2259 = vld [vmem:[#allocation4 + $0x30] sm:$0xff]
  %2266 = vrot.lane.b32.xlu0 %v2254, 89
  %v2267 = vpop.permute.xlu0 %2266
  %2268 = vrot.lane.b32.xlu0 %v2255, 89
  %v2269 = vpop.permute.xlu0 %2268
  %2270 = vrot.lane.b32.xlu0 %v2256, 89
  %v2271 = vpop.permute.xlu0 %2270
  %2272 = vrot.lane.b32.xlu0 %v2257, 89
  %v2273 = vpop.permute.xlu0 %2272
  %2274 = vrot.lane.b32.xlu0 %v2258, 89
  %v2275 = vpop.permute.xlu0 %2274
  %2276 = vrot.lane.b32.xlu0 %v2259, 89
  %v2277 = vpop.permute.xlu0 %2276
  %vm2278 = vcmask 728064
  %v2279 = vsel %vm2278, %v2267, %v2269
  %v2280 = vsel %vm2278, %v2269, %v2271
  %v2281 = vsel %vm2278, %v2271, %v2273
  %v2282 = vsel %vm2278, %v2273, %v2275
  %v2283 = vsel %vm2278, %v2275, %v2277
  %2290 = vst [vmem:[#allocation3 + $0x210] sm:$0xff] %v2279
  %2291 = vst [vmem:[#allocation3 + $0x218] sm:$0xff] %v2280
  %2292 = vst [vmem:[#allocation3 + $0x220] sm:$0xff] %v2281
  %2293 = vst [vmem:[#allocation3 + $0x228] sm:$0xff] %v2282
  %2294 = vst [vmem:[#allocation3 + $0x230] sm:$0xff] %v2283
  %2295 = vst.msk [vmem:[#allocation3 + $0x238] sm:$0xff] %vm735, %v2277
  %v2296 = vld [vmem:[#allocation4 + $0x8] sm:$0xff]
  %v2297 = vld [vmem:[#allocation4 + $0x10] sm:$0xff]
  %v2298 = vld [vmem:[#allocation4 + $0x18] sm:$0xff]
  %v2299 = vld [vmem:[#allocation4 + $0x20] sm:$0xff]
  %v2300 = vld [vmem:[#allocation4 + $0x28] sm:$0xff]
  %v2301 = vld [vmem:[#allocation4 + $0x30] sm:$0xff]
  %2308 = vrot.lane.b32.xlu0 %v2296, 74
  %v2309 = vpop.permute.xlu0 %2308
  %2310 = vrot.lane.b32.xlu0 %v2297, 74
  %v2311 = vpop.permute.xlu0 %2310
  %2312 = vrot.lane.b32.xlu0 %v2298, 74
  %v2313 = vpop.permute.xlu0 %2312
  %2314 = vrot.lane.b32.xlu0 %v2299, 74
  %v2315 = vpop.permute.xlu0 %2314
  %2316 = vrot.lane.b32.xlu0 %v2300, 74
  %v2317 = vpop.permute.xlu0 %2316
  %2318 = vrot.lane.b32.xlu0 %v2301, 74
  %v2319 = vpop.permute.xlu0 %2318
  %vm2320 = vcmask 605184
  %v2321 = vsel %vm2320, %v2309, %v2311
  %v2322 = vsel %vm2320, %v2311, %v2313
  %v2323 = vsel %vm2320, %v2313, %v2315
  %v2324 = vsel %vm2320, %v2315, %v2317
  %v2325 = vsel %vm2320, %v2317, %v2319
  %2332 = vst [vmem:[#allocation3 + $0x240] sm:$0xff] %v2321
  %2333 = vst [vmem:[#allocation3 + $0x248] sm:$0xff] %v2322
  %2334 = vst [vmem:[#allocation3 + $0x250] sm:$0xff] %v2323
  %2335 = vst [vmem:[#allocation3 + $0x258] sm:$0xff] %v2324
  %2336 = vst [vmem:[#allocation3 + $0x260] sm:$0xff] %v2325
  %2337 = vst.msk [vmem:[#allocation3 + $0x268] sm:$0xff] %vm735, %v2319
  %v2338 = vld [vmem:[#allocation4 + $0x8] sm:$0xff]
  %v2339 = vld [vmem:[#allocation4 + $0x10] sm:$0xff]
  %v2340 = vld [vmem:[#allocation4 + $0x18] sm:$0xff]
  %v2341 = vld [vmem:[#allocation4 + $0x20] sm:$0xff]
  %v2342 = vld [vmem:[#allocation4 + $0x28] sm:$0xff]
  %v2343 = vld [vmem:[#allocation4 + $0x30] sm:$0xff]
  %2350 = vrot.lane.b32.xlu0 %v2338, 73
  %v2351 = vpop.permute.xlu0 %2350
  %2352 = vrot.lane.b32.xlu0 %v2339, 73
  %v2353 = vpop.permute.xlu0 %2352
  %2354 = vrot.lane.b32.xlu0 %v2340, 73
  %v2355 = vpop.permute.xlu0 %2354
  %2356 = vrot.lane.b32.xlu0 %v2341, 73
  %v2357 = vpop.permute.xlu0 %2356
  %2358 = vrot.lane.b32.xlu0 %v2342, 73
  %v2359 = vpop.permute.xlu0 %2358
  %2360 = vrot.lane.b32.xlu0 %v2343, 73
  %v2361 = vpop.permute.xlu0 %2360
  %vm2362 = vcmask 596992
  %v2363 = vsel %vm2362, %v2351, %v2353
  %v2364 = vsel %vm2362, %v2353, %v2355
  %v2365 = vsel %vm2362, %v2355, %v2357
  %v2366 = vsel %vm2362, %v2357, %v2359
  %v2367 = vsel %vm2362, %v2359, %v2361
  %2374 = vst [vmem:[#allocation3 + $0x270] sm:$0xff] %v2363
  %2375 = vst [vmem:[#allocation3 + $0x278] sm:$0xff] %v2364
  %2376 = vst [vmem:[#allocation3 + $0x280] sm:$0xff] %v2365
  %2377 = vst [vmem:[#allocation3 + $0x288] sm:$0xff] %v2366
  %2378 = vst [vmem:[#allocation3 + $0x290] sm:$0xff] %v2367
  %2379 = vst.msk [vmem:[#allocation3 + $0x298] sm:$0xff] %vm735, %v2361
  %v2380 = vld [vmem:[#allocation4 + $0x8] sm:$0xff]
  %v2381 = vld [vmem:[#allocation4 + $0x10] sm:$0xff]
  %v2382 = vld [vmem:[#allocation4 + $0x18] sm:$0xff]
  %v2383 = vld [vmem:[#allocation4 + $0x20] sm:$0xff]
  %v2384 = vld [vmem:[#allocation4 + $0x28] sm:$0xff]
  %v2385 = vld [vmem:[#allocation4 + $0x30] sm:$0xff]
  %2392 = vrot.lane.b32.xlu0 %v2380, 72
  %v2393 = vpop.permute.xlu0 %2392
  %2394 = vrot.lane.b32.xlu0 %v2381, 72
  %v2395 = vpop.permute.xlu0 %2394
  %2396 = vrot.lane.b32.xlu0 %v2382, 72
  %v2397 = vpop.permute.xlu0 %2396
  %2398 = vrot.lane.b32.xlu0 %v2383, 72
  %v2399 = vpop.permute.xlu0 %2398
  %2400 = vrot.lane.b32.xlu0 %v2384, 72
  %v2401 = vpop.permute.xlu0 %2400
  %2402 = vrot.lane.b32.xlu0 %v2385, 72
  %v2403 = vpop.permute.xlu0 %2402
  %v2404 = vsel %vm1527, %v2393, %v2395
  %v2405 = vsel %vm1527, %v2395, %v2397
  %v2406 = vsel %vm1527, %v2397, %v2399
  %v2407 = vsel %vm1527, %v2399, %v2401
  %v2408 = vsel %vm1527, %v2401, %v2403
  %2415 = vst [vmem:[#allocation3 + $0x2a0] sm:$0xff] %v2404
  %2416 = vst [vmem:[#allocation3 + $0x2a8] sm:$0xff] %v2405
  %2417 = vst [vmem:[#allocation3 + $0x2b0] sm:$0xff] %v2406
  %2418 = vst [vmem:[#allocation3 + $0x2b8] sm:$0xff] %v2407
  %2419 = vst [vmem:[#allocation3 + $0x2c0] sm:$0xff] %v2408
  %2420 = vst.msk [vmem:[#allocation3 + $0x2c8] sm:$0xff] %vm735, %v2403
  %v2421 = vld [vmem:[#allocation4 + $0x8] sm:$0xff]
  %v2422 = vld [vmem:[#allocation4 + $0x10] sm:$0xff]
  %v2423 = vld [vmem:[#allocation4 + $0x18] sm:$0xff]
  %v2424 = vld [vmem:[#allocation4 + $0x20] sm:$0xff]
  %v2425 = vld [vmem:[#allocation4 + $0x28] sm:$0xff]
  %v2426 = vld [vmem:[#allocation4 + $0x30] sm:$0xff]
  %2433 = vrot.lane.b32.xlu0 %v2421, 71
  %v2434 = vpop.permute.xlu0 %2433
  %2435 = vrot.lane.b32.xlu0 %v2422, 71
  %v2436 = vpop.permute.xlu0 %2435
  %2437 = vrot.lane.b32.xlu0 %v2423, 71
  %v2438 = vpop.permute.xlu0 %2437
  %2439 = vrot.lane.b32.xlu0 %v2424, 71
  %v2440 = vpop.permute.xlu0 %2439
  %2441 = vrot.lane.b32.xlu0 %v2425, 71
  %v2442 = vpop.permute.xlu0 %2441
  %2443 = vrot.lane.b32.xlu0 %v2426, 71
  %v2444 = vpop.permute.xlu0 %2443
  %vm2445 = vcmask 580608
  %v2446 = vsel %vm2445, %v2434, %v2436
  %v2447 = vsel %vm2445, %v2436, %v2438
  %v2448 = vsel %vm2445, %v2438, %v2440
  %v2449 = vsel %vm2445, %v2440, %v2442
  %v2450 = vsel %vm2445, %v2442, %v2444
  %2457 = vst [vmem:[#allocation3 + $0x2d0] sm:$0xff] %v2446
  %2458 = vst [vmem:[#allocation3 + $0x2d8] sm:$0xff] %v2447
  %2459 = vst [vmem:[#allocation3 + $0x2e0] sm:$0xff] %v2448
  %2460 = vst [vmem:[#allocation3 + $0x2e8] sm:$0xff] %v2449
  %2461 = vst [vmem:[#allocation3 + $0x2f0] sm:$0xff] %v2450
  %2462 = vst.msk [vmem:[#allocation3 + $0x2f8] sm:$0xff] %vm735, %v2444
  %v2463 = vld [vmem:[%s5] sm:$0xff]
  %v2464 = vld [vmem:[#allocation3] sm:$0xff]
  %v2465 = vld [vmem:[#allocation3 + $0x8] sm:$0xff]
  %v2466 = vld [vmem:[#allocation3 + $0x10] sm:$0xff]
  %v2467 = vld [vmem:[#allocation3 + $0x18] sm:$0xff]
  %v2468 = vld [vmem:[#allocation3 + $0x20] sm:$0xff]
  %v2469 = vld [vmem:[#allocation3 + $0x28] sm:$0xff]
  %v2470 = vld [vmem:[#allocation3 + $0x30] sm:$0xff]
  %v2471 = vld [vmem:[#allocation3 + $0x38] sm:$0xff]
  %v2472 = vld [vmem:[#allocation3 + $0x40] sm:$0xff]
  %v2473 = vld [vmem:[#allocation3 + $0x48] sm:$0xff]
  %v2474 = vld [vmem:[#allocation3 + $0x50] sm:$0xff]
  %v2475 = vld [vmem:[#allocation3 + $0x58] sm:$0xff]
  %v2476 = vld [vmem:[#allocation3 + $0x60] sm:$0xff]
  %v2477 = vld [vmem:[#allocation3 + $0x68] sm:$0xff]
  %v2478 = vld [vmem:[#allocation3 + $0x70] sm:$0xff]
  %v2479 = vld [vmem:[#allocation3 + $0x78] sm:$0xff]
  %v2480 = vld [vmem:[#allocation3 + $0x80] sm:$0xff]
  %v2481 = vld [vmem:[#allocation3 + $0x88] sm:$0xff]
  %v2482 = vld [vmem:[#allocation3 + $0x90] sm:$0xff]
  %v2483 = vld [vmem:[#allocation3 + $0x98] sm:$0xff]
  %v2484 = vld [vmem:[#allocation3 + $0xa0] sm:$0xff]
  %v2485 = vld [vmem:[#allocation3 + $0xa8] sm:$0xff]
  %v2486 = vld [vmem:[#allocation3 + $0xb0] sm:$0xff]
  %v2487 = vld [vmem:[#allocation3 + $0xb8] sm:$0xff]
  %v2488 = vld [vmem:[#allocation3 + $0xc0] sm:$0xff]
  %v2489 = vld [vmem:[#allocation3 + $0xc8] sm:$0xff]
  %v2490 = vld [vmem:[#allocation3 + $0xd0] sm:$0xff]
  %v2491 = vld [vmem:[#allocation3 + $0xd8] sm:$0xff]
  %v2492 = vld [vmem:[#allocation3 + $0xe0] sm:$0xff]
  %v2493 = vld [vmem:[#allocation3 + $0xe8] sm:$0xff]
  %v2494 = vld [vmem:[#allocation3 + $0xf0] sm:$0xff]
  %v2495 = vld [vmem:[#allocation3 + $0xf8] sm:$0xff]
  %v2496 = vld [vmem:[#allocation3 + $0x100] sm:$0xff]
  %v2497 = vld [vmem:[#allocation3 + $0x108] sm:$0xff]
  %v2498 = vld [vmem:[#allocation3 + $0x110] sm:$0xff]
  %v2499 = vld [vmem:[#allocation3 + $0x118] sm:$0xff]
  %v2500 = vld [vmem:[#allocation3 + $0x120] sm:$0xff]
  %v2501 = vld [vmem:[#allocation3 + $0x128] sm:$0xff]
  %v2502 = vld [vmem:[#allocation3 + $0x130] sm:$0xff]
  %v2503 = vld [vmem:[#allocation3 + $0x138] sm:$0xff]
  %v2504 = vld [vmem:[#allocation3 + $0x140] sm:$0xff]
  %v2505 = vld [vmem:[#allocation3 + $0x148] sm:$0xff]
  %v2506 = vld [vmem:[#allocation3 + $0x150] sm:$0xff]
  %v2507 = vld [vmem:[#allocation3 + $0x158] sm:$0xff]
  %v2508 = vld [vmem:[#allocation3 + $0x160] sm:$0xff]
  %v2509 = vld [vmem:[#allocation3 + $0x168] sm:$0xff]
  %v2510 = vld [vmem:[#allocation3 + $0x170] sm:$0xff]
  %v2511 = vld [vmem:[#allocation3 + $0x178] sm:$0xff]
  %v2512 = vld [vmem:[#allocation3 + $0x180] sm:$0xff]
  %v2513 = vld [vmem:[#allocation3 + $0x188] sm:$0xff]
  %v2514 = vld [vmem:[#allocation3 + $0x190] sm:$0xff]
  %v2515 = vld [vmem:[#allocation3 + $0x198] sm:$0xff]
  %v2516 = vld [vmem:[#allocation3 + $0x1a0] sm:$0xff]
  %v2517 = vld [vmem:[#allocation3 + $0x1a8] sm:$0xff]
  %v2518 = vld [vmem:[#allocation3 + $0x1b0] sm:$0xff]
  %v2519 = vld [vmem:[#allocation3 + $0x1b8] sm:$0xff]
  %v2520 = vld [vmem:[#allocation3 + $0x1c0] sm:$0xff]
  %v2521 = vld [vmem:[#allocation3 + $0x1c8] sm:$0xff]
  %v2522 = vld [vmem:[#allocation3 + $0x1d0] sm:$0xff]
  %v2523 = vld [vmem:[#allocation3 + $0x1d8] sm:$0xff]
  %v2524 = vld [vmem:[#allocation3 + $0x1e0] sm:$0xff]
  %v2525 = vld [vmem:[#allocation3 + $0x1e8] sm:$0xff]
  %v2526 = vld [vmem:[#allocation3 + $0x1f0] sm:$0xff]
  %v2527 = vld [vmem:[#allocation3 + $0x1f8] sm:$0xff]
  %v2528 = vld [vmem:[#allocation3 + $0x200] sm:$0xff]
  %v2529 = vld [vmem:[#allocation3 + $0x208] sm:$0xff]
  %v2530 = vld [vmem:[#allocation3 + $0x210] sm:$0xff]
  %v2531 = vld [vmem:[#allocation3 + $0x218] sm:$0xff]
  %v2532 = vld [vmem:[#allocation3 + $0x220] sm:$0xff]
  %v2533 = vld [vmem:[#allocation3 + $0x228] sm:$0xff]
  %v2534 = vld [vmem:[#allocation3 + $0x230] sm:$0xff]
  %v2535 = vld [vmem:[#allocation3 + $0x238] sm:$0xff]
  %v2536 = vld [vmem:[#allocation3 + $0x240] sm:$0xff]
  %v2537 = vld [vmem:[#allocation3 + $0x248] sm:$0xff]
  %v2538 = vld [vmem:[#allocation3 + $0x250] sm:$0xff]
  %v2539 = vld [vmem:[#allocation3 + $0x258] sm:$0xff]
  %v2540 = vld [vmem:[#allocation3 + $0x260] sm:$0xff]
  %v2541 = vld [vmem:[#allocation3 + $0x268] sm:$0xff]
  %v2542 = vld [vmem:[#allocation3 + $0x270] sm:$0xff]
  %v2543 = vld [vmem:[#allocation3 + $0x278] sm:$0xff]
  %v2544 = vld [vmem:[#allocation3 + $0x280] sm:$0xff]
  %v2545 = vld [vmem:[#allocation3 + $0x288] sm:$0xff]
  %v2546 = vld [vmem:[#allocation3 + $0x290] sm:$0xff]
  %v2547 = vld [vmem:[#allocation3 + $0x298] sm:$0xff]
  %v2548 = vld [vmem:[#allocation3 + $0x2a0] sm:$0xff]
  %v2549 = vld [vmem:[#allocation3 + $0x2a8] sm:$0xff]
  %v2550 = vld [vmem:[#allocation3 + $0x2b0] sm:$0xff]
  %v2551 = vld [vmem:[#allocation3 + $0x2b8] sm:$0xff]
  %v2552 = vld [vmem:[#allocation3 + $0x2c0] sm:$0xff]
  %v2553 = vld [vmem:[#allocation3 + $0x2c8] sm:$0xff]
  %v2554 = vld [vmem:[#allocation3 + $0x2d0] sm:$0xff]
  %v2555 = vld [vmem:[#allocation3 + $0x2d8] sm:$0xff]
  %v2556 = vld [vmem:[#allocation3 + $0x2e0] sm:$0xff]
  %v2557 = vld [vmem:[#allocation3 + $0x2e8] sm:$0xff]
  %v2558 = vld [vmem:[#allocation3 + $0x2f0] sm:$0xff]
  %v2559 = vld [vmem:[#allocation3 + $0x2f8] sm:$0xff]
  %2560 = vset.pattern.permute.xlu0 3
  %2561 = vperm.xlu0 %2560, %v108
  %v2562 = vpop.permute.xlu0 %2561
  %2564 = vmatprep.subr.mxu0 %v2555
  %2565 = vmatpush1.msra.mxu0 %v2554
  %2566 = vmatprep.subr.mxu0 %v2549
  %2567 = vmatpush1.msra.mxu0 %v2548
  %2568 = vmatprep.subr.mxu0 %v2543
  %2569 = vmatpush1.msra.mxu0 %v2542
  %2570 = vmatprep.subr.mxu0 %v2537
  %2571 = vmatpush1.msra.mxu0 %v2536
  %2572 = vmatprep.subr.mxu0 %v2531
  %2573 = vmatpush1.msra.mxu0 %v2530
  %2574 = vmatprep.subr.mxu0 %v2525
  %2575 = vmatpush1.msra.mxu0 %v2524
  %2576 = vmatprep.subr.mxu0 %v2519
  %2577 = vmatpush1.msra.mxu0 %v2518
  %2578 = vmatprep.subr.mxu0 %v2513
  %2579 = vmatpush1.msra.mxu0 %v2512
  %2580 = vmatprep.subr.mxu0 %v2507
  %2581 = vmatpush1.msra.mxu0 %v2506
  %2582 = vmatprep.subr.mxu0 %v2501
  %2583 = vmatpush1.msra.mxu0 %v2500
  %2584 = vmatprep.subr.mxu0 %v2495
  %2585 = vmatpush1.msra.mxu0 %v2494
  %2586 = vmatprep.subr.mxu0 %v2489
  %2587 = vmatpush1.msra.mxu0 %v2488
  %2588 = vmatprep.subr.mxu0 %v2483
  %2589 = vmatpush1.msra.mxu0 %v2482
  %2590 = vmatprep.subr.mxu0 %v2477
  %2591 = vmatpush1.msra.mxu0 %v2476
  %2592 = vmatprep.subr.mxu0 %v2471
  %2593 = vmatpush1.msra.mxu0 %v2470
  %2594 = vmatprep.subr.mxu0 %v2465
  %2595 = vmatpush1.msra.mxu0 %v2464
  %2596 = vmatprep.subr.mxu0 0.0
  %2597 = vmatpush2.msra.mxu0 0.0
  %2598 = vmatprep.subr.mxu0 0.0
  %2599 = vmatpush2.msra.mxu0 0.0
  %2600 = vmatprep.subr.mxu0 0.0
  %2601 = vmatpush2.msra.mxu0 0.0
  %2602 = vmatprep.subr.mxu0 0.0
  %2603 = vmatpush2.msra.mxu0 0.0
  %2604 = vmatprep.subr.mxu0 0.0
  %2605 = vmatpush2.msra.mxu0 0.0
  %2606 = vmatprep.subr.mxu0 0.0
  %2607 = vmatpush2.msra.mxu0 0.0
  %2608 = vmatprep.subr.mxu0 0.0
  %2609 = vmatpush2.msra.mxu0 0.0
  %2610 = vmatprep.subr.mxu0 0.0
  %2611 = vmatpush2.msra.mxu0 0.0
  %2612 = vmatprep.subr.mxu0 0.0
  %2613 = vmatpush2.msra.mxu0 0.0
  %2614 = vmatprep.subr.mxu0 0.0
  %2615 = vmatpush2.msra.mxu0 0.0
  %2616 = vmatprep.subr.mxu0 0.0
  %2617 = vmatpush2.msra.mxu0 0.0
  %2618 = vmatprep.subr.mxu0 0.0
  %2619 = vmatpush2.msra.mxu0 0.0
  %2620 = vmatprep.subr.mxu0 0.0
  %2621 = vmatpush2.msra.mxu0 0.0
  %2622 = vmatprep.subr.mxu0 0.0
  %2623 = vmatpush2.msra.mxu0 0.0
  %2624 = vmatprep.subr.mxu0 0.0
  %2625 = vmatpush2.msra.mxu0 0.0
  %2626 = vmatprep.subr.mxu0 0.0
  %2627 = vmatpush2.msra.mxu0 0.0
  %2628 = vmatprep.mubr.f32.mxu0 0.0
  %2629 = vmatmul.mubr.f32.gmra.mxu0 %v2463
  %v2630 = vpop.f32.mrf.mxu0
  %v2631 = vadd.f32 %v2562, %v2630
  %v2632 = vpop.f32.mrf.mxu0
  %v2633 = vadd.f32 %v2562, %v2632
  %2634 = vdwg.mxu0
  %2635 = vmatprep.subr.mxu0 %v2557
  %2636 = vmatpush1.msra.mxu0 %v2556
  %2637 = vmatprep.subr.mxu0 %v2551
  %2638 = vmatpush1.msra.mxu0 %v2550
  %2639 = vmatprep.subr.mxu0 %v2545
  %2640 = vmatpush1.msra.mxu0 %v2544
  %2641 = vmatprep.subr.mxu0 %v2539
  %2642 = vmatpush1.msra.mxu0 %v2538
  %2643 = vmatprep.subr.mxu0 %v2533
  %2644 = vmatpush1.msra.mxu0 %v2532
  %2645 = vmatprep.subr.mxu0 %v2527
  %2646 = vmatpush1.msra.mxu0 %v2526
  %2647 = vmatprep.subr.mxu0 %v2521
  %2648 = vmatpush1.msra.mxu0 %v2520
  %2649 = vmatprep.subr.mxu0 %v2515
  %2650 = vmatpush1.msra.mxu0 %v2514
  %2651 = vmatprep.subr.mxu0 %v2509
  %2652 = vmatpush1.msra.mxu0 %v2508
  %2653 = vmatprep.subr.mxu0 %v2503
  %2654 = vmatpush1.msra.mxu0 %v2502
  %2655 = vmatprep.subr.mxu0 %v2497
  %2656 = vmatpush1.msra.mxu0 %v2496
  %2657 = vmatprep.subr.mxu0 %v2491
  %2658 = vmatpush1.msra.mxu0 %v2490
  %2659 = vmatprep.subr.mxu0 %v2485
  %2660 = vmatpush1.msra.mxu0 %v2484
  %2661 = vmatprep.subr.mxu0 %v2479
  %2662 = vmatpush1.msra.mxu0 %v2478
  %2663 = vmatprep.subr.mxu0 %v2473
  %2664 = vmatpush1.msra.mxu0 %v2472
  %2665 = vmatprep.subr.mxu0 %v2467
  %2666 = vmatpush1.msra.mxu0 %v2466
  %2667 = vmatprep.subr.mxu0 0.0
  %2668 = vmatpush2.msra.mxu0 0.0
  %2669 = vmatprep.subr.mxu0 0.0
  %2670 = vmatpush2.msra.mxu0 0.0
  %2671 = vmatprep.subr.mxu0 0.0
  %2672 = vmatpush2.msra.mxu0 0.0
  %2673 = vmatprep.subr.mxu0 0.0
  %2674 = vmatpush2.msra.mxu0 0.0
  %2675 = vmatprep.subr.mxu0 0.0
  %2676 = vmatpush2.msra.mxu0 0.0
  %2677 = vmatprep.subr.mxu0 0.0
  %2678 = vmatpush2.msra.mxu0 0.0
  %2679 = vmatprep.subr.mxu0 0.0
  %2680 = vmatpush2.msra.mxu0 0.0
  %2681 = vmatprep.subr.mxu0 0.0
  %2682 = vmatpush2.msra.mxu0 0.0
  %2683 = vmatprep.subr.mxu0 0.0
  %2684 = vmatpush2.msra.mxu0 0.0
  %2685 = vmatprep.subr.mxu0 0.0
  %2686 = vmatpush2.msra.mxu0 0.0
  %2687 = vmatprep.subr.mxu0 0.0
  %2688 = vmatpush2.msra.mxu0 0.0
  %2689 = vmatprep.subr.mxu0 0.0
  %2690 = vmatpush2.msra.mxu0 0.0
  %2691 = vmatprep.subr.mxu0 0.0
  %2692 = vmatpush2.msra.mxu0 0.0
  %2693 = vmatprep.subr.mxu0 0.0
  %2694 = vmatpush2.msra.mxu0 0.0
  %2695 = vmatprep.subr.mxu0 0.0
  %2696 = vmatpush2.msra.mxu0 0.0
  %2697 = vmatprep.subr.mxu0 0.0
  %2698 = vmatpush2.msra.mxu0 0.0
  %2699 = vmatprep.mubr.f32.mxu0 0.0
  %2700 = vmatmul.mubr.f32.gmra.mxu0 %v2463
  %v2701 = vpop.f32.mrf.mxu0
  %v2702 = vadd.f32 %v2562, %v2701
  %v2703 = vpop.f32.mrf.mxu0
  %v2704 = vadd.f32 %v2562, %v2703
  %2705 = vdwg.mxu0
  %2706 = vmatprep.subr.mxu0 %v2559
  %2707 = vmatpush1.msra.mxu0 %v2558
  %2708 = vmatprep.subr.mxu0 %v2553
  %2709 = vmatpush1.msra.mxu0 %v2552
  %2710 = vmatprep.subr.mxu0 %v2547
  %2711 = vmatpush1.msra.mxu0 %v2546
  %2712 = vmatprep.subr.mxu0 %v2541
  %2713 = vmatpush1.msra.mxu0 %v2540
  %2714 = vmatprep.subr.mxu0 %v2535
  %2715 = vmatpush1.msra.mxu0 %v2534
  %2716 = vmatprep.subr.mxu0 %v2529
  %2717 = vmatpush1.msra.mxu0 %v2528
  %2718 = vmatprep.subr.mxu0 %v2523
  %2719 = vmatpush1.msra.mxu0 %v2522
  %2720 = vmatprep.subr.mxu0 %v2517
  %2721 = vmatpush1.msra.mxu0 %v2516
  %2722 = vmatprep.subr.mxu0 %v2511
  %2723 = vmatpush1.msra.mxu0 %v2510
  %2724 = vmatprep.subr.mxu0 %v2505
  %2725 = vmatpush1.msra.mxu0 %v2504
  %2726 = vmatprep.subr.mxu0 %v2499
  %2727 = vmatpush1.msra.mxu0 %v2498
  %2728 = vmatprep.subr.mxu0 %v2493
  %2729 = vmatpush1.msra.mxu0 %v2492
  %2730 = vmatprep.subr.mxu0 %v2487
  %2731 = vmatpush1.msra.mxu0 %v2486
  %2732 = vmatprep.subr.mxu0 %v2481
  %2733 = vmatpush1.msra.mxu0 %v2480
  %2734 = vmatprep.subr.mxu0 %v2475
  %2735 = vmatpush1.msra.mxu0 %v2474
  %2736 = vmatprep.subr.mxu0 %v2469
  %2737 = vmatpush1.msra.mxu0 %v2468
  %2738 = vmatprep.subr.mxu0 0.0
  %2739 = vmatpush2.msra.mxu0 0.0
  %2740 = vmatprep.subr.mxu0 0.0
  %2741 = vmatpush2.msra.mxu0 0.0
  %2742 = vmatprep.subr.mxu0 0.0
  %2743 = vmatpush2.msra.mxu0 0.0
  %2744 = vmatprep.subr.mxu0 0.0
  %2745 = vmatpush2.msra.mxu0 0.0
  %2746 = vmatprep.subr.mxu0 0.0
  %2747 = vmatpush2.msra.mxu0 0.0
  %2748 = vmatprep.subr.mxu0 0.0
  %2749 = vmatpush2.msra.mxu0 0.0
  %2750 = vmatprep.subr.mxu0 0.0
  %2751 = vmatpush2.msra.mxu0 0.0
  %2752 = vmatprep.subr.mxu0 0.0
  %2753 = vmatpush2.msra.mxu0 0.0
  %2754 = vmatprep.subr.mxu0 0.0
  %2755 = vmatpush2.msra.mxu0 0.0
  %2756 = vmatprep.subr.mxu0 0.0
  %2757 = vmatpush2.msra.mxu0 0.0
  %2758 = vmatprep.subr.mxu0 0.0
  %2759 = vmatpush2.msra.mxu0 0.0
  %2760 = vmatprep.subr.mxu0 0.0
  %2761 = vmatpush2.msra.mxu0 0.0
  %2762 = vmatprep.subr.mxu0 0.0
  %2763 = vmatpush2.msra.mxu0 0.0
  %2764 = vmatprep.subr.mxu0 0.0
  %2765 = vmatpush2.msra.mxu0 0.0
  %2766 = vmatprep.subr.mxu0 0.0
  %2767 = vmatpush2.msra.mxu0 0.0
  %2768 = vmatprep.subr.mxu0 0.0
  %2769 = vmatpush2.msra.mxu0 0.0
  %2770 = vmatprep.mubr.f32.mxu0 0.0
  %2771 = vmatmul.mubr.f32.gmra.mxu0 %v2463
  %v2772 = vpop.f32.mrf.mxu0
  %v2773 = vadd.f32 %v2562, %v2772
  %v2774 = vpop.f32.mrf.mxu0
  %v2775 = vadd.f32 %v2562, %v2774
  %2776 = vdwg.mxu0
  %2777 = vst [vmem:[%s8] sm:$0xff] %v2631
  %2778 = vst [vmem:[%s8 + $0x8] sm:$0xff] %v2633
  %2779 = vst [vmem:[%s8 + $0x10] sm:$0xff] %v2702
  %2780 = vst [vmem:[%s8 + $0x18] sm:$0xff] %v2704
  %2781 = vst [vmem:[%s8 + $0x20] sm:$0xff] %v2773
  %2782 = vst.msk [vmem:[%s8 + $0x28] sm:$0xff] %vm735, %v2775
  // Predicated region
  $region34: #{block_forward.1} parent=0 // pred_check
    _
  $region35: #{block_forward.1} parent=0 // pred_check_branch
    %2784 = sbr.rel (0) target = $region37
  $region36: #{block_forward.1} parent=0 // pred_region
    _
  $region37: #{block_forward.1} parent=0 // pred_fallthru
    _
  // Predicated region
  $region38: #{block_forward.1} parent=0 // pred_check
    _
  $region39: #{block_forward.1} parent=0 // pred_check_branch
    %2786 = sbr.rel (0) target = $region41
  $region40: #{block_forward.1} parent=0 // pred_region
    _
  $region41: #{block_forward.1} parent=0 // pred_fallthru
    _

</llo_original>
